<compile_context>
chip_gen: v6e
topology: v6e:2x2x1
jax: 0.10.0
libtpu: 0.0.40
codegen_flags: <defaults>
</compile_context>

<pallas_src>
import functools

import jax
import jax.numpy as jnp
from jax.experimental import pallas as pl
from jax.experimental.pallas import tpu as pltpu


def _round_up(x, m):
    return (x + m - 1) // m * m


def _pick_row_tile(ho, cap=32):
    """Largest divisor of the output height that is <= cap (rows per tile)."""
    for t in range(min(cap, ho), 0, -1):
        if ho % t == 0:
            return t
    return 1


# ---------------------------------------------------------------------------
# Fused kernel: expand (1x1) -> depthwise 3x3 -> project (1x1) [+ residual]
# ---------------------------------------------------------------------------

def _fused_ir_kernel(xp_hbm, *refs, stride, TH, H, W, Wo, has_expand, use_res):
    if has_expand:
        (w_exp_ref, b_exp_ref, w_dw_ref, b_dw_ref,
         w_proj_ref, b_proj_ref, o_ref, xin_buf, hid_buf) = refs
    else:
        (w_dw_ref, b_dw_ref, w_proj_ref, b_proj_ref,
         o_ref, xin_buf, hid_buf) = refs

    n = pl.program_id(0)
    h = pl.program_id(1)
    n_in, WP2, _ = xin_buf.shape
    Hd = hid_buf.shape[-1]
    Cout = o_ref.shape[-1]

    # --- fetch this tile's input row window (incl. 1-row halo) from HBM -----
    row_start = h * (TH * stride)
    pltpu.sync_copy(xp_hbm.at[n, pl.ds(row_start, n_in)], xin_buf)
    x_win = xin_buf[...]                                  # (n_in, WP2, Cin) f32

    # Validity mask: zero out conv-padding rows/cols and lane-alignment cols
    # (the depthwise conv must see zeros there, not relu6(bias)).
    ri = jax.lax.broadcasted_iota(jnp.int32, (n_in, WP2, 1), 0) + row_start
    ci = jax.lax.broadcasted_iota(jnp.int32, (n_in, WP2, 1), 1)
    valid = (ri >= 1) & (ri <= H) & (ci >= 1) & (ci <= W)

    # --- expand 1x1 conv (+ folded BN + ReLU6), bf16 matmul, f32 accum ------
    if has_expand:
        x2d = x_win.reshape(n_in * WP2, x_win.shape[-1]).astype(jnp.bfloat16)
        hid = jnp.dot(x2d, w_exp_ref[...], preferred_element_type=jnp.float32)
        hid = hid.reshape(n_in, WP2, Hd) + b_exp_ref[...]
        hid = jnp.clip(hid, 0.0, 6.0)
    else:
        hid = x_win
    hid_buf[...] = jnp.where(valid, hid, 0.0)             # hidden stays in VMEM

    # --- depthwise 3x3 conv (+ folded BN + ReLU6) ---------------------------
    acc = jnp.zeros((TH, Wo, Hd), jnp.float32)
    for kh in range(3):
        for kw in range(3):
            if stride == 1:
                win = hid_buf[kh:kh + TH, kw:kw + Wo, :]
            else:
                # stride-2: strided reads -> output computed directly
                win = hid_buf[pl.ds(kh, TH, stride=stride),
                              pl.ds(kw, Wo, stride=stride), :]
            tap = w_dw_ref[3 * kh + kw:3 * kh + kw + 1, :]  # (1, Hd)
            acc = acc + win * tap
    act = jnp.clip(acc + b_dw_ref[...], 0.0, 6.0)

    # --- project 1x1 conv (+ folded BN) [+ residual], bf16 matmul -----------
    p = jnp.dot(act.reshape(TH * Wo, Hd).astype(jnp.bfloat16), w_proj_ref[...],
                preferred_element_type=jnp.float32)
    out = p.reshape(TH, Wo, Cout) + b_proj_ref[...]
    if use_res:
        out = out + xin_buf[1:TH + 1, 1:W + 1, :]          # f32 residual
    o_ref[0] = out.astype(o_ref.dtype)


# ---------------------------------------------------------------------------
# Wrapper
# ---------------------------------------------------------------------------

def inverted_residual_forward(x_nchw, prep, *, inp, oup, stride, expand_ratio):
    N, C, H, W = x_nchw.shape
    assert C == inp and stride in (1, 2)
    hidden = int(round(inp * expand_ratio))
    has_expand = expand_ratio != 1
    use_res = (stride == 1 and inp == oup)

    cin_p = _round_up(inp, 128)
    hd_p = _round_up(hidden, 128)
    cout_p = _round_up(oup, 128)

    Ho = (H - 1) // stride + 1
    Wo = (W - 1) // stride + 1
    WP2 = _round_up(W + 2, 8)                  # sublane-aligned padded width
    TH = _pick_row_tile(Ho)                    # output rows per tile
    n_in = stride * (TH - 1) + 3               # input rows per tile (with halo)

    # NCHW -> NHWC; halo pad (1 each side), width alignment pad, channel pad.
    x = jnp.transpose(x_nchw, (0, 2, 3, 1))
    xp = jnp.pad(x, ((0, 0), (1, 1), (1, WP2 - (W + 1)), (0, cin_p - inp)))

    in_specs = [pl.BlockSpec(memory_space=pl.ANY)]         # stays in HBM
    args = [xp]
    if has_expand:
        in_specs += [pl.BlockSpec((cin_p, hd_p), lambda n, h: (0, 0)),
                     pl.BlockSpec((1, hd_p), lambda n, h: (0, 0))]
        args += [prep["w_exp"], prep["b_exp"]]
    in_specs += [pl.BlockSpec((9, hd_p), lambda n, h: (0, 0)),
                 pl.BlockSpec((1, hd_p), lambda n, h: (0, 0)),
                 pl.BlockSpec((hd_p, cout_p), lambda n, h: (0, 0)),
                 pl.BlockSpec((1, cout_p), lambda n, h: (0, 0))]
    args += [prep["w_dw"], prep["b_dw"], prep["w_proj"], prep["b_proj"]]

    kernel = functools.partial(_fused_ir_kernel, stride=stride, TH=TH, H=H,
                               W=W, Wo=Wo, has_expand=has_expand,
                               use_res=use_res)

    out = pl.pallas_call(
        kernel,
        out_shape=jax.ShapeDtypeStruct((N, Ho, Wo, cout_p), jnp.float32),
        grid_spec=pltpu.PrefetchScalarGridSpec(
            num_scalar_prefetch=0,
            grid=(N, Ho // TH),
            in_specs=in_specs,
            out_specs=pl.BlockSpec((1, TH, Wo, cout_p),
                                   lambda n, h: (n, h, 0, 0)),
            scratch_shapes=[pltpu.VMEM((n_in, WP2, cin_p), jnp.float32),
                            pltpu.VMEM((n_in, WP2, hd_p), jnp.float32)]),
        compiler_params=pltpu.CompilerParams(
            dimension_semantics=("parallel", "parallel")),
    )(*args)

    out = out[:, :, :, :oup]                   # drop lane padding
    return jnp.transpose(out, (0, 3, 1, 2))    # NHWC -> NCHW


# ---------------------------------------------------------------------------
# Deterministic parameter init (shapes follow the PyTorch module __init__)
# ---------------------------------------------------------------------------

def init_params(key, inp, oup, expand_ratio):
    hidden = int(round(inp * expand_ratio))
    k_exp, k_dw, k_proj = jax.random.split(key, 3)
    eps = 1e-5  # PyTorch BatchNorm2d default

    def bn_fold(c, salt):
        r = jnp.arange(c, dtype=jnp.float32) / max(c, 1)
        gamma = 1.0 + 0.10 * r + 0.01 * salt
        beta = 0.05 * r - 0.02
        mean = 0.01 * r
        var = 1.0 + 0.20 * r
        s = gamma * jax.lax.rsqrt(var + eps)
        b = beta - mean * s
        return s, b

    params = {}
    if expand_ratio != 1:
        params["w_exp"] = 0.1 * jax.random.normal(k_exp, (inp, hidden), jnp.float32)
        params["s_exp"], params["b_exp"] = bn_fold(hidden, 0)
    params["w_dw"] = 0.1 * jax.random.normal(k_dw, (3, 3, hidden), jnp.float32)
    params["s_dw"], params["b_dw"] = bn_fold(hidden, 1)
    params["w_proj"] = 0.1 * jax.random.normal(k_proj, (hidden, oup), jnp.float32)
    params["s_proj"], params["b_proj"] = bn_fold(oup, 2)
    return params


def prepare_params(params, *, inp, oup, expand_ratio):
    """Fold BN scale into conv weights, pad channels to 128 lanes, bf16 weights."""
    hidden = int(round(inp * expand_ratio))
    cin_p = _round_up(inp, 128)
    hd_p = _round_up(hidden, 128)
    cout_p = _round_up(oup, 128)
    prep = {}
    if expand_ratio != 1:
        w = params["w_exp"] * params["s_exp"][None, :]
        prep["w_exp"] = jnp.pad(w, ((0, cin_p - inp),
                                    (0, hd_p - hidden))).astype(jnp.bfloat16)
        prep["b_exp"] = jnp.pad(params["b_exp"], (0, hd_p - hidden)).reshape(1, hd_p)
    wdw = params["w_dw"] * params["s_dw"][None, None, :]
    prep["w_dw"] = jnp.pad(wdw, ((0, 0), (0, 0), (0, hd_p - hidden))).reshape(9, hd_p)
    prep["b_dw"] = jnp.pad(params["b_dw"], (0, hd_p - hidden)).reshape(1, hd_p)
    wp = params["w_proj"] * params["s_proj"][None, :]
    prep["w_proj"] = jnp.pad(wp, ((0, hd_p - hidden),
                                  (0, cout_p - oup))).astype(jnp.bfloat16)
    prep["b_proj"] = jnp.pad(params["b_proj"], (0, cout_p - oup)).reshape(1, cout_p)
    return prep


# ---------------------------------------------------------------------------
# Pure-JAX reference (same folded/padded/bf16 weights -> same numerics)
# ---------------------------------------------------------------------------

def reference_forward(x_nchw, prep, *, inp, oup, stride, expand_ratio):
    N, _, H, W = x_nchw.shape
    x = jnp.transpose(x_nchw, (0, 2, 3, 1))
    cin_p = prep["w_exp"].shape[0] if expand_ratio != 1 else prep["w_dw"].shape[-1]
    xcp = jnp.pad(x, ((0, 0), (0, 0), (0, 0), (0, cin_p - inp)))
    if expand_ratio != 1:
        hid = jnp.einsum("nhwc,cd->nhwd", xcp.astype(jnp.bfloat16), prep["w_exp"],
                         preferred_element_type=jnp.float32)
        hid = jnp.clip(hid + prep["b_exp"][0], 0.0, 6.0)
    else:
        hid = xcp
    hp = jnp.pad(hid, ((0, 0), (1, 1), (1, 1), (0, 0)))
    Ho = (H - 1) // stride + 1
    Wo = (W - 1) // stride + 1
    acc = jnp.zeros((N, Ho, Wo, hp.shape[-1]), jnp.float32)
    for kh in range(3):
        for kw in range(3):
            win = hp[:, kh:kh + stride * (Ho - 1) + 1:stride,
                     kw:kw + stride * (Wo - 1) + 1:stride, :]
            acc = acc + win * prep["w_dw"][3 * kh + kw]
    act = jnp.clip(acc + prep["b_dw"][0], 0.0, 6.0)
    out = jnp.einsum("nhwc,cd->nhwd", act.astype(jnp.bfloat16), prep["w_proj"],
                     preferred_element_type=jnp.float32) + prep["b_proj"][0]
    if stride == 1 and inp == oup:
        out = out + xcp
    return jnp.transpose(out[:, :, :, :oup], (0, 3, 1, 2))


# ---------------------------------------------------------------------------

if __name__ == "__main__":
    N, H, W = 2, 16, 16
    configs = [
        dict(inp=8, oup=8, stride=1, expand_ratio=6),    # expand + residual path
        dict(inp=8, oup=16, stride=1, expand_ratio=1),   # no-expand, no-residual
    ]
    key = jax.random.PRNGKey(0)
    for cfg in configs:
        key, kx, kp = jax.random.split(key, 3)
        x = jax.random.normal(kx, (N, cfg["inp"], H, W), jnp.float32)  # NCHW
        params = init_params(kp, cfg["inp"], cfg["oup"], cfg["expand_ratio"])
        prep = prepare_params(params, inp=cfg["inp"], oup=cfg["oup"],
                              expand_ratio=cfg["expand_ratio"])

        fwd = jax.jit(functools.partial(inverted_residual_forward, **cfg))
        out = jax.block_until_ready(fwd(x, prep))

        ref = reference_forward(x, prep, **cfg)
        Ho = (H - 1) // cfg["stride"] + 1
        Wo = (W - 1) // cfg["stride"] + 1
        assert out.shape == (N, cfg["oup"], Ho, Wo)
        # bf16 matmuls -> allow bf16-level worst-case tolerance, tiny mean error.
        assert jnp.allclose(out, ref, atol=2e-2, rtol=2e-2), "mismatch vs reference"
        assert float(jnp.mean(jnp.abs(out - ref))) < 1e-3

    print("KERNEL_OK")
</pallas_src>

<mosaic_0001>
module attributes {stable_mosaic.version = 11 : i64} {
  func.func @_fused_ir_kernel(%arg0: i32, %arg1: i32, %arg2: memref<2x18x24x128xf32, #tpu.memory_space<any>>, %arg3: memref<128x128xbf16, #tpu.memory_space<vmem>>, %arg4: memref<1x128xf32, #tpu.memory_space<vmem>>, %arg5: memref<9x128xf32, #tpu.memory_space<vmem>>, %arg6: memref<1x128xf32, #tpu.memory_space<vmem>>, %arg7: memref<128x128xbf16, #tpu.memory_space<vmem>>, %arg8: memref<1x128xf32, #tpu.memory_space<vmem>>, %arg9: memref<1x16x16x128xf32, #tpu.memory_space<vmem>>, %arg10: memref<18x24x128xf32, #tpu.memory_space<vmem>>, %arg11: memref<18x24x128xf32, #tpu.memory_space<vmem>>) attributes {dimension_semantics = [#tpu.dimension_semantics<parallel>, #tpu.dimension_semantics<parallel>], iteration_bounds = array<i64: 2, 1>, scalar_prefetch = 0 : i64, scratch_operands = 2 : i64, tpu.core_type = #tpu.core_type<tc>, window_params = [{}, {pipeline_mode = #tpu.pipeline_mode<synchronous>, transform_indices = @transform_1, window_bounds = array<i64: 128, 128>}, {pipeline_mode = #tpu.pipeline_mode<synchronous>, transform_indices = @transform_2, window_bounds = array<i64: 1, 128>}, {pipeline_mode = #tpu.pipeline_mode<synchronous>, transform_indices = @transform_3, window_bounds = array<i64: 9, 128>}, {pipeline_mode = #tpu.pipeline_mode<synchronous>, transform_indices = @transform_4, window_bounds = array<i64: 1, 128>}, {pipeline_mode = #tpu.pipeline_mode<synchronous>, transform_indices = @transform_5, window_bounds = array<i64: 128, 128>}, {pipeline_mode = #tpu.pipeline_mode<synchronous>, transform_indices = @transform_6, window_bounds = array<i64: 1, 128>}, {transform_indices = @transform_7, window_bounds = array<i64: 1, 16, 16, 128>}]} {
    %c16_i32 = arith.constant 16 : i32
    %0 = arith.muli %arg1, %c16_i32 : i32
    "tpu.region"() ({
      %112 = tpu.sem_alloc : memref<!tpu.dma_semaphore, #tpu.memory_space<semaphore_mem>>
      %c0_i32 = arith.constant 0 : i32
      %c0_i32_69 = arith.constant 0 : i32
      %113 = tpu.memref_slice %arg2[%arg0, %0, %c0_i32, %c0_i32_69] : memref<2x18x24x128xf32, #tpu.memory_space<any>> -> memref<1x18x24x128xf32, #tpu.memory_space<any>>
      %114 = tpu.memref_squeeze %113 : memref<1x18x24x128xf32, #tpu.memory_space<any>> -> memref<18x24x128xf32, #tpu.memory_space<any>>
      tpu.enqueue_dma source(%114 : memref<18x24x128xf32, #tpu.memory_space<any>>) target(%arg10 : memref<18x24x128xf32, #tpu.memory_space<vmem>>) target_semaphore(%112 : memref<!tpu.dma_semaphore, #tpu.memory_space<semaphore_mem>>)
      %c0_i32_70 = arith.constant 0 : i32
      %c0_i32_71 = arith.constant 0 : i32
      %115 = tpu.memref_slice %arg2[%arg0, %0, %c0_i32_70, %c0_i32_71] : memref<2x18x24x128xf32, #tpu.memory_space<any>> -> memref<1x18x24x128xf32, #tpu.memory_space<any>>
      %116 = tpu.memref_squeeze %115 : memref<1x18x24x128xf32, #tpu.memory_space<any>> -> memref<18x24x128xf32, #tpu.memory_space<any>>
      tpu.wait_dma2 semaphore(%112 : memref<!tpu.dma_semaphore, #tpu.memory_space<semaphore_mem>>) src(%116 : memref<18x24x128xf32, #tpu.memory_space<any>>) dst(%arg10 : memref<18x24x128xf32, #tpu.memory_space<vmem>>)
      tpu.yield
    }) : () -> ()
    %c0 = arith.constant 0 : index
    %c0_0 = arith.constant 0 : index
    %c0_1 = arith.constant 0 : index
    %1 = vector.load %arg10[%c0, %c0_0, %c0_1] : memref<18x24x128xf32, #tpu.memory_space<vmem>>, vector<18x24x128xf32>
    %2 = tpu.iota {dimensions = array<i32: 0>} : vector<18x24x1xi32>
    %3 = vector.broadcast %0 : i32 to vector<18x24x1xi32>
    %4 = arith.addi %2, %3 : vector<18x24x1xi32>
    %5 = tpu.iota {dimensions = array<i32: 1>} : vector<18x24x1xi32>
    %c1_i32 = arith.constant 1 : i32
    %6 = vector.broadcast %c1_i32 : i32 to vector<18x24x1xi32>
    %7 = arith.cmpi sge, %4, %6 : vector<18x24x1xi32>
    %c16_i32_2 = arith.constant 16 : i32
    %8 = vector.broadcast %c16_i32_2 : i32 to vector<18x24x1xi32>
    %9 = arith.cmpi sle, %4, %8 : vector<18x24x1xi32>
    %10 = arith.andi %7, %9 : vector<18x24x1xi1>
    %c1_i32_3 = arith.constant 1 : i32
    %11 = vector.broadcast %c1_i32_3 : i32 to vector<18x24x1xi32>
    %12 = arith.cmpi sge, %5, %11 : vector<18x24x1xi32>
    %13 = arith.andi %10, %12 : vector<18x24x1xi1>
    %c16_i32_4 = arith.constant 16 : i32
    %14 = vector.broadcast %c16_i32_4 : i32 to vector<18x24x1xi32>
    %15 = arith.cmpi sle, %5, %14 : vector<18x24x1xi32>
    %16 = arith.andi %13, %15 : vector<18x24x1xi1>
    %17 = vector.shape_cast %1 : vector<18x24x128xf32> to vector<432x128xf32>
    %18 = arith.truncf %17 : vector<432x128xf32> to vector<432x128xbf16>
    %c0_5 = arith.constant 0 : index
    %c0_6 = arith.constant 0 : index
    %19 = vector.load %arg3[%c0_5, %c0_6] : memref<128x128xbf16, #tpu.memory_space<vmem>>, vector<128x128xbf16>
    %cst = arith.constant dense<0.000000e+00> : vector<432x128xf32>
    %20 = tpu.matmul %18, %19, %cst {dimension_numbers = #tpu.dot_dimension_numbers<[1], [0], [0], [1], [0, 0, 1, 1], [], []>} : vector<432x128xbf16>, vector<128x128xbf16>, vector<432x128xf32> -> vector<432x128xf32>
    %21 = vector.shape_cast %20 : vector<432x128xf32> to vector<18x24x128xf32>
    %c0_7 = arith.constant 0 : index
    %c0_8 = arith.constant 0 : index
    %22 = vector.load %arg4[%c0_7, %c0_8] : memref<1x128xf32, #tpu.memory_space<vmem>>, vector<1x128xf32>
    %23 = vector.shape_cast %22 : vector<1x128xf32> to vector<1x1x128xf32>
    %24 = vector.broadcast %23 : vector<1x1x128xf32> to vector<18x24x128xf32>
    %25 = arith.addf %21, %24 : vector<18x24x128xf32>
    %cst_9 = arith.constant 0.000000e+00 : f32
    %cst_10 = arith.constant 6.000000e+00 : f32
    %26 = vector.broadcast %cst_9 : f32 to vector<18x24x128xf32>
    %27 = arith.maximumf %26, %25 : vector<18x24x128xf32>
    %28 = vector.broadcast %cst_10 : f32 to vector<18x24x128xf32>
    %29 = arith.minimumf %28, %27 : vector<18x24x128xf32>
    %cst_11 = arith.constant 0.000000e+00 : f32
    %30 = vector.shape_cast %16 : vector<18x24x1xi1> to vector<18x24x1xi1>
    %31 = vector.broadcast %30 : vector<18x24x1xi1> to vector<18x24x128xi1>
    %32 = vector.broadcast %cst_11 : f32 to vector<18x24x128xf32>
    %33 = arith.select %31, %29, %32 : vector<18x24x128xi1>, vector<18x24x128xf32>
    %c0_12 = arith.constant 0 : index
    %c0_13 = arith.constant 0 : index
    %c0_14 = arith.constant 0 : index
    %34 = vector.load %arg11[%c0_12, %c0_13, %c0_14] : memref<18x24x128xf32, #tpu.memory_space<vmem>>, vector<18x24x128xf32>
    tpu.vector_store %arg11[%c0_12, %c0_13, %c0_14], %33 {strides = array<i32>} : memref<18x24x128xf32, #tpu.memory_space<vmem>>, vector<18x24x128xf32>,
    %cst_15 = arith.constant 0.000000e+00 : f32
    %35 = vector.broadcast %cst_15 : f32 to vector<16x16x128xf32>
    %c0_16 = arith.constant 0 : index
    %c0_17 = arith.constant 0 : index
    %c0_18 = arith.constant 0 : index
    %36 = vector.load %arg11[%c0_16, %c0_17, %c0_18] : memref<18x24x128xf32, #tpu.memory_space<vmem>>, vector<16x16x128xf32>
    %c0_19 = arith.constant 0 : index
    %c0_20 = arith.constant 0 : index
    %37 = vector.load %arg5[%c0_19, %c0_20] : memref<9x128xf32, #tpu.memory_space<vmem>>, vector<1x128xf32>
    %38 = vector.shape_cast %37 : vector<1x128xf32> to vector<1x1x128xf32>
    %39 = vector.broadcast %38 : vector<1x1x128xf32> to vector<16x16x128xf32>
    %40 = arith.mulf %36, %39 : vector<16x16x128xf32>
    %41 = arith.addf %35, %40 : vector<16x16x128xf32>
    %c0_21 = arith.constant 0 : index
    %c1 = arith.constant 1 : index
    %c0_22 = arith.constant 0 : index
    %42 = vector.load %arg11[%c0_21, %c1, %c0_22] : memref<18x24x128xf32, #tpu.memory_space<vmem>>, vector<16x16x128xf32>
    %c1_23 = arith.constant 1 : index
    %c0_24 = arith.constant 0 : index
    %43 = vector.load %arg5[%c1_23, %c0_24] : memref<9x128xf32, #tpu.memory_space<vmem>>, vector<1x128xf32>
    %44 = vector.shape_cast %43 : vector<1x128xf32> to vector<1x1x128xf32>
    %45 = vector.broadcast %44 : vector<1x1x128xf32> to vector<16x16x128xf32>
    %46 = arith.mulf %42, %45 : vector<16x16x128xf32>
    %47 = arith.addf %41, %46 : vector<16x16x128xf32>
    %c0_25 = arith.constant 0 : index
    %c2 = arith.constant 2 : index
    %c0_26 = arith.constant 0 : index
    %48 = vector.load %arg11[%c0_25, %c2, %c0_26] : memref<18x24x128xf32, #tpu.memory_space<vmem>>, vector<16x16x128xf32>
    %c2_27 = arith.constant 2 : index
    %c0_28 = arith.constant 0 : index
    %49 = vector.load %arg5[%c2_27, %c0_28] : memref<9x128xf32, #tpu.memory_space<vmem>>, vector<1x128xf32>
    %50 = vector.shape_cast %49 : vector<1x128xf32> to vector<1x1x128xf32>
    %51 = vector.broadcast %50 : vector<1x1x128xf32> to vector<16x16x128xf32>
    %52 = arith.mulf %48, %51 : vector<16x16x128xf32>
    %53 = arith.addf %47, %52 : vector<16x16x128xf32>
    %c1_29 = arith.constant 1 : index
    %c0_30 = arith.constant 0 : index
    %c0_31 = arith.constant 0 : index
    %54 = vector.load %arg11[%c1_29, %c0_30, %c0_31] : memref<18x24x128xf32, #tpu.memory_space<vmem>>, vector<16x16x128xf32>
    %c3 = arith.constant 3 : index
    %c0_32 = arith.constant 0 : index
    %55 = vector.load %arg5[%c3, %c0_32] : memref<9x128xf32, #tpu.memory_space<vmem>>, vector<1x128xf32>
    %56 = vector.shape_cast %55 : vector<1x128xf32> to vector<1x1x128xf32>
    %57 = vector.broadcast %56 : vector<1x1x128xf32> to vector<16x16x128xf32>
    %58 = arith.mulf %54, %57 : vector<16x16x128xf32>
    %59 = arith.addf %53, %58 : vector<16x16x128xf32>
    %c1_33 = arith.constant 1 : index
    %c1_34 = arith.constant 1 : index
    %c0_35 = arith.constant 0 : index
    %60 = vector.load %arg11[%c1_33, %c1_34, %c0_35] : memref<18x24x128xf32, #tpu.memory_space<vmem>>, vector<16x16x128xf32>
    %c4 = arith.constant 4 : index
    %c0_36 = arith.constant 0 : index
    %61 = vector.load %arg5[%c4, %c0_36] : memref<9x128xf32, #tpu.memory_space<vmem>>, vector<1x128xf32>
    %62 = vector.shape_cast %61 : vector<1x128xf32> to vector<1x1x128xf32>
    %63 = vector.broadcast %62 : vector<1x1x128xf32> to vector<16x16x128xf32>
    %64 = arith.mulf %60, %63 : vector<16x16x128xf32>
    %65 = arith.addf %59, %64 : vector<16x16x128xf32>
    %c1_37 = arith.constant 1 : index
    %c2_38 = arith.constant 2 : index
    %c0_39 = arith.constant 0 : index
    %66 = vector.load %arg11[%c1_37, %c2_38, %c0_39] : memref<18x24x128xf32, #tpu.memory_space<vmem>>, vector<16x16x128xf32>
    %c5 = arith.constant 5 : index
    %c0_40 = arith.constant 0 : index
    %67 = vector.load %arg5[%c5, %c0_40] : memref<9x128xf32, #tpu.memory_space<vmem>>, vector<1x128xf32>
    %68 = vector.shape_cast %67 : vector<1x128xf32> to vector<1x1x128xf32>
    %69 = vector.broadcast %68 : vector<1x1x128xf32> to vector<16x16x128xf32>
    %70 = arith.mulf %66, %69 : vector<16x16x128xf32>
    %71 = arith.addf %65, %70 : vector<16x16x128xf32>
    %c2_41 = arith.constant 2 : index
    %c0_42 = arith.constant 0 : index
    %c0_43 = arith.constant 0 : index
    %72 = vector.load %arg11[%c2_41, %c0_42, %c0_43] : memref<18x24x128xf32, #tpu.memory_space<vmem>>, vector<16x16x128xf32>
    %c6 = arith.constant 6 : index
    %c0_44 = arith.constant 0 : index
    %73 = vector.load %arg5[%c6, %c0_44] : memref<9x128xf32, #tpu.memory_space<vmem>>, vector<1x128xf32>
    %74 = vector.shape_cast %73 : vector<1x128xf32> to vector<1x1x128xf32>
    %75 = vector.broadcast %74 : vector<1x1x128xf32> to vector<16x16x128xf32>
    %76 = arith.mulf %72, %75 : vector<16x16x128xf32>
    %77 = arith.addf %71, %76 : vector<16x16x128xf32>
    %c2_45 = arith.constant 2 : index
    %c1_46 = arith.constant 1 : index
    %c0_47 = arith.constant 0 : index
    %78 = vector.load %arg11[%c2_45, %c1_46, %c0_47] : memref<18x24x128xf32, #tpu.memory_space<vmem>>, vector<16x16x128xf32>
    %c7 = arith.constant 7 : index
    %c0_48 = arith.constant 0 : index
    %79 = vector.load %arg5[%c7, %c0_48] : memref<9x128xf32, #tpu.memory_space<vmem>>, vector<1x128xf32>
    %80 = vector.shape_cast %79 : vector<1x128xf32> to vector<1x1x128xf32>
    %81 = vector.broadcast %80 : vector<1x1x128xf32> to vector<16x16x128xf32>
    %82 = arith.mulf %78, %81 : vector<16x16x128xf32>
    %83 = arith.addf %77, %82 : vector<16x16x128xf32>
    %c2_49 = arith.constant 2 : index
    %c2_50 = arith.constant 2 : index
    %c0_51 = arith.constant 0 : index
    %84 = vector.load %arg11[%c2_49, %c2_50, %c0_51] : memref<18x24x128xf32, #tpu.memory_space<vmem>>, vector<16x16x128xf32>
    %c8 = arith.constant 8 : index
    %c0_52 = arith.constant 0 : index
    %85 = vector.load %arg5[%c8, %c0_52] : memref<9x128xf32, #tpu.memory_space<vmem>>, vector<1x128xf32>
    %86 = vector.shape_cast %85 : vector<1x128xf32> to vector<1x1x128xf32>
    %87 = vector.broadcast %86 : vector<1x1x128xf32> to vector<16x16x128xf32>
    %88 = arith.mulf %84, %87 : vector<16x16x128xf32>
    %89 = arith.addf %83, %88 : vector<16x16x128xf32>
    %c0_53 = arith.constant 0 : index
    %c0_54 = arith.constant 0 : index
    %90 = vector.load %arg6[%c0_53, %c0_54] : memref<1x128xf32, #tpu.memory_space<vmem>>, vector<1x128xf32>
    %91 = vector.shape_cast %90 : vector<1x128xf32> to vector<1x1x128xf32>
    %92 = vector.broadcast %91 : vector<1x1x128xf32> to vector<16x16x128xf32>
    %93 = arith.addf %89, %92 : vector<16x16x128xf32>
    %cst_55 = arith.constant 0.000000e+00 : f32
    %cst_56 = arith.constant 6.000000e+00 : f32
    %94 = vector.broadcast %cst_55 : f32 to vector<16x16x128xf32>
    %95 = arith.maximumf %94, %93 : vector<16x16x128xf32>
    %96 = vector.broadcast %cst_56 : f32 to vector<16x16x128xf32>
    %97 = arith.minimumf %96, %95 : vector<16x16x128xf32>
    %98 = vector.shape_cast %97 : vector<16x16x128xf32> to vector<256x128xf32>
    %99 = arith.truncf %98 : vector<256x128xf32> to vector<256x128xbf16>
    %c0_57 = arith.constant 0 : index
    %c0_58 = arith.constant 0 : index
    %100 = vector.load %arg7[%c0_57, %c0_58] : memref<128x128xbf16, #tpu.memory_space<vmem>>, vector<128x128xbf16>
    %cst_59 = arith.constant dense<0.000000e+00> : vector<256x128xf32>
    %101 = tpu.matmul %99, %100, %cst_59 {dimension_numbers = #tpu.dot_dimension_numbers<[1], [0], [0], [1], [0, 0, 1, 1], [], []>} : vector<256x128xbf16>, vector<128x128xbf16>, vector<256x128xf32> -> vector<256x128xf32>
    %102 = vector.shape_cast %101 : vector<256x128xf32> to vector<16x16x128xf32>
    %c0_60 = arith.constant 0 : index
    %c0_61 = arith.constant 0 : index
    %103 = vector.load %arg8[%c0_60, %c0_61] : memref<1x128xf32, #tpu.memory_space<vmem>>, vector<1x128xf32>
    %104 = vector.shape_cast %103 : vector<1x128xf32> to vector<1x1x128xf32>
    %105 = vector.broadcast %104 : vector<1x1x128xf32> to vector<16x16x128xf32>
    %106 = arith.addf %102, %105 : vector<16x16x128xf32>
    %c1_62 = arith.constant 1 : index
    %c1_63 = arith.constant 1 : index
    %c0_64 = arith.constant 0 : index
    %107 = vector.load %arg10[%c1_62, %c1_63, %c0_64] : memref<18x24x128xf32, #tpu.memory_space<vmem>>, vector<16x16x128xf32>
    %108 = arith.addf %106, %107 : vector<16x16x128xf32>
    %c0_65 = arith.constant 0 : index
    %c0_66 = arith.constant 0 : index
    %c0_67 = arith.constant 0 : index
    %c0_68 = arith.constant 0 : index
    %109 = vector.load %arg9[%c0_65, %c0_66, %c0_67, %c0_68] : memref<1x16x16x128xf32, #tpu.memory_space<vmem>>, vector<1x16x16x128xf32>
    %110 = vector.shape_cast %109 : vector<1x16x16x128xf32> to vector<16x16x128xf32>
    %111 = vector.shape_cast %108 : vector<16x16x128xf32> to vector<1x16x16x128xf32>
    tpu.vector_store %arg9[%c0_65, %c0_66, %c0_67, %c0_68], %111 {strides = array<i32>} : memref<1x16x16x128xf32, #tpu.memory_space<vmem>>, vector<1x16x16x128xf32>,
    return
  }
  func.func @transform_1(%arg0: i32, %arg1: i32) -> (i32, i32) {
    %c0_i32 = arith.constant 0 : i32
    %c0_i32_0 = arith.constant 0 : i32
    %c0_i32_1 = arith.constant 0 : i32
    return %c0_i32, %c0_i32_0 : i32, i32
  }
  func.func @transform_2(%arg0: i32, %arg1: i32) -> (i32, i32) {
    %c0_i32 = arith.constant 0 : i32
    %c0_i32_0 = arith.constant 0 : i32
    %c0_i32_1 = arith.constant 0 : i32
    return %c0_i32, %c0_i32_0 : i32, i32
  }
  func.func @transform_3(%arg0: i32, %arg1: i32) -> (i32, i32) {
    %c0_i32 = arith.constant 0 : i32
    %c0_i32_0 = arith.constant 0 : i32
    %c0_i32_1 = arith.constant 0 : i32
    return %c0_i32, %c0_i32_0 : i32, i32
  }
  func.func @transform_4(%arg0: i32, %arg1: i32) -> (i32, i32) {
    %c0_i32 = arith.constant 0 : i32
    %c0_i32_0 = arith.constant 0 : i32
    %c0_i32_1 = arith.constant 0 : i32
    return %c0_i32, %c0_i32_0 : i32, i32
  }
  func.func @transform_5(%arg0: i32, %arg1: i32) -> (i32, i32) {
    %c0_i32 = arith.constant 0 : i32
    %c0_i32_0 = arith.constant 0 : i32
    %c0_i32_1 = arith.constant 0 : i32
    return %c0_i32, %c0_i32_0 : i32, i32
  }
  func.func @transform_6(%arg0: i32, %arg1: i32) -> (i32, i32) {
    %c0_i32 = arith.constant 0 : i32
    %c0_i32_0 = arith.constant 0 : i32
    %c0_i32_1 = arith.constant 0 : i32
    return %c0_i32, %c0_i32_0 : i32, i32
  }
  func.func @transform_7(%arg0: i32, %arg1: i32) -> (i32, i32, i32, i32) {
    %c0_i32 = arith.constant 0 : i32
    %c0_i32_0 = arith.constant 0 : i32
    %c0_i32_1 = arith.constant 0 : i32
    return %arg0, %arg1, %c0_i32, %c0_i32_0 : i32, i32, i32, i32
  }
}

</mosaic_0001>

<llo_original>
// kernel: inverted_residual_forward.1
$region0: #{inverted_residual_forward.1}
  #allocation0 [shape = 'u32[]', space=smem, size = 0x4, offset = 0x4, fixed_abs, tag = 'smem constant byte address 0x4 - core index']
  #allocation1 [shape = 'u32[144,128]{1,0:T(1,128)}', space=vmem, size = 0x12000, scoped, tag = 'internal scratch']
  #allocation2 [shape = 'f32[18,24,128]{2,1,0:T(8,128)}', space=vmem, size = 0x36000, scoped, tag = 'scratch operand']
  #allocation3 [shape = 'f32[18,24,128]{2,1,0:T(8,128)}', space=vmem, size = 0x36000, scoped, tag = 'scratch operand']
  #allocation5 [shape = 's32[]', space=sflag, size = 0x4, offset = 0, fixed_abs, tag = 'sflag constant byte address 0x0 - dummy sync flag']
  %s0 = inlined_call_operand.vmem [shape: f32[2,18,24,128], index: 0, kind: input, shape index: {}]
  %s1 = inlined_call_operand.vmem [shape: bf16[128,128], index: 1, kind: input, shape index: {}]
  %s2 = inlined_call_operand.vmem [shape: f32[1,128], index: 2, kind: input, shape index: {}]
  %s3 = inlined_call_operand.vmem [shape: f32[9,128], index: 3, kind: input, shape index: {}]
  %s4 = inlined_call_operand.vmem [shape: f32[1,128], index: 4, kind: input, shape index: {}]
  %s5 = inlined_call_operand.vmem [shape: bf16[128,128], index: 5, kind: input, shape index: {}]
  %s6 = inlined_call_operand.vmem [shape: f32[1,128], index: 6, kind: input, shape index: {}]
  %s7 = inlined_call_operand.vmem [shape: f32[2,16,16,128], index: 7, kind: output, shape index: {}]
  %s8 = sld [smem:[#allocation0]]
  $region92: #{inverted_residual_forward.1} parent=0
    _
  %s10 = ssub.s32 1, %s8
  %s11 = scalar_select 0, %s10, %s8
  loop: start=0, step=1, limit=4
  $region2: #{inverted_residual_forward.1} parent=0 // loop_pre_header
    _
  $region3: #{inverted_residual_forward.1} parent=0 // loop_header
    %s13 = sphi 0, %s17
    %p14 = scmp.ge.s32.totalorder %s13, 4
    %s20 = sphi 0, %s32
    %s21 = sphi 0, %s28
    %s22 = sphi 0, %s20
    %s23 = sphi 0, %s21
    %s24 = sphi 0, %s22
    %s25 = sphi 0, %s23
    %s33 = sphi 0, %s33
    %s35 = sphi 0, %s33
    %s36 = sphi 0, %s35
    %s50 = sphi 0, %s36
    %s54 = sphi 0, %s54
    %s56 = sphi 0, %s54
    %s57 = sphi 0, %s56
    %s71 = sphi 0, %s57
    %s75 = sphi 0, %s75
    %s77 = sphi 0, %s75
    %s78 = sphi 0, %s77
    %s92 = sphi 0, %s78
    %s96 = sphi 0, %s96
    %s98 = sphi 0, %s96
    %s99 = sphi 0, %s98
    %s113 = sphi 0, %s99
    %s117 = sphi 0, %s117
    %s119 = sphi 0, %s117
    %s120 = sphi 0, %s119
    %s134 = sphi 0, %s120
    %s138 = sphi 0, %s138
    %s140 = sphi 0, %s138
    %s141 = sphi 0, %s140
    %s155 = sphi 0, %s141
    %s163 = sphi 0, %s165
    %s166 = sphi 0, %s163
    %s167 = sphi 0, %s166
    %s183 = sphi 0, %s167
  $region4: #{inverted_residual_forward.1} parent=0 // loop_header_branch
    %16 = sbr.rel (%p14) target = $region8
  $region5: #{inverted_residual_forward.1} parent=0 // loop_body
    %s18 = ssub.s32 %s13, 1
    %s19 = ssub.s32 %s13, 2
    %s26 = sadd.s32 1, %s21
    %p27 = scmp.ge.s32.totalorder %s26, 1
    %s28 = scalar_select %p27, 0, %s26
    %s29 = sadd.s32 1, %s20
    %s30 = scalar_select %p27, %s29, %s20
    %p31 = scmp.ge.s32.totalorder %s30, 2
    %s32 = scalar_select %p31, 0, %s30
    %s34 = sadd.s32 %s33, 1
    %p37 = scmp.eq.s32.totalorder %s13, 1
    %p38 = scmp.ne.s32.totalorder %s33, %s35
    %p39 = scmp.eq.s32.totalorder %s13, 0
    %p40 = por %p38, %p39
    %p41 = scmp.ne.s32.totalorder %s33, %s35
    %p42 = scmp.eq.s32.totalorder %s18, 1
    %p43 = por %p41, %p42
    %p44 = scmp.ne.s32.totalorder %s35, %s36
    %p45 = scmp.eq.s32.totalorder %s18, 0
    %p46 = por %p44, %p45
    %p47 = scmp.ne.s32.totalorder %s35, %s36
    %p48 = scmp.eq.s32.totalorder %s19, 1
    %p49 = por %p47, %p48
    %p51 = scmp.ne.s32.totalorder %s36, %s50
    %p52 = scmp.eq.s32.totalorder %s19, 0
    %p53 = por %p51, %p52
    %s55 = sadd.s32 %s54, 1
    %p58 = scmp.eq.s32.totalorder %s13, 1
    %p59 = scmp.ne.s32.totalorder %s54, %s56
    %p60 = scmp.eq.s32.totalorder %s13, 0
    %p61 = por %p59, %p60
    %p62 = scmp.ne.s32.totalorder %s54, %s56
    %p63 = scmp.eq.s32.totalorder %s18, 1
    %p64 = por %p62, %p63
    %p65 = scmp.ne.s32.totalorder %s56, %s57
    %p66 = scmp.eq.s32.totalorder %s18, 0
    %p67 = por %p65, %p66
    %p68 = scmp.ne.s32.totalorder %s56, %s57
    %p69 = scmp.eq.s32.totalorder %s19, 1
    %p70 = por %p68, %p69
    %p72 = scmp.ne.s32.totalorder %s57, %s71
    %p73 = scmp.eq.s32.totalorder %s19, 0
    %p74 = por %p72, %p73
    %s76 = sadd.s32 %s75, 1
    %p79 = scmp.eq.s32.totalorder %s13, 1
    %p80 = scmp.ne.s32.totalorder %s75, %s77
    %p81 = scmp.eq.s32.totalorder %s13, 0
    %p82 = por %p80, %p81
    %p83 = scmp.ne.s32.totalorder %s75, %s77
    %p84 = scmp.eq.s32.totalorder %s18, 1
    %p85 = por %p83, %p84
    %p86 = scmp.ne.s32.totalorder %s77, %s78
    %p87 = scmp.eq.s32.totalorder %s18, 0
    %p88 = por %p86, %p87
    %p89 = scmp.ne.s32.totalorder %s77, %s78
    %p90 = scmp.eq.s32.totalorder %s19, 1
    %p91 = por %p89, %p90
    %p93 = scmp.ne.s32.totalorder %s78, %s92
    %p94 = scmp.eq.s32.totalorder %s19, 0
    %p95 = por %p93, %p94
    %s97 = sadd.s32 %s96, 1
    %p100 = scmp.eq.s32.totalorder %s13, 1
    %p101 = scmp.ne.s32.totalorder %s96, %s98
    %p102 = scmp.eq.s32.totalorder %s13, 0
    %p103 = por %p101, %p102
    %p104 = scmp.ne.s32.totalorder %s96, %s98
    %p105 = scmp.eq.s32.totalorder %s18, 1
    %p106 = por %p104, %p105
    %p107 = scmp.ne.s32.totalorder %s98, %s99
    %p108 = scmp.eq.s32.totalorder %s18, 0
    %p109 = por %p107, %p108
    %p110 = scmp.ne.s32.totalorder %s98, %s99
    %p111 = scmp.eq.s32.totalorder %s19, 1
    %p112 = por %p110, %p111
    %p114 = scmp.ne.s32.totalorder %s99, %s113
    %p115 = scmp.eq.s32.totalorder %s19, 0
    %p116 = por %p114, %p115
    %s118 = sadd.s32 %s117, 1
    %p121 = scmp.eq.s32.totalorder %s13, 1
    %p122 = scmp.ne.s32.totalorder %s117, %s119
    %p123 = scmp.eq.s32.totalorder %s13, 0
    %p124 = por %p122, %p123
    %p125 = scmp.ne.s32.totalorder %s117, %s119
    %p126 = scmp.eq.s32.totalorder %s18, 1
    %p127 = por %p125, %p126
    %p128 = scmp.ne.s32.totalorder %s119, %s120
    %p129 = scmp.eq.s32.totalorder %s18, 0
    %p130 = por %p128, %p129
    %p131 = scmp.ne.s32.totalorder %s119, %s120
    %p132 = scmp.eq.s32.totalorder %s19, 1
    %p133 = por %p131, %p132
    %p135 = scmp.ne.s32.totalorder %s120, %s134
    %p136 = scmp.eq.s32.totalorder %s19, 0
    %p137 = por %p135, %p136
    %s139 = sadd.s32 %s138, 1
    %p142 = scmp.eq.s32.totalorder %s13, 1
    %p143 = scmp.ne.s32.totalorder %s138, %s140
    %p144 = scmp.eq.s32.totalorder %s13, 0
    %p145 = por %p143, %p144
    %p146 = scmp.ne.s32.totalorder %s138, %s140
    %p147 = scmp.eq.s32.totalorder %s18, 1
    %p148 = por %p146, %p147
    %p149 = scmp.ne.s32.totalorder %s140, %s141
    %p150 = scmp.eq.s32.totalorder %s18, 0
    %p151 = por %p149, %p150
    %p152 = scmp.ne.s32.totalorder %s140, %s141
    %p153 = scmp.eq.s32.totalorder %s19, 1
    %p154 = por %p152, %p153
    %p156 = scmp.ne.s32.totalorder %s141, %s155
    %p157 = scmp.eq.s32.totalorder %s19, 0
    %p158 = por %p156, %p157
    %s159 = ssub.s32 %s20, %s32
    %s160 = ssub.s32 %s21, %s28
    %s161 = sor.u32 %s159, %s160
    %p162 = scmp.eq.s32.totalorder %s161, 0
    %s164 = sadd.s32 %s163, 1
    %s165 = scalar_select %p162, %s163, %s164
    %p168 = pneg %p162
    %p169 = scmp.eq.s32.totalorder %s13, 1
    %p170 = por %p168, %p169
    %p171 = scmp.ne.s32.totalorder %s163, %s166
    %p172 = scmp.eq.s32.totalorder %s13, 0
    %p173 = por %p171, %p172
    %p174 = scmp.ne.s32.totalorder %s163, %s166
    %p175 = scmp.eq.s32.totalorder %s18, 1
    %p176 = por %p174, %p175
    %p177 = scmp.ne.s32.totalorder %s166, %s167
    %p178 = scmp.eq.s32.totalorder %s18, 0
    %p179 = por %p177, %p178
    %p180 = scmp.ne.s32.totalorder %s166, %s167
    %p181 = scmp.eq.s32.totalorder %s19, 1
    %p182 = por %p180, %p181
    %p184 = scmp.ne.s32.totalorder %s167, %s183
    %p185 = scmp.eq.s32.totalorder %s19, 0
    %p186 = por %p184, %p185
    %p187 = scmp.le.s32.totalorder 1, %s13
    %p188 = scmp.lt.s32.totalorder %s13, 3
    %p189 = pnand %p187, %p188
    %p190 = pneg %p189
    // Predicated region
    $region9: #{inverted_residual_forward.1} parent=5 // pred_check
      _
    $region10: #{inverted_residual_forward.1} parent=5 // pred_check_branch
      %192 = sbr.rel (%p189) target = $region12
    $region11: #{inverted_residual_forward.1} parent=5 // pred_region
      %s193 = ssub.s32 %s13, 1
      // Predicated region
      $region13: #{inverted_residual_forward.1} parent=11 // pred_check
        %p194 = pneg %p46
      $region14: #{inverted_residual_forward.1} parent=11 // pred_check_branch
        %196 = sbr.rel (%p194) target = $region16
      $region15: #{inverted_residual_forward.1} parent=11 // pred_region
        _
      $region16: #{inverted_residual_forward.1} parent=11 // pred_fallthru
        _
      // Predicated region
      $region17: #{inverted_residual_forward.1} parent=11 // pred_check
        %p197 = pneg %p67
      $region18: #{inverted_residual_forward.1} parent=11 // pred_check_branch
        %199 = sbr.rel (%p197) target = $region20
      $region19: #{inverted_residual_forward.1} parent=11 // pred_region
        _
      $region20: #{inverted_residual_forward.1} parent=11 // pred_fallthru
        _
      // Predicated region
      $region21: #{inverted_residual_forward.1} parent=11 // pred_check
        %p200 = pneg %p88
      $region22: #{inverted_residual_forward.1} parent=11 // pred_check_branch
        %202 = sbr.rel (%p200) target = $region24
      $region23: #{inverted_residual_forward.1} parent=11 // pred_region
        _
      $region24: #{inverted_residual_forward.1} parent=11 // pred_fallthru
        _
      // Predicated region
      $region25: #{inverted_residual_forward.1} parent=11 // pred_check
        %p203 = pneg %p109
      $region26: #{inverted_residual_forward.1} parent=11 // pred_check_branch
        %205 = sbr.rel (%p203) target = $region28
      $region27: #{inverted_residual_forward.1} parent=11 // pred_region
        _
      $region28: #{inverted_residual_forward.1} parent=11 // pred_fallthru
        _
      // Predicated region
      $region29: #{inverted_residual_forward.1} parent=11 // pred_check
        %p206 = pneg %p130
      $region30: #{inverted_residual_forward.1} parent=11 // pred_check_branch
        %208 = sbr.rel (%p206) target = $region32
      $region31: #{inverted_residual_forward.1} parent=11 // pred_region
        _
      $region32: #{inverted_residual_forward.1} parent=11 // pred_fallthru
        _
      // Predicated region
      $region33: #{inverted_residual_forward.1} parent=11 // pred_check
        %p209 = pneg %p151
      $region34: #{inverted_residual_forward.1} parent=11 // pred_check_branch
        %211 = sbr.rel (%p209) target = $region36
      $region35: #{inverted_residual_forward.1} parent=11 // pred_region
        _
      $region36: #{inverted_residual_forward.1} parent=11 // pred_fallthru
        _
    $region12: #{inverted_residual_forward.1} parent=5 // pred_fallthru
      _
    %p212 = scmp.lt.s32.totalorder %s13, 2
    // Predicated region
    $region37: #{inverted_residual_forward.1} parent=5 // pred_check
      %p213 = pneg %p212
    $region38: #{inverted_residual_forward.1} parent=5 // pred_check_branch
      %215 = sbr.rel (%p213) target = $region40
    $region39: #{inverted_residual_forward.1} parent=5 // pred_region
      _
    $region40: #{inverted_residual_forward.1} parent=5 // pred_fallthru
      _
    %p216 = scmp.le.s32.totalorder 1, %s13
    %p217 = scmp.lt.s32.totalorder %s13, 3
    %p218 = pnand %p216, %p217
    %p219 = pneg %p218
    // Predicated region
    $region41: #{inverted_residual_forward.1} parent=5 // pred_check
      _
    $region42: #{inverted_residual_forward.1} parent=5 // pred_check_branch
      %221 = sbr.rel (%p218) target = $region44
    $region43: #{inverted_residual_forward.1} parent=5 // pred_region
      %s222 = ssub.s32 %s13, 1
      %p223 = pneg %p46
      %p224 = pneg %p43
      %p225 = pneg %p67
      %p226 = pneg %p64
      %p227 = pneg %p88
      %p228 = pneg %p85
      %p229 = pneg %p109
      %p230 = pneg %p106
      %p231 = pneg %p130
      %p232 = pneg %p127
      %p233 = pneg %p151
      %p234 = pneg %p148
      %p235 = pneg %p179
      %p236 = pneg %p176
      %s237 = smul.u32 16, %s23
      %p238 = scmp.lt.s32.totalorder %s22, 1
      %s239 = scalar_select %p238, %s22, 1
      %p240 = scmp.lt.s32.totalorder %s237, 15
      %s241 = scalar_select %p240, %s237, 15
      %s242 = smul.addr %s241, 2
      %s243 = smul.addr %s239, 32
      %s244 = sadd.s32 %s242, %s243
      %s245 = smul.addr %s244, 8
      %s246 = scalar_lea.vmem %s7, %s245
      %s247 = smul.u32 16, %s23
      %p248 = scmp.lt.s32.totalorder %s22, 1
      %s249 = scalar_select %p248, %s22, 1
      %p250 = scmp.lt.s32.totalorder %s247, 15
      %s251 = scalar_select %p250, %s247, 15
      %s252 = smul.addr %s251, 2
      %s253 = smul.addr %s249, 32
      %s254 = sadd.s32 %s252, %s253
      %s255 = smul.addr %s254, 8
      %s256 = scalar_lea.vmem %s7, %s255
      %s257 = smul.u32 16, %s23
      %s259 = smul.u32 %s23, 16
      $region45: #{inverted_residual_forward.1} parent=43
        #allocation4 [shape = 's32[1]{0}', space=sflag, size = 0x4, scoped, tag = 'scoped memory for inverted_residual_forward.1']
        %s260 = smul.u32 %s259, 24
        %s261 = smul.u32 %s22, 432
        %s262 = sadd.s32 %s260, %s261
        %s263 = scalar_lea.vmem %s0, %s262
        %p265 = scmp.lt.u32.totalorder 432, 8
        %p266 = pneg %p265
        // Predicated region
        $region46: #{inverted_residual_forward.1} parent=45 // pred_check
          _
        $region47: #{inverted_residual_forward.1} parent=45 // pred_check_branch
          %268 = sbr.rel (%p265) target = $region49
        $region48: #{inverted_residual_forward.1} parent=45 // pred_region
          %s284 = sand.u32 432, 7
          %p285 = scmp.eq.s32.totalorder %s284, 0
          // Predicated region
          $region61: #{inverted_residual_forward.1} parent=48 // pred_check
            %p286 = pneg %p285
          $region62: #{inverted_residual_forward.1} parent=48 // pred_check_branch
            %288 = sbr.rel (%p286) target = $region64
          $region63: #{inverted_residual_forward.1} parent=48 // pred_region
            loop: start=0, step=1, limit=1
            $region65: #{inverted_residual_forward.1} parent=63 // loop_pre_header
              _
            $region66: #{inverted_residual_forward.1} parent=63 // loop_header
              %s290 = sphi 0, %s294
              %p291 = scmp.ge.s32.totalorder %s290, 1
              %s295 = sphi %s263, %s263
              %s296 = sphi [#allocation2], [#allocation2]
            $region67: #{inverted_residual_forward.1} parent=63 // loop_header_branch
              %293 = sbr.rel (%p291) target = $region71
            $region68: #{inverted_residual_forward.1} parent=63 // loop_body
              %v297 = vld [vmem:[%s295] sm:$0xff]
              %298 = vst [vmem:[%s296] sm:$0xff] %v297
              %v299 = vld [vmem:[%s295 + $0x8] sm:$0xff]
              %300 = vst [vmem:[%s296 + $0x8] sm:$0xff] %v299
              %v301 = vld [vmem:[%s295 + $0x10] sm:$0xff]
              %302 = vst [vmem:[%s296 + $0x10] sm:$0xff] %v301
              %v303 = vld [vmem:[%s295 + $0x18] sm:$0xff]
              %304 = vst [vmem:[%s296 + $0x18] sm:$0xff] %v303
              %v305 = vld [vmem:[%s295 + $0x20] sm:$0xff]
              %306 = vst [vmem:[%s296 + $0x20] sm:$0xff] %v305
              %v307 = vld [vmem:[%s295 + $0x28] sm:$0xff]
              %308 = vst [vmem:[%s296 + $0x28] sm:$0xff] %v307
              %v309 = vld [vmem:[%s295 + $0x30] sm:$0xff]
              %310 = vst [vmem:[%s296 + $0x30] sm:$0xff] %v309
              %v311 = vld [vmem:[%s295 + $0x38] sm:$0xff]
              %312 = vst [vmem:[%s296 + $0x38] sm:$0xff] %v311
              %v313 = vld [vmem:[%s295 + $0x40] sm:$0xff]
              %314 = vst [vmem:[%s296 + $0x40] sm:$0xff] %v313
              %v315 = vld [vmem:[%s295 + $0x48] sm:$0xff]
              %316 = vst [vmem:[%s296 + $0x48] sm:$0xff] %v315
              %v317 = vld [vmem:[%s295 + $0x50] sm:$0xff]
              %318 = vst [vmem:[%s296 + $0x50] sm:$0xff] %v317
              %v319 = vld [vmem:[%s295 + $0x58] sm:$0xff]
              %320 = vst [vmem:[%s296 + $0x58] sm:$0xff] %v319
              %v321 = vld [vmem:[%s295 + $0x60] sm:$0xff]
              %322 = vst [vmem:[%s296 + $0x60] sm:$0xff] %v321
              %v323 = vld [vmem:[%s295 + $0x68] sm:$0xff]
              %324 = vst [vmem:[%s296 + $0x68] sm:$0xff] %v323
              %v325 = vld [vmem:[%s295 + $0x70] sm:$0xff]
              %326 = vst [vmem:[%s296 + $0x70] sm:$0xff] %v325
              %v327 = vld [vmem:[%s295 + $0x78] sm:$0xff]
              %328 = vst [vmem:[%s296 + $0x78] sm:$0xff] %v327
              %v329 = vld [vmem:[%s295 + $0x80] sm:$0xff]
              %330 = vst [vmem:[%s296 + $0x80] sm:$0xff] %v329
              %v331 = vld [vmem:[%s295 + $0x88] sm:$0xff]
              %332 = vst [vmem:[%s296 + $0x88] sm:$0xff] %v331
              %v333 = vld [vmem:[%s295 + $0x90] sm:$0xff]
              %334 = vst [vmem:[%s296 + $0x90] sm:$0xff] %v333
              %v335 = vld [vmem:[%s295 + $0x98] sm:$0xff]
              %336 = vst [vmem:[%s296 + $0x98] sm:$0xff] %v335
              %v337 = vld [vmem:[%s295 + $0xa0] sm:$0xff]
              %338 = vst [vmem:[%s296 + $0xa0] sm:$0xff] %v337
              %v339 = vld [vmem:[%s295 + $0xa8] sm:$0xff]
              %340 = vst [vmem:[%s296 + $0xa8] sm:$0xff] %v339
              %v341 = vld [vmem:[%s295 + $0xb0] sm:$0xff]
              %342 = vst [vmem:[%s296 + $0xb0] sm:$0xff] %v341
              %v343 = vld [vmem:[%s295 + $0xb8] sm:$0xff]
              %344 = vst [vmem:[%s296 + $0xb8] sm:$0xff] %v343
              %v345 = vld [vmem:[%s295 + $0xc0] sm:$0xff]
              %346 = vst [vmem:[%s296 + $0xc0] sm:$0xff] %v345
              %v347 = vld [vmem:[%s295 + $0xc8] sm:$0xff]
              %348 = vst [vmem:[%s296 + $0xc8] sm:$0xff] %v347
              %v349 = vld [vmem:[%s295 + $0xd0] sm:$0xff]
              %350 = vst [vmem:[%s296 + $0xd0] sm:$0xff] %v349
              %v351 = vld [vmem:[%s295 + $0xd8] sm:$0xff]
              %352 = vst [vmem:[%s296 + $0xd8] sm:$0xff] %v351
              %v353 = vld [vmem:[%s295 + $0xe0] sm:$0xff]
              %354 = vst [vmem:[%s296 + $0xe0] sm:$0xff] %v353
              %v355 = vld [vmem:[%s295 + $0xe8] sm:$0xff]
              %356 = vst [vmem:[%s296 + $0xe8] sm:$0xff] %v355
              %v357 = vld [vmem:[%s295 + $0xf0] sm:$0xff]
              %358 = vst [vmem:[%s296 + $0xf0] sm:$0xff] %v357
              %v359 = vld [vmem:[%s295 + $0xf8] sm:$0xff]
              %360 = vst [vmem:[%s296 + $0xf8] sm:$0xff] %v359
              %v361 = vld [vmem:[%s295 + $0x100] sm:$0xff]
              %362 = vst [vmem:[%s296 + $0x100] sm:$0xff] %v361
              %v363 = vld [vmem:[%s295 + $0x108] sm:$0xff]
              %364 = vst [vmem:[%s296 + $0x108] sm:$0xff] %v363
              %v365 = vld [vmem:[%s295 + $0x110] sm:$0xff]
              %366 = vst [vmem:[%s296 + $0x110] sm:$0xff] %v365
              %v367 = vld [vmem:[%s295 + $0x118] sm:$0xff]
              %368 = vst [vmem:[%s296 + $0x118] sm:$0xff] %v367
              %v369 = vld [vmem:[%s295 + $0x120] sm:$0xff]
              %370 = vst [vmem:[%s296 + $0x120] sm:$0xff] %v369
              %v371 = vld [vmem:[%s295 + $0x128] sm:$0xff]
              %372 = vst [vmem:[%s296 + $0x128] sm:$0xff] %v371
              %v373 = vld [vmem:[%s295 + $0x130] sm:$0xff]
              %374 = vst [vmem:[%s296 + $0x130] sm:$0xff] %v373
              %v375 = vld [vmem:[%s295 + $0x138] sm:$0xff]
              %376 = vst [vmem:[%s296 + $0x138] sm:$0xff] %v375
              %v377 = vld [vmem:[%s295 + $0x140] sm:$0xff]
              %378 = vst [vmem:[%s296 + $0x140] sm:$0xff] %v377
              %v379 = vld [vmem:[%s295 + $0x148] sm:$0xff]
              %380 = vst [vmem:[%s296 + $0x148] sm:$0xff] %v379
              %v381 = vld [vmem:[%s295 + $0x150] sm:$0xff]
              %382 = vst [vmem:[%s296 + $0x150] sm:$0xff] %v381
              %v383 = vld [vmem:[%s295 + $0x158] sm:$0xff]
              %384 = vst [vmem:[%s296 + $0x158] sm:$0xff] %v383
              %v385 = vld [vmem:[%s295 + $0x160] sm:$0xff]
              %386 = vst [vmem:[%s296 + $0x160] sm:$0xff] %v385
              %v387 = vld [vmem:[%s295 + $0x168] sm:$0xff]
              %388 = vst [vmem:[%s296 + $0x168] sm:$0xff] %v387
              %v389 = vld [vmem:[%s295 + $0x170] sm:$0xff]
              %390 = vst [vmem:[%s296 + $0x170] sm:$0xff] %v389
              %v391 = vld [vmem:[%s295 + $0x178] sm:$0xff]
              %392 = vst [vmem:[%s296 + $0x178] sm:$0xff] %v391
              %v393 = vld [vmem:[%s295 + $0x180] sm:$0xff]
              %394 = vst [vmem:[%s296 + $0x180] sm:$0xff] %v393
              %v395 = vld [vmem:[%s295 + $0x188] sm:$0xff]
              %396 = vst [vmem:[%s296 + $0x188] sm:$0xff] %v395
              %v397 = vld [vmem:[%s295 + $0x190] sm:$0xff]
              %398 = vst [vmem:[%s296 + $0x190] sm:$0xff] %v397
              %v399 = vld [vmem:[%s295 + $0x198] sm:$0xff]
              %400 = vst [vmem:[%s296 + $0x198] sm:$0xff] %v399
              %v401 = vld [vmem:[%s295 + $0x1a0] sm:$0xff]
              %402 = vst [vmem:[%s296 + $0x1a0] sm:$0xff] %v401
              %v403 = vld [vmem:[%s295 + $0x1a8] sm:$0xff]
              %404 = vst [vmem:[%s296 + $0x1a8] sm:$0xff] %v403
            $region69: #{inverted_residual_forward.1} parent=63 // loop_footer
              %s294 = sadd.s32 1, %s290
            $region70: #{inverted_residual_forward.1} parent=63 // loop_footer_branch
              %289 = sbr.rel target = $region66
            $region71: #{inverted_residual_forward.1} parent=63 // loop_exit
              _
          $region64: #{inverted_residual_forward.1} parent=48 // pred_fallthru
            _
          %p405 = pneg %p285
          // Predicated region
          $region72: #{inverted_residual_forward.1} parent=48 // pred_check
            _
          $region73: #{inverted_residual_forward.1} parent=48 // pred_check_branch
            %407 = sbr.rel (%p285) target = $region75
          $region74: #{inverted_residual_forward.1} parent=48 // pred_region
            %s408 = sand.u32 432, 7
          $region75: #{inverted_residual_forward.1} parent=48 // pred_fallthru
            _
        $region49: #{inverted_residual_forward.1} parent=45 // pred_fallthru
          _
        // Predicated region
        $region50: #{inverted_residual_forward.1} parent=45 // pred_check
          %p269 = pneg %p265
        $region51: #{inverted_residual_forward.1} parent=45 // pred_check_branch
          %271 = sbr.rel (%p269) target = $region53
        $region52: #{inverted_residual_forward.1} parent=45 // pred_region
          %s272 = sshll.u32 1, 432
          %s273 = ssub.s32 %s272, 1
          loop: start=0, step=1, limit=1
          $region54: #{inverted_residual_forward.1} parent=52 // loop_pre_header
            _
          $region55: #{inverted_residual_forward.1} parent=52 // loop_header
            %s275 = sphi 0, %s279
            %p276 = scmp.ge.s32.totalorder %s275, 1
            %s280 = sphi %s263, %s263
            %s281 = sphi [#allocation2], [#allocation2]
          $region56: #{inverted_residual_forward.1} parent=52 // loop_header_branch
            %278 = sbr.rel (%p276) target = $region60
          $region57: #{inverted_residual_forward.1} parent=52 // loop_body
            %v282 = vld [vmem:[%s280] sm:%s273]
            %283 = vst [vmem:[%s281] sm:%s273] %v282
          $region58: #{inverted_residual_forward.1} parent=52 // loop_footer
            %s279 = sadd.s32 1, %s275
          $region59: #{inverted_residual_forward.1} parent=52 // loop_footer_branch
            %274 = sbr.rel target = $region55
          $region60: #{inverted_residual_forward.1} parent=52 // loop_exit
            _
        $region53: #{inverted_residual_forward.1} parent=45 // pred_fallthru
          _
        // Predicated region
        $region76: #{inverted_residual_forward.1} parent=45 // pred_check
          _
        $region77: #{inverted_residual_forward.1} parent=45 // pred_check_branch
          %411 = sbr.rel (0) target = $region79
        $region78: #{inverted_residual_forward.1} parent=45 // pred_region
          %412 = vsyncadd [#allocation4], 6912
        $region79: #{inverted_residual_forward.1} parent=45 // pred_fallthru
          _
        %s413 = smul.u32 18, 24
        %s414 = smul.u32 %s413, 1
        %s415 = sshll.u32 %s414, 4
        %416 = dma.done [#allocation4], %s415
      %v417 = vld [vmem:[#allocation2] sm:$0xff]
      %v418 = vld [vmem:[#allocation2 + $0x8] sm:$0xff]
      %v419 = vld [vmem:[#allocation2 + $0x10] sm:$0xff]
      %v420 = vld [vmem:[#allocation2 + $0x18] sm:$0xff]
      %v421 = vld [vmem:[#allocation2 + $0x20] sm:$0xff]
      %v422 = vld [vmem:[#allocation2 + $0x28] sm:$0xff]
      %v423 = vld [vmem:[#allocation2 + $0x30] sm:$0xff]
      %v424 = vld [vmem:[#allocation2 + $0x38] sm:$0xff]
      %v425 = vld [vmem:[#allocation2 + $0x40] sm:$0xff]
      %v426 = vld [vmem:[#allocation2 + $0x48] sm:$0xff]
      %v427 = vld [vmem:[#allocation2 + $0x50] sm:$0xff]
      %v428 = vld [vmem:[#allocation2 + $0x58] sm:$0xff]
      %v429 = vld [vmem:[#allocation2 + $0x60] sm:$0xff]
      %v430 = vld [vmem:[#allocation2 + $0x68] sm:$0xff]
      %v431 = vld [vmem:[#allocation2 + $0x70] sm:$0xff]
      %v432 = vld [vmem:[#allocation2 + $0x78] sm:$0xff]
      %v433 = vld [vmem:[#allocation2 + $0x80] sm:$0xff]
      %v434 = vld [vmem:[#allocation2 + $0x88] sm:$0xff]
      %v435 = vld [vmem:[#allocation2 + $0x90] sm:$0xff]
      %v436 = vld [vmem:[#allocation2 + $0x98] sm:$0xff]
      %v437 = vld [vmem:[#allocation2 + $0xa0] sm:$0xff]
      %v438 = vld [vmem:[#allocation2 + $0xa8] sm:$0xff]
      %v439 = vld [vmem:[#allocation2 + $0xb0] sm:$0xff]
      %v440 = vld [vmem:[#allocation2 + $0xb8] sm:$0xff]
      %v441 = vld [vmem:[#allocation2 + $0xc0] sm:$0xff]
      %v442 = vld [vmem:[#allocation2 + $0xc8] sm:$0xff]
      %v443 = vld [vmem:[#allocation2 + $0xd0] sm:$0xff]
      %v444 = vld [vmem:[#allocation2 + $0xd8] sm:$0xff]
      %v445 = vld [vmem:[#allocation2 + $0xe0] sm:$0xff]
      %v446 = vld [vmem:[#allocation2 + $0xe8] sm:$0xff]
      %v447 = vld [vmem:[#allocation2 + $0xf0] sm:$0xff]
      %v448 = vld [vmem:[#allocation2 + $0xf8] sm:$0xff]
      %v449 = vld [vmem:[#allocation2 + $0x100] sm:$0xff]
      %v450 = vld [vmem:[#allocation2 + $0x108] sm:$0xff]
      %v451 = vld [vmem:[#allocation2 + $0x110] sm:$0xff]
      %v452 = vld [vmem:[#allocation2 + $0x118] sm:$0xff]
      %v453 = vld [vmem:[#allocation2 + $0x120] sm:$0xff]
      %v454 = vld [vmem:[#allocation2 + $0x128] sm:$0xff]
      %v455 = vld [vmem:[#allocation2 + $0x130] sm:$0xff]
      %v456 = vld [vmem:[#allocation2 + $0x138] sm:$0xff]
      %v457 = vld [vmem:[#allocation2 + $0x140] sm:$0xff]
      %v458 = vld [vmem:[#allocation2 + $0x148] sm:$0xff]
      %v459 = vld [vmem:[#allocation2 + $0x150] sm:$0xff]
      %v460 = vld [vmem:[#allocation2 + $0x158] sm:$0xff]
      %v461 = vld [vmem:[#allocation2 + $0x160] sm:$0xff]
      %v462 = vld [vmem:[#allocation2 + $0x168] sm:$0xff]
      %v463 = vld [vmem:[#allocation2 + $0x170] sm:$0xff]
      %v464 = vld [vmem:[#allocation2 + $0x178] sm:$0xff]
      %v465 = vld [vmem:[#allocation2 + $0x180] sm:$0xff]
      %v466 = vld [vmem:[#allocation2 + $0x188] sm:$0xff]
      %v467 = vld [vmem:[#allocation2 + $0x190] sm:$0xff]
      %v468 = vld [vmem:[#allocation2 + $0x198] sm:$0xff]
      %v469 = vld [vmem:[#allocation2 + $0x1a0] sm:$0xff]
      %v470 = vld [vmem:[#allocation2 + $0x1a8] sm:$0xff]
      %v471 = vstv %s259
      %v472 = vadd.s32 %v471, 1
      %v473 = vadd.s32 %v471, 2
      %v474 = vadd.s32 %v471, 3
      %v475 = vadd.s32 %v471, 4
      %v476 = vadd.s32 %v471, 5
      %v477 = vadd.s32 %v471, 6
      %v478 = vadd.s32 %v471, 7
      %v479 = vadd.s32 %v471, 8
      %v480 = vadd.s32 %v471, 9
      %v481 = vadd.s32 %v471, 10
      %v482 = vadd.s32 %v471, 11
      %v483 = vadd.s32 %v471, 12
      %v484 = vadd.s32 %v471, 13
      %v485 = vadd.s32 %v471, 14
      %v486 = vadd.s32 %v471, 15
      %v487 = vadd.s32 %v471, 16
      %v488 = vadd.s32 %v471, 17
      %v489 = vlaneseq
      %v490 = vshrl.u32 %v489, 7
      %v491 = vadd.s32 %v490, 8
      %v492 = vadd.s32 %v490, 16
      %vm493 = vcmp.ge.s32.totalorder %v471, 1
      %vm494 = vcmp.ge.s32.totalorder %v472, 1
      %vm495 = vcmp.ge.s32.totalorder %v473, 1
      %vm496 = vcmp.ge.s32.totalorder %v474, 1
      %vm497 = vcmp.ge.s32.totalorder %v475, 1
      %vm498 = vcmp.ge.s32.totalorder %v476, 1
      %vm499 = vcmp.ge.s32.totalorder %v477, 1
      %vm500 = vcmp.ge.s32.totalorder %v478, 1
      %vm501 = vcmp.ge.s32.totalorder %v479, 1
      %vm502 = vcmp.ge.s32.totalorder %v480, 1
      %vm503 = vcmp.ge.s32.totalorder %v481, 1
      %vm504 = vcmp.ge.s32.totalorder %v482, 1
      %vm505 = vcmp.ge.s32.totalorder %v483, 1
      %vm506 = vcmp.ge.s32.totalorder %v484, 1
      %vm507 = vcmp.ge.s32.totalorder %v485, 1
      %vm508 = vcmp.ge.s32.totalorder %v486, 1
      %vm509 = vcmp.ge.s32.totalorder %v487, 1
      %vm510 = vcmp.ge.s32.totalorder %v488, 1
      %vm511 = vcmp.le.s32.totalorder %v471, 16
      %vm512 = vcmp.le.s32.totalorder %v472, 16
      %vm513 = vcmp.le.s32.totalorder %v473, 16
      %vm514 = vcmp.le.s32.totalorder %v474, 16
      %vm515 = vcmp.le.s32.totalorder %v475, 16
      %vm516 = vcmp.le.s32.totalorder %v476, 16
      %vm517 = vcmp.le.s32.totalorder %v477, 16
      %vm518 = vcmp.le.s32.totalorder %v478, 16
      %vm519 = vcmp.le.s32.totalorder %v479, 16
      %vm520 = vcmp.le.s32.totalorder %v480, 16
      %vm521 = vcmp.le.s32.totalorder %v481, 16
      %vm522 = vcmp.le.s32.totalorder %v482, 16
      %vm523 = vcmp.le.s32.totalorder %v483, 16
      %vm524 = vcmp.le.s32.totalorder %v484, 16
      %vm525 = vcmp.le.s32.totalorder %v485, 16
      %vm526 = vcmp.le.s32.totalorder %v486, 16
      %vm527 = vcmp.le.s32.totalorder %v487, 16
      %vm528 = vcmp.le.s32.totalorder %v488, 16
      %vm529 = vmand %vm493, %vm511
      %vm530 = vmand %vm494, %vm512
      %vm531 = vmand %vm495, %vm513
      %vm532 = vmand %vm496, %vm514
      %vm533 = vmand %vm497, %vm515
      %vm534 = vmand %vm498, %vm516
      %vm535 = vmand %vm499, %vm517
      %vm536 = vmand %vm500, %vm518
      %vm537 = vmand %vm501, %vm519
      %vm538 = vmand %vm502, %vm520
      %vm539 = vmand %vm503, %vm521
      %vm540 = vmand %vm504, %vm522
      %vm541 = vmand %vm505, %vm523
      %vm542 = vmand %vm506, %vm524
      %vm543 = vmand %vm507, %vm525
      %vm544 = vmand %vm508, %vm526
      %vm545 = vmand %vm509, %vm527
      %vm546 = vmand %vm510, %vm528
      %vm547 = vcmp.ge.s32.totalorder %v490, 1
      %vm548 = vcmp.ge.s32.totalorder %v491, 1
      %vm549 = vcmp.ge.s32.totalorder %v492, 1
      %vm550 = vmand %vm529, %vm547
      %vm551 = vmand %vm529, %vm548
      %vm552 = vmand %vm529, %vm549
      %vm553 = vmand %vm530, %vm547
      %vm554 = vmand %vm530, %vm548
      %vm555 = vmand %vm530, %vm549
      %vm556 = vmand %vm531, %vm547
      %vm557 = vmand %vm531, %vm548
      %vm558 = vmand %vm531, %vm549
      %vm559 = vmand %vm532, %vm547
      %vm560 = vmand %vm532, %vm548
      %vm561 = vmand %vm532, %vm549
      %vm562 = vmand %vm533, %vm547
      %vm563 = vmand %vm533, %vm548
      %vm564 = vmand %vm533, %vm549
      %vm565 = vmand %vm534, %vm547
      %vm566 = vmand %vm534, %vm548
      %vm567 = vmand %vm534, %vm549
      %vm568 = vmand %vm535, %vm547
      %vm569 = vmand %vm535, %vm548
      %vm570 = vmand %vm535, %vm549
      %vm571 = vmand %vm536, %vm547
      %vm572 = vmand %vm536, %vm548
      %vm573 = vmand %vm536, %vm549
      %vm574 = vmand %vm537, %vm547
      %vm575 = vmand %vm537, %vm548
      %vm576 = vmand %vm537, %vm549
      %vm577 = vmand %vm538, %vm547
      %vm578 = vmand %vm538, %vm548
      %vm579 = vmand %vm538, %vm549
      %vm580 = vmand %vm539, %vm547
      %vm581 = vmand %vm539, %vm548
      %vm582 = vmand %vm539, %vm549
      %vm583 = vmand %vm540, %vm547
      %vm584 = vmand %vm540, %vm548
      %vm585 = vmand %vm540, %vm549
      %vm586 = vmand %vm541, %vm547
      %vm587 = vmand %vm541, %vm548
      %vm588 = vmand %vm541, %vm549
      %vm589 = vmand %vm542, %vm547
      %vm590 = vmand %vm542, %vm548
      %vm591 = vmand %vm542, %vm549
      %vm592 = vmand %vm543, %vm547
      %vm593 = vmand %vm543, %vm548
      %vm594 = vmand %vm543, %vm549
      %vm595 = vmand %vm544, %vm547
      %vm596 = vmand %vm544, %vm548
      %vm597 = vmand %vm544, %vm549
      %vm598 = vmand %vm545, %vm547
      %vm599 = vmand %vm545, %vm548
      %vm600 = vmand %vm545, %vm549
      %vm601 = vmand %vm546, %vm547
      %vm602 = vmand %vm546, %vm548
      %vm603 = vmand %vm546, %vm549
      %vm604 = vcmp.le.s32.totalorder %v490, 16
      %vm605 = vcmp.le.s32.totalorder %v491, 16
      %vm606 = vcmp.le.s32.totalorder %v492, 16
      %vm607 = vmand %vm550, %vm604
      %vm608 = vmand %vm551, %vm605
      %vm609 = vmand %vm552, %vm606
      %vm610 = vmand %vm553, %vm604
      %vm611 = vmand %vm554, %vm605
      %vm612 = vmand %vm555, %vm606
      %vm613 = vmand %vm556, %vm604
      %vm614 = vmand %vm557, %vm605
      %vm615 = vmand %vm558, %vm606
      %vm616 = vmand %vm559, %vm604
      %vm617 = vmand %vm560, %vm605
      %vm618 = vmand %vm561, %vm606
      %vm619 = vmand %vm562, %vm604
      %vm620 = vmand %vm563, %vm605
      %vm621 = vmand %vm564, %vm606
      %vm622 = vmand %vm565, %vm604
      %vm623 = vmand %vm566, %vm605
      %vm624 = vmand %vm567, %vm606
      %vm625 = vmand %vm568, %vm604
      %vm626 = vmand %vm569, %vm605
      %vm627 = vmand %vm570, %vm606
      %vm628 = vmand %vm571, %vm604
      %vm629 = vmand %vm572, %vm605
      %vm630 = vmand %vm573, %vm606
      %vm631 = vmand %vm574, %vm604
      %vm632 = vmand %vm575, %vm605
      %vm633 = vmand %vm576, %vm606
      %vm634 = vmand %vm577, %vm604
      %vm635 = vmand %vm578, %vm605
      %vm636 = vmand %vm579, %vm606
      %vm637 = vmand %vm580, %vm604
      %vm638 = vmand %vm581, %vm605
      %vm639 = vmand %vm582, %vm606
      %vm640 = vmand %vm583, %vm604
      %vm641 = vmand %vm584, %vm605
      %vm642 = vmand %vm585, %vm606
      %vm643 = vmand %vm586, %vm604
      %vm644 = vmand %vm587, %vm605
      %vm645 = vmand %vm588, %vm606
      %vm646 = vmand %vm589, %vm604
      %vm647 = vmand %vm590, %vm605
      %vm648 = vmand %vm591, %vm606
      %vm649 = vmand %vm592, %vm604
      %vm650 = vmand %vm593, %vm605
      %vm651 = vmand %vm594, %vm606
      %vm652 = vmand %vm595, %vm604
      %vm653 = vmand %vm596, %vm605
      %vm654 = vmand %vm597, %vm606
      %vm655 = vmand %vm598, %vm604
      %vm656 = vmand %vm599, %vm605
      %vm657 = vmand %vm600, %vm606
      %vm658 = vmand %vm601, %vm604
      %vm659 = vmand %vm602, %vm605
      %vm660 = vmand %vm603, %vm606
      %v661 = vpack.c.bf16 %v418, %v417
      %v662 = vpack.c.bf16 %v420, %v419
      %v663 = vpack.c.bf16 %v422, %v421
      %v664 = vpack.c.bf16 %v424, %v423
      %v665 = vpack.c.bf16 %v426, %v425
      %v666 = vpack.c.bf16 %v428, %v427
      %v667 = vpack.c.bf16 %v430, %v429
      %v668 = vpack.c.bf16 %v432, %v431
      %v669 = vpack.c.bf16 %v434, %v433
      %v670 = vpack.c.bf16 %v436, %v435
      %v671 = vpack.c.bf16 %v438, %v437
      %v672 = vpack.c.bf16 %v440, %v439
      %v673 = vpack.c.bf16 %v442, %v441
      %v674 = vpack.c.bf16 %v444, %v443
      %v675 = vpack.c.bf16 %v446, %v445
      %v676 = vpack.c.bf16 %v448, %v447
      %v677 = vpack.c.bf16 %v450, %v449
      %v678 = vpack.c.bf16 %v452, %v451
      %v679 = vpack.c.bf16 %v454, %v453
      %v680 = vpack.c.bf16 %v456, %v455
      %v681 = vpack.c.bf16 %v458, %v457
      %v682 = vpack.c.bf16 %v460, %v459
      %v683 = vpack.c.bf16 %v462, %v461
      %v684 = vpack.c.bf16 %v464, %v463
      %v685 = vpack.c.bf16 %v466, %v465
      %v686 = vpack.c.bf16 %v468, %v467
      %v687 = vpack.c.bf16 %v470, %v469
      %v688 = vld [vmem:[%s1] sm:$0xf]
      %v689 = vld [vmem:[%s1 + $0x4] sm:$0xf]
      %v690 = vld [vmem:[%s1 + $0x8] sm:$0xf]
      %v691 = vld [vmem:[%s1 + $0xc] sm:$0xf]
      %v692 = vld [vmem:[%s1 + $0x10] sm:$0xf]
      %v693 = vld [vmem:[%s1 + $0x14] sm:$0xf]
      %v694 = vld [vmem:[%s1 + $0x18] sm:$0xf]
      %v695 = vld [vmem:[%s1 + $0x1c] sm:$0xf]
      %v696 = vld [vmem:[%s1 + $0x20] sm:$0xf]
      %v697 = vld [vmem:[%s1 + $0x24] sm:$0xf]
      %v698 = vld [vmem:[%s1 + $0x28] sm:$0xf]
      %v699 = vld [vmem:[%s1 + $0x2c] sm:$0xf]
      %v700 = vld [vmem:[%s1 + $0x30] sm:$0xf]
      %v701 = vld [vmem:[%s1 + $0x34] sm:$0xf]
      %v702 = vld [vmem:[%s1 + $0x38] sm:$0xf]
      %v703 = vld [vmem:[%s1 + $0x3c] sm:$0xf]
      %v720 = vunpack.c.l.b16 %v688
      %v721 = vunpack.c.l.b16 %v689
      %v722 = vunpack.c.l.b16 %v690
      %v723 = vunpack.c.l.b16 %v691
      %v724 = vunpack.c.l.b16 %v692
      %v725 = vunpack.c.l.b16 %v693
      %v726 = vunpack.c.l.b16 %v694
      %v727 = vunpack.c.l.b16 %v695
      %v728 = vunpack.c.l.b16 %v696
      %v729 = vunpack.c.l.b16 %v697
      %v730 = vunpack.c.l.b16 %v698
      %v731 = vunpack.c.l.b16 %v699
      %v732 = vunpack.c.l.b16 %v700
      %v733 = vunpack.c.l.b16 %v701
      %v734 = vunpack.c.l.b16 %v702
      %v735 = vunpack.c.l.b16 %v703
      %v736 = vpack.c.b16 %v721, %v720
      %v737 = vpack.c.b16 %v723, %v722
      %v738 = vpack.c.b16 %v725, %v724
      %v739 = vpack.c.b16 %v727, %v726
      %v740 = vpack.c.b16 %v729, %v728
      %v741 = vpack.c.b16 %v731, %v730
      %v742 = vpack.c.b16 %v733, %v732
      %v743 = vpack.c.b16 %v735, %v734
      %752 = vmatprep.subr.bf16.mxu0 0
      %753 = vmatpush1.bf16.msra.mxu0 %v743
      %754 = vmatprep.subr.bf16.mxu0 0
      %755 = vmatpush1.bf16.msra.mxu0 %v742
      %756 = vmatprep.subr.bf16.mxu0 0
      %757 = vmatpush1.bf16.msra.mxu0 %v741
      %758 = vmatprep.subr.bf16.mxu0 0
      %759 = vmatpush1.bf16.msra.mxu0 %v740
      %760 = vmatprep.subr.bf16.mxu0 0
      %761 = vmatpush1.bf16.msra.mxu0 %v739
      %762 = vmatprep.subr.bf16.mxu0 0
      %763 = vmatpush1.bf16.msra.mxu0 %v738
      %764 = vmatprep.subr.bf16.mxu0 0
      %765 = vmatpush1.bf16.msra.mxu0 %v737
      %766 = vmatprep.subr.bf16.mxu0 0
      %767 = vmatpush1.bf16.msra.mxu0 %v736
      %768 = vmatprep.subr.bf16.mxu0 0
      %769 = vmatpush2.bf16.msra.mxu0 0
      %770 = vmatprep.subr.bf16.mxu0 0
      %771 = vmatpush2.bf16.msra.mxu0 0
      %772 = vmatprep.subr.bf16.mxu0 0
      %773 = vmatpush2.bf16.msra.mxu0 0
      %774 = vmatprep.subr.bf16.mxu0 0
      %775 = vmatpush2.bf16.msra.mxu0 0
      %776 = vmatprep.subr.bf16.mxu0 0
      %777 = vmatpush2.bf16.msra.mxu0 0
      %778 = vmatprep.subr.bf16.mxu0 0
      %779 = vmatpush2.bf16.msra.mxu0 0
      %780 = vmatprep.subr.bf16.mxu0 0
      %781 = vmatpush2.bf16.msra.mxu0 0
      %782 = vmatprep.subr.bf16.mxu0 0
      %783 = vmatpush2.bf16.msra.mxu0 0
      %784 = vmatprep.mubr.bf16.mxu0 0
      %785 = vmatmul.mubr.bf16.gmra.mxu0 %v661
      %v786 = vpop.f32.mrf.mxu0
      %v787 = vadd.f32 0.0, %v786
      %v788 = vpop.f32.mrf.mxu0
      %v789 = vpop.f32.mrf.mxu0
      %v790 = vadd.f32 0.0, %v789
      %v791 = vpop.f32.mrf.mxu0
      %792 = vmatprep.mubr.bf16.mxu0 0
      %793 = vmatmul.mubr.bf16.gmra.mxu0 %v662
      %v794 = vpop.f32.mrf.mxu0
      %v795 = vadd.f32 0.0, %v794
      %v796 = vpop.f32.mrf.mxu0
      %v797 = vpop.f32.mrf.mxu0
      %v798 = vadd.f32 0.0, %v797
      %v799 = vpop.f32.mrf.mxu0
      %800 = vmatprep.mubr.bf16.mxu0 0
      %801 = vmatmul.mubr.bf16.gmra.mxu0 %v663
      %v802 = vpop.f32.mrf.mxu0
      %v803 = vadd.f32 0.0, %v802
      %v804 = vpop.f32.mrf.mxu0
      %v805 = vpop.f32.mrf.mxu0
      %v806 = vadd.f32 0.0, %v805
      %v807 = vpop.f32.mrf.mxu0
      %808 = vmatprep.mubr.bf16.mxu0 0
      %809 = vmatmul.mubr.bf16.gmra.mxu0 %v664
      %v810 = vpop.f32.mrf.mxu0
      %v811 = vadd.f32 0.0, %v810
      %v812 = vpop.f32.mrf.mxu0
      %v813 = vpop.f32.mrf.mxu0
      %v814 = vadd.f32 0.0, %v813
      %v815 = vpop.f32.mrf.mxu0
      %816 = vmatprep.mubr.bf16.mxu0 0
      %817 = vmatmul.mubr.bf16.gmra.mxu0 %v665
      %v818 = vpop.f32.mrf.mxu0
      %v819 = vadd.f32 0.0, %v818
      %v820 = vpop.f32.mrf.mxu0
      %v821 = vpop.f32.mrf.mxu0
      %v822 = vadd.f32 0.0, %v821
      %v823 = vpop.f32.mrf.mxu0
      %824 = vmatprep.mubr.bf16.mxu0 0
      %825 = vmatmul.mubr.bf16.gmra.mxu0 %v666
      %v826 = vpop.f32.mrf.mxu0
      %v827 = vadd.f32 0.0, %v826
      %v828 = vpop.f32.mrf.mxu0
      %v829 = vpop.f32.mrf.mxu0
      %v830 = vadd.f32 0.0, %v829
      %v831 = vpop.f32.mrf.mxu0
      %832 = vmatprep.mubr.bf16.mxu0 0
      %833 = vmatmul.mubr.bf16.gmra.mxu0 %v667
      %v834 = vpop.f32.mrf.mxu0
      %v835 = vadd.f32 0.0, %v834
      %v836 = vpop.f32.mrf.mxu0
      %v837 = vpop.f32.mrf.mxu0
      %v838 = vadd.f32 0.0, %v837
      %v839 = vpop.f32.mrf.mxu0
      %840 = vmatprep.mubr.bf16.mxu0 0
      %841 = vmatmul.mubr.bf16.gmra.mxu0 %v668
      %v842 = vpop.f32.mrf.mxu0
      %v843 = vadd.f32 0.0, %v842
      %v844 = vpop.f32.mrf.mxu0
      %v845 = vpop.f32.mrf.mxu0
      %v846 = vadd.f32 0.0, %v845
      %v847 = vpop.f32.mrf.mxu0
      %848 = vmatprep.mubr.bf16.mxu0 0
      %849 = vmatmul.mubr.bf16.gmra.mxu0 %v669
      %v850 = vpop.f32.mrf.mxu0
      %v851 = vadd.f32 0.0, %v850
      %v852 = vpop.f32.mrf.mxu0
      %v853 = vpop.f32.mrf.mxu0
      %v854 = vadd.f32 0.0, %v853
      %v855 = vpop.f32.mrf.mxu0
      %856 = vmatprep.mubr.bf16.mxu0 0
      %857 = vmatmul.mubr.bf16.gmra.mxu0 %v670
      %v858 = vpop.f32.mrf.mxu0
      %v859 = vadd.f32 0.0, %v858
      %v860 = vpop.f32.mrf.mxu0
      %v861 = vpop.f32.mrf.mxu0
      %v862 = vadd.f32 0.0, %v861
      %v863 = vpop.f32.mrf.mxu0
      %864 = vmatprep.mubr.bf16.mxu0 0
      %865 = vmatmul.mubr.bf16.gmra.mxu0 %v671
      %v866 = vpop.f32.mrf.mxu0
      %v867 = vadd.f32 0.0, %v866
      %v868 = vpop.f32.mrf.mxu0
      %v869 = vpop.f32.mrf.mxu0
      %v870 = vadd.f32 0.0, %v869
      %v871 = vpop.f32.mrf.mxu0
      %872 = vmatprep.mubr.bf16.mxu0 0
      %873 = vmatmul.mubr.bf16.gmra.mxu0 %v672
      %v874 = vpop.f32.mrf.mxu0
      %v875 = vadd.f32 0.0, %v874
      %v876 = vpop.f32.mrf.mxu0
      %v877 = vpop.f32.mrf.mxu0
      %v878 = vadd.f32 0.0, %v877
      %v879 = vpop.f32.mrf.mxu0
      %880 = vmatprep.mubr.bf16.mxu0 0
      %881 = vmatmul.mubr.bf16.gmra.mxu0 %v673
      %v882 = vpop.f32.mrf.mxu0
      %v883 = vadd.f32 0.0, %v882
      %v884 = vpop.f32.mrf.mxu0
      %v885 = vpop.f32.mrf.mxu0
      %v886 = vadd.f32 0.0, %v885
      %v887 = vpop.f32.mrf.mxu0
      %888 = vmatprep.mubr.bf16.mxu0 0
      %889 = vmatmul.mubr.bf16.gmra.mxu0 %v674
      %v890 = vpop.f32.mrf.mxu0
      %v891 = vadd.f32 0.0, %v890
      %v892 = vpop.f32.mrf.mxu0
      %v893 = vpop.f32.mrf.mxu0
      %v894 = vadd.f32 0.0, %v893
      %v895 = vpop.f32.mrf.mxu0
      %896 = vmatprep.mubr.bf16.mxu0 0
      %897 = vmatmul.mubr.bf16.gmra.mxu0 %v675
      %v898 = vpop.f32.mrf.mxu0
      %v899 = vadd.f32 0.0, %v898
      %v900 = vpop.f32.mrf.mxu0
      %v901 = vpop.f32.mrf.mxu0
      %v902 = vadd.f32 0.0, %v901
      %v903 = vpop.f32.mrf.mxu0
      %904 = vmatprep.mubr.bf16.mxu0 0
      %905 = vmatmul.mubr.bf16.gmra.mxu0 %v676
      %v906 = vpop.f32.mrf.mxu0
      %v907 = vadd.f32 0.0, %v906
      %v908 = vpop.f32.mrf.mxu0
      %v909 = vpop.f32.mrf.mxu0
      %v910 = vadd.f32 0.0, %v909
      %v911 = vpop.f32.mrf.mxu0
      %912 = vmatprep.mubr.bf16.mxu0 0
      %913 = vmatmul.mubr.bf16.gmra.mxu0 %v677
      %v914 = vpop.f32.mrf.mxu0
      %v915 = vadd.f32 0.0, %v914
      %v916 = vpop.f32.mrf.mxu0
      %v917 = vpop.f32.mrf.mxu0
      %v918 = vadd.f32 0.0, %v917
      %v919 = vpop.f32.mrf.mxu0
      %920 = vmatprep.mubr.bf16.mxu0 0
      %921 = vmatmul.mubr.bf16.gmra.mxu0 %v678
      %v922 = vpop.f32.mrf.mxu0
      %v923 = vadd.f32 0.0, %v922
      %v924 = vpop.f32.mrf.mxu0
      %v925 = vpop.f32.mrf.mxu0
      %v926 = vadd.f32 0.0, %v925
      %v927 = vpop.f32.mrf.mxu0
      %928 = vmatprep.mubr.bf16.mxu0 0
      %929 = vmatmul.mubr.bf16.gmra.mxu0 %v679
      %v930 = vpop.f32.mrf.mxu0
      %v931 = vadd.f32 0.0, %v930
      %v932 = vpop.f32.mrf.mxu0
      %v933 = vpop.f32.mrf.mxu0
      %v934 = vadd.f32 0.0, %v933
      %v935 = vpop.f32.mrf.mxu0
      %936 = vmatprep.mubr.bf16.mxu0 0
      %937 = vmatmul.mubr.bf16.gmra.mxu0 %v680
      %v938 = vpop.f32.mrf.mxu0
      %v939 = vadd.f32 0.0, %v938
      %v940 = vpop.f32.mrf.mxu0
      %v941 = vpop.f32.mrf.mxu0
      %v942 = vadd.f32 0.0, %v941
      %v943 = vpop.f32.mrf.mxu0
      %944 = vmatprep.mubr.bf16.mxu0 0
      %945 = vmatmul.mubr.bf16.gmra.mxu0 %v681
      %v946 = vpop.f32.mrf.mxu0
      %v947 = vadd.f32 0.0, %v946
      %v948 = vpop.f32.mrf.mxu0
      %v949 = vpop.f32.mrf.mxu0
      %v950 = vadd.f32 0.0, %v949
      %v951 = vpop.f32.mrf.mxu0
      %952 = vmatprep.mubr.bf16.mxu0 0
      %953 = vmatmul.mubr.bf16.gmra.mxu0 %v682
      %v954 = vpop.f32.mrf.mxu0
      %v955 = vadd.f32 0.0, %v954
      %v956 = vpop.f32.mrf.mxu0
      %v957 = vpop.f32.mrf.mxu0
      %v958 = vadd.f32 0.0, %v957
      %v959 = vpop.f32.mrf.mxu0
      %960 = vmatprep.mubr.bf16.mxu0 0
      %961 = vmatmul.mubr.bf16.gmra.mxu0 %v683
      %v962 = vpop.f32.mrf.mxu0
      %v963 = vadd.f32 0.0, %v962
      %v964 = vpop.f32.mrf.mxu0
      %v965 = vpop.f32.mrf.mxu0
      %v966 = vadd.f32 0.0, %v965
      %v967 = vpop.f32.mrf.mxu0
      %968 = vmatprep.mubr.bf16.mxu0 0
      %969 = vmatmul.mubr.bf16.gmra.mxu0 %v684
      %v970 = vpop.f32.mrf.mxu0
      %v971 = vadd.f32 0.0, %v970
      %v972 = vpop.f32.mrf.mxu0
      %v973 = vpop.f32.mrf.mxu0
      %v974 = vadd.f32 0.0, %v973
      %v975 = vpop.f32.mrf.mxu0
      %976 = vmatprep.mubr.bf16.mxu0 0
      %977 = vmatmul.mubr.bf16.gmra.mxu0 %v685
      %v978 = vpop.f32.mrf.mxu0
      %v979 = vadd.f32 0.0, %v978
      %v980 = vpop.f32.mrf.mxu0
      %v981 = vpop.f32.mrf.mxu0
      %v982 = vadd.f32 0.0, %v981
      %v983 = vpop.f32.mrf.mxu0
      %984 = vmatprep.mubr.bf16.mxu0 0
      %985 = vmatmul.mubr.bf16.gmra.mxu0 %v686
      %v986 = vpop.f32.mrf.mxu0
      %v987 = vadd.f32 0.0, %v986
      %v988 = vpop.f32.mrf.mxu0
      %v989 = vpop.f32.mrf.mxu0
      %v990 = vadd.f32 0.0, %v989
      %v991 = vpop.f32.mrf.mxu0
      %992 = vmatprep.mubr.bf16.mxu0 0
      %993 = vmatmul.mubr.bf16.gmra.mxu0 %v687
      %v994 = vpop.f32.mrf.mxu0
      %v995 = vadd.f32 0.0, %v994
      %v996 = vpop.f32.mrf.mxu0
      %v997 = vpop.f32.mrf.mxu0
      %v998 = vadd.f32 0.0, %v997
      %v999 = vpop.f32.mrf.mxu0
      %1000 = vdwg.mxu0
      %v1001 = vld [vmem:[%s2] sm:$0x1]
      %v1003 = vlaneseq
      %v1004 = vshrl.u32 %v1003, 7
      %v1005 = vsub.s32 0, %v1004
      %v1006 = vrot.slane %v1001, %v1005
      %v1008 = vadd.f32 %v787, %v1006
      %v1009 = vadd.f32 %v790, %v1006
      %v1010 = vadd.f32 %v795, %v1006
      %v1011 = vadd.f32 %v798, %v1006
      %v1012 = vadd.f32 %v803, %v1006
      %v1013 = vadd.f32 %v806, %v1006
      %v1014 = vadd.f32 %v811, %v1006
      %v1015 = vadd.f32 %v814, %v1006
      %v1016 = vadd.f32 %v819, %v1006
      %v1017 = vadd.f32 %v822, %v1006
      %v1018 = vadd.f32 %v827, %v1006
      %v1019 = vadd.f32 %v830, %v1006
      %v1020 = vadd.f32 %v835, %v1006
      %v1021 = vadd.f32 %v838, %v1006
      %v1022 = vadd.f32 %v843, %v1006
      %v1023 = vadd.f32 %v846, %v1006
      %v1024 = vadd.f32 %v851, %v1006
      %v1025 = vadd.f32 %v854, %v1006
      %v1026 = vadd.f32 %v859, %v1006
      %v1027 = vadd.f32 %v862, %v1006
      %v1028 = vadd.f32 %v867, %v1006
      %v1029 = vadd.f32 %v870, %v1006
      %v1030 = vadd.f32 %v875, %v1006
      %v1031 = vadd.f32 %v878, %v1006
      %v1032 = vadd.f32 %v883, %v1006
      %v1033 = vadd.f32 %v886, %v1006
      %v1034 = vadd.f32 %v891, %v1006
      %v1035 = vadd.f32 %v894, %v1006
      %v1036 = vadd.f32 %v899, %v1006
      %v1037 = vadd.f32 %v902, %v1006
      %v1038 = vadd.f32 %v907, %v1006
      %v1039 = vadd.f32 %v910, %v1006
      %v1040 = vadd.f32 %v915, %v1006
      %v1041 = vadd.f32 %v918, %v1006
      %v1042 = vadd.f32 %v923, %v1006
      %v1043 = vadd.f32 %v926, %v1006
      %v1044 = vadd.f32 %v931, %v1006
      %v1045 = vadd.f32 %v934, %v1006
      %v1046 = vadd.f32 %v939, %v1006
      %v1047 = vadd.f32 %v942, %v1006
      %v1048 = vadd.f32 %v947, %v1006
      %v1049 = vadd.f32 %v950, %v1006
      %v1050 = vadd.f32 %v955, %v1006
      %v1051 = vadd.f32 %v958, %v1006
      %v1052 = vadd.f32 %v963, %v1006
      %v1053 = vadd.f32 %v966, %v1006
      %v1054 = vadd.f32 %v971, %v1006
      %v1055 = vadd.f32 %v974, %v1006
      %v1056 = vadd.f32 %v979, %v1006
      %v1057 = vadd.f32 %v982, %v1006
      %v1058 = vadd.f32 %v987, %v1006
      %v1059 = vadd.f32 %v990, %v1006
      %v1060 = vadd.f32 %v995, %v1006
      %v1061 = vadd.f32 %v998, %v1006
      %v1062 = vmax.f32 %v1008, 0.0
      %v1063 = vmax.f32 %v1009, 0.0
      %v1064 = vmax.f32 %v1010, 0.0
      %v1065 = vmax.f32 %v1011, 0.0
      %v1066 = vmax.f32 %v1012, 0.0
      %v1067 = vmax.f32 %v1013, 0.0
      %v1068 = vmax.f32 %v1014, 0.0
      %v1069 = vmax.f32 %v1015, 0.0
      %v1070 = vmax.f32 %v1016, 0.0
      %v1071 = vmax.f32 %v1017, 0.0
      %v1072 = vmax.f32 %v1018, 0.0
      %v1073 = vmax.f32 %v1019, 0.0
      %v1074 = vmax.f32 %v1020, 0.0
      %v1075 = vmax.f32 %v1021, 0.0
      %v1076 = vmax.f32 %v1022, 0.0
      %v1077 = vmax.f32 %v1023, 0.0
      %v1078 = vmax.f32 %v1024, 0.0
      %v1079 = vmax.f32 %v1025, 0.0
      %v1080 = vmax.f32 %v1026, 0.0
      %v1081 = vmax.f32 %v1027, 0.0
      %v1082 = vmax.f32 %v1028, 0.0
      %v1083 = vmax.f32 %v1029, 0.0
      %v1084 = vmax.f32 %v1030, 0.0
      %v1085 = vmax.f32 %v1031, 0.0
      %v1086 = vmax.f32 %v1032, 0.0
      %v1087 = vmax.f32 %v1033, 0.0
      %v1088 = vmax.f32 %v1034, 0.0
      %v1089 = vmax.f32 %v1035, 0.0
      %v1090 = vmax.f32 %v1036, 0.0
      %v1091 = vmax.f32 %v1037, 0.0
      %v1092 = vmax.f32 %v1038, 0.0
      %v1093 = vmax.f32 %v1039, 0.0
      %v1094 = vmax.f32 %v1040, 0.0
      %v1095 = vmax.f32 %v1041, 0.0
      %v1096 = vmax.f32 %v1042, 0.0
      %v1097 = vmax.f32 %v1043, 0.0
      %v1098 = vmax.f32 %v1044, 0.0
      %v1099 = vmax.f32 %v1045, 0.0
      %v1100 = vmax.f32 %v1046, 0.0
      %v1101 = vmax.f32 %v1047, 0.0
      %v1102 = vmax.f32 %v1048, 0.0
      %v1103 = vmax.f32 %v1049, 0.0
      %v1104 = vmax.f32 %v1050, 0.0
      %v1105 = vmax.f32 %v1051, 0.0
      %v1106 = vmax.f32 %v1052, 0.0
      %v1107 = vmax.f32 %v1053, 0.0
      %v1108 = vmax.f32 %v1054, 0.0
      %v1109 = vmax.f32 %v1055, 0.0
      %v1110 = vmax.f32 %v1056, 0.0
      %v1111 = vmax.f32 %v1057, 0.0
      %v1112 = vmax.f32 %v1058, 0.0
      %v1113 = vmax.f32 %v1059, 0.0
      %v1114 = vmax.f32 %v1060, 0.0
      %v1115 = vmax.f32 %v1061, 0.0
      %v1116 = vmin.f32 %v1062, 6.0
      %v1117 = vmin.f32 %v1063, 6.0
      %v1118 = vmin.f32 %v1064, 6.0
      %v1119 = vmin.f32 %v1065, 6.0
      %v1120 = vmin.f32 %v1066, 6.0
      %v1121 = vmin.f32 %v1067, 6.0
      %v1122 = vmin.f32 %v1068, 6.0
      %v1123 = vmin.f32 %v1069, 6.0
      %v1124 = vmin.f32 %v1070, 6.0
      %v1125 = vmin.f32 %v1071, 6.0
      %v1126 = vmin.f32 %v1072, 6.0
      %v1127 = vmin.f32 %v1073, 6.0
      %v1128 = vmin.f32 %v1074, 6.0
      %v1129 = vmin.f32 %v1075, 6.0
      %v1130 = vmin.f32 %v1076, 6.0
      %v1131 = vmin.f32 %v1077, 6.0
      %v1132 = vmin.f32 %v1078, 6.0
      %v1133 = vmin.f32 %v1079, 6.0
      %v1134 = vmin.f32 %v1080, 6.0
      %v1135 = vmin.f32 %v1081, 6.0
      %v1136 = vmin.f32 %v1082, 6.0
      %v1137 = vmin.f32 %v1083, 6.0
      %v1138 = vmin.f32 %v1084, 6.0
      %v1139 = vmin.f32 %v1085, 6.0
      %v1140 = vmin.f32 %v1086, 6.0
      %v1141 = vmin.f32 %v1087, 6.0
      %v1142 = vmin.f32 %v1088, 6.0
      %v1143 = vmin.f32 %v1089, 6.0
      %v1144 = vmin.f32 %v1090, 6.0
      %v1145 = vmin.f32 %v1091, 6.0
      %v1146 = vmin.f32 %v1092, 6.0
      %v1147 = vmin.f32 %v1093, 6.0
      %v1148 = vmin.f32 %v1094, 6.0
      %v1149 = vmin.f32 %v1095, 6.0
      %v1150 = vmin.f32 %v1096, 6.0
      %v1151 = vmin.f32 %v1097, 6.0
      %v1152 = vmin.f32 %v1098, 6.0
      %v1153 = vmin.f32 %v1099, 6.0
      %v1154 = vmin.f32 %v1100, 6.0
      %v1155 = vmin.f32 %v1101, 6.0
      %v1156 = vmin.f32 %v1102, 6.0
      %v1157 = vmin.f32 %v1103, 6.0
      %v1158 = vmin.f32 %v1104, 6.0
      %v1159 = vmin.f32 %v1105, 6.0
      %v1160 = vmin.f32 %v1106, 6.0
      %v1161 = vmin.f32 %v1107, 6.0
      %v1162 = vmin.f32 %v1108, 6.0
      %v1163 = vmin.f32 %v1109, 6.0
      %v1164 = vmin.f32 %v1110, 6.0
      %v1165 = vmin.f32 %v1111, 6.0
      %v1166 = vmin.f32 %v1112, 6.0
      %v1167 = vmin.f32 %v1113, 6.0
      %v1168 = vmin.f32 %v1114, 6.0
      %v1169 = vmin.f32 %v1115, 6.0
      %v1170 = vsel %vm607, 1, 0
      %v1171 = vsel %vm608, 1, 0
      %v1172 = vsel %vm609, 1, 0
      %v1173 = vsel %vm610, 1, 0
      %v1174 = vsel %vm611, 1, 0
      %v1175 = vsel %vm612, 1, 0
      %v1176 = vsel %vm613, 1, 0
      %v1177 = vsel %vm614, 1, 0
      %v1178 = vsel %vm615, 1, 0
      %v1179 = vsel %vm616, 1, 0
      %v1180 = vsel %vm617, 1, 0
      %v1181 = vsel %vm618, 1, 0
      %v1182 = vsel %vm619, 1, 0
      %v1183 = vsel %vm620, 1, 0
      %v1184 = vsel %vm621, 1, 0
      %v1185 = vsel %vm622, 1, 0
      %v1186 = vsel %vm623, 1, 0
      %v1187 = vsel %vm624, 1, 0
      %v1188 = vsel %vm625, 1, 0
      %v1189 = vsel %vm626, 1, 0
      %v1190 = vsel %vm627, 1, 0
      %v1191 = vsel %vm628, 1, 0
      %v1192 = vsel %vm629, 1, 0
      %v1193 = vsel %vm630, 1, 0
      %v1194 = vsel %vm631, 1, 0
      %v1195 = vsel %vm632, 1, 0
      %v1196 = vsel %vm633, 1, 0
      %v1197 = vsel %vm634, 1, 0
      %v1198 = vsel %vm635, 1, 0
      %v1199 = vsel %vm636, 1, 0
      %v1200 = vsel %vm637, 1, 0
      %v1201 = vsel %vm638, 1, 0
      %v1202 = vsel %vm639, 1, 0
      %v1203 = vsel %vm640, 1, 0
      %v1204 = vsel %vm641, 1, 0
      %v1205 = vsel %vm642, 1, 0
      %v1206 = vsel %vm643, 1, 0
      %v1207 = vsel %vm644, 1, 0
      %v1208 = vsel %vm645, 1, 0
      %v1209 = vsel %vm646, 1, 0
      %v1210 = vsel %vm647, 1, 0
      %v1211 = vsel %vm648, 1, 0
      %v1212 = vsel %vm649, 1, 0
      %v1213 = vsel %vm650, 1, 0
      %v1214 = vsel %vm651, 1, 0
      %v1215 = vsel %vm652, 1, 0
      %v1216 = vsel %vm653, 1, 0
      %v1217 = vsel %vm654, 1, 0
      %v1218 = vsel %vm655, 1, 0
      %v1219 = vsel %vm656, 1, 0
      %v1220 = vsel %vm657, 1, 0
      %v1221 = vsel %vm658, 1, 0
      %v1222 = vsel %vm659, 1, 0
      %v1223 = vsel %vm660, 1, 0
      %vm1224 = vcmp.eq.s32.totalorder %v1170, 1
      %vm1225 = vcmp.eq.s32.totalorder %v1171, 1
      %vm1226 = vcmp.eq.s32.totalorder %v1172, 1
      %vm1227 = vcmp.eq.s32.totalorder %v1173, 1
      %vm1228 = vcmp.eq.s32.totalorder %v1174, 1
      %vm1229 = vcmp.eq.s32.totalorder %v1175, 1
      %vm1230 = vcmp.eq.s32.totalorder %v1176, 1
      %vm1231 = vcmp.eq.s32.totalorder %v1177, 1
      %vm1232 = vcmp.eq.s32.totalorder %v1178, 1
      %vm1233 = vcmp.eq.s32.totalorder %v1179, 1
      %vm1234 = vcmp.eq.s32.totalorder %v1180, 1
      %vm1235 = vcmp.eq.s32.totalorder %v1181, 1
      %vm1236 = vcmp.eq.s32.totalorder %v1182, 1
      %vm1237 = vcmp.eq.s32.totalorder %v1183, 1
      %vm1238 = vcmp.eq.s32.totalorder %v1184, 1
      %vm1239 = vcmp.eq.s32.totalorder %v1185, 1
      %vm1240 = vcmp.eq.s32.totalorder %v1186, 1
      %vm1241 = vcmp.eq.s32.totalorder %v1187, 1
      %vm1242 = vcmp.eq.s32.totalorder %v1188, 1
      %vm1243 = vcmp.eq.s32.totalorder %v1189, 1
      %vm1244 = vcmp.eq.s32.totalorder %v1190, 1
      %vm1245 = vcmp.eq.s32.totalorder %v1191, 1
      %vm1246 = vcmp.eq.s32.totalorder %v1192, 1
      %vm1247 = vcmp.eq.s32.totalorder %v1193, 1
      %vm1248 = vcmp.eq.s32.totalorder %v1194, 1
      %vm1249 = vcmp.eq.s32.totalorder %v1195, 1
      %vm1250 = vcmp.eq.s32.totalorder %v1196, 1
      %vm1251 = vcmp.eq.s32.totalorder %v1197, 1
      %vm1252 = vcmp.eq.s32.totalorder %v1198, 1
      %vm1253 = vcmp.eq.s32.totalorder %v1199, 1
      %vm1254 = vcmp.eq.s32.totalorder %v1200, 1
      %vm1255 = vcmp.eq.s32.totalorder %v1201, 1
      %vm1256 = vcmp.eq.s32.totalorder %v1202, 1
      %vm1257 = vcmp.eq.s32.totalorder %v1203, 1
      %vm1258 = vcmp.eq.s32.totalorder %v1204, 1
      %vm1259 = vcmp.eq.s32.totalorder %v1205, 1
      %vm1260 = vcmp.eq.s32.totalorder %v1206, 1
      %vm1261 = vcmp.eq.s32.totalorder %v1207, 1
      %vm1262 = vcmp.eq.s32.totalorder %v1208, 1
      %vm1263 = vcmp.eq.s32.totalorder %v1209, 1
      %vm1264 = vcmp.eq.s32.totalorder %v1210, 1
      %vm1265 = vcmp.eq.s32.totalorder %v1211, 1
      %vm1266 = vcmp.eq.s32.totalorder %v1212, 1
      %vm1267 = vcmp.eq.s32.totalorder %v1213, 1
      %vm1268 = vcmp.eq.s32.totalorder %v1214, 1
      %vm1269 = vcmp.eq.s32.totalorder %v1215, 1
      %vm1270 = vcmp.eq.s32.totalorder %v1216, 1
      %vm1271 = vcmp.eq.s32.totalorder %v1217, 1
      %vm1272 = vcmp.eq.s32.totalorder %v1218, 1
      %vm1273 = vcmp.eq.s32.totalorder %v1219, 1
      %vm1274 = vcmp.eq.s32.totalorder %v1220, 1
      %vm1275 = vcmp.eq.s32.totalorder %v1221, 1
      %vm1276 = vcmp.eq.s32.totalorder %v1222, 1
      %vm1277 = vcmp.eq.s32.totalorder %v1223, 1
      %v1278 = vsel %vm1224, %v1116, 0.0
      %v1279 = vsel %vm1225, %v1117, 0.0
      %v1280 = vsel %vm1226, %v1118, 0.0
      %v1281 = vsel %vm1227, %v1119, 0.0
      %v1282 = vsel %vm1228, %v1120, 0.0
      %v1283 = vsel %vm1229, %v1121, 0.0
      %v1284 = vsel %vm1230, %v1122, 0.0
      %v1285 = vsel %vm1231, %v1123, 0.0
      %v1286 = vsel %vm1232, %v1124, 0.0
      %v1287 = vsel %vm1233, %v1125, 0.0
      %v1288 = vsel %vm1234, %v1126, 0.0
      %v1289 = vsel %vm1235, %v1127, 0.0
      %v1290 = vsel %vm1236, %v1128, 0.0
      %v1291 = vsel %vm1237, %v1129, 0.0
      %v1292 = vsel %vm1238, %v1130, 0.0
      %v1293 = vsel %vm1239, %v1131, 0.0
      %v1294 = vsel %vm1240, %v1132, 0.0
      %v1295 = vsel %vm1241, %v1133, 0.0
      %v1296 = vsel %vm1242, %v1134, 0.0
      %v1297 = vsel %vm1243, %v1135, 0.0
      %v1298 = vsel %vm1244, %v1136, 0.0
      %v1299 = vsel %vm1245, %v1137, 0.0
      %v1300 = vsel %vm1246, %v1138, 0.0
      %v1301 = vsel %vm1247, %v1139, 0.0
      %v1302 = vsel %vm1248, %v1140, 0.0
      %v1303 = vsel %vm1249, %v1141, 0.0
      %v1304 = vsel %vm1250, %v1142, 0.0
      %v1305 = vsel %vm1251, %v1143, 0.0
      %v1306 = vsel %vm1252, %v1144, 0.0
      %v1307 = vsel %vm1253, %v1145, 0.0
      %v1308 = vsel %vm1254, %v1146, 0.0
      %v1309 = vsel %vm1255, %v1147, 0.0
      %v1310 = vsel %vm1256, %v1148, 0.0
      %v1311 = vsel %vm1257, %v1149, 0.0
      %v1312 = vsel %vm1258, %v1150, 0.0
      %v1313 = vsel %vm1259, %v1151, 0.0
      %v1314 = vsel %vm1260, %v1152, 0.0
      %v1315 = vsel %vm1261, %v1153, 0.0
      %v1316 = vsel %vm1262, %v1154, 0.0
      %v1317 = vsel %vm1263, %v1155, 0.0
      %v1318 = vsel %vm1264, %v1156, 0.0
      %v1319 = vsel %vm1265, %v1157, 0.0
      %v1320 = vsel %vm1266, %v1158, 0.0
      %v1321 = vsel %vm1267, %v1159, 0.0
      %v1322 = vsel %vm1268, %v1160, 0.0
      %v1323 = vsel %vm1269, %v1161, 0.0
      %v1324 = vsel %vm1270, %v1162, 0.0
      %v1325 = vsel %vm1271, %v1163, 0.0
      %v1326 = vsel %vm1272, %v1164, 0.0
      %v1327 = vsel %vm1273, %v1165, 0.0
      %v1328 = vsel %vm1274, %v1166, 0.0
      %v1329 = vsel %vm1275, %v1167, 0.0
      %v1330 = vsel %vm1276, %v1168, 0.0
      %v1331 = vsel %vm1277, %v1169, 0.0
      %1332 = vst [vmem:[#allocation3] sm:$0xff] %v1278
      %1333 = vst [vmem:[#allocation3 + $0x8] sm:$0xff] %v1279
      %1334 = vst [vmem:[#allocation3 + $0x10] sm:$0xff] %v1280
      %1335 = vst [vmem:[#allocation3 + $0x18] sm:$0xff] %v1281
      %1336 = vst [vmem:[#allocation3 + $0x20] sm:$0xff] %v1282
      %1337 = vst [vmem:[#allocation3 + $0x28] sm:$0xff] %v1283
      %1338 = vst [vmem:[#allocation3 + $0x30] sm:$0xff] %v1284
      %1339 = vst [vmem:[#allocation3 + $0x38] sm:$0xff] %v1285
      %1340 = vst [vmem:[#allocation3 + $0x40] sm:$0xff] %v1286
      %1341 = vst [vmem:[#allocation3 + $0x48] sm:$0xff] %v1287
      %1342 = vst [vmem:[#allocation3 + $0x50] sm:$0xff] %v1288
      %1343 = vst [vmem:[#allocation3 + $0x58] sm:$0xff] %v1289
      %1344 = vst [vmem:[#allocation3 + $0x60] sm:$0xff] %v1290
      %1345 = vst [vmem:[#allocation3 + $0x68] sm:$0xff] %v1291
      %1346 = vst [vmem:[#allocation3 + $0x70] sm:$0xff] %v1292
      %1347 = vst [vmem:[#allocation3 + $0x78] sm:$0xff] %v1293
      %1348 = vst [vmem:[#allocation3 + $0x80] sm:$0xff] %v1294
      %1349 = vst [vmem:[#allocation3 + $0x88] sm:$0xff] %v1295
      %1350 = vst [vmem:[#allocation3 + $0x90] sm:$0xff] %v1296
      %1351 = vst [vmem:[#allocation3 + $0x98] sm:$0xff] %v1297
      %1352 = vst [vmem:[#allocation3 + $0xa0] sm:$0xff] %v1298
      %1353 = vst [vmem:[#allocation3 + $0xa8] sm:$0xff] %v1299
      %1354 = vst [vmem:[#allocation3 + $0xb0] sm:$0xff] %v1300
      %1355 = vst [vmem:[#allocation3 + $0xb8] sm:$0xff] %v1301
      %1356 = vst [vmem:[#allocation3 + $0xc0] sm:$0xff] %v1302
      %1357 = vst [vmem:[#allocation3 + $0xc8] sm:$0xff] %v1303
      %1358 = vst [vmem:[#allocation3 + $0xd0] sm:$0xff] %v1304
      %1359 = vst [vmem:[#allocation3 + $0xd8] sm:$0xff] %v1305
      %1360 = vst [vmem:[#allocation3 + $0xe0] sm:$0xff] %v1306
      %1361 = vst [vmem:[#allocation3 + $0xe8] sm:$0xff] %v1307
      %1362 = vst [vmem:[#allocation3 + $0xf0] sm:$0xff] %v1308
      %1363 = vst [vmem:[#allocation3 + $0xf8] sm:$0xff] %v1309
      %1364 = vst [vmem:[#allocation3 + $0x100] sm:$0xff] %v1310
      %1365 = vst [vmem:[#allocation3 + $0x108] sm:$0xff] %v1311
      %1366 = vst [vmem:[#allocation3 + $0x110] sm:$0xff] %v1312
      %1367 = vst [vmem:[#allocation3 + $0x118] sm:$0xff] %v1313
      %1368 = vst [vmem:[#allocation3 + $0x120] sm:$0xff] %v1314
      %1369 = vst [vmem:[#allocation3 + $0x128] sm:$0xff] %v1315
      %1370 = vst [vmem:[#allocation3 + $0x130] sm:$0xff] %v1316
      %1371 = vst [vmem:[#allocation3 + $0x138] sm:$0xff] %v1317
      %1372 = vst [vmem:[#allocation3 + $0x140] sm:$0xff] %v1318
      %1373 = vst [vmem:[#allocation3 + $0x148] sm:$0xff] %v1319
      %1374 = vst [vmem:[#allocation3 + $0x150] sm:$0xff] %v1320
      %1375 = vst [vmem:[#allocation3 + $0x158] sm:$0xff] %v1321
      %1376 = vst [vmem:[#allocation3 + $0x160] sm:$0xff] %v1322
      %1377 = vst [vmem:[#allocation3 + $0x168] sm:$0xff] %v1323
      %1378 = vst [vmem:[#allocation3 + $0x170] sm:$0xff] %v1324
      %1379 = vst [vmem:[#allocation3 + $0x178] sm:$0xff] %v1325
      %1380 = vst [vmem:[#allocation3 + $0x180] sm:$0xff] %v1326
      %1381 = vst [vmem:[#allocation3 + $0x188] sm:$0xff] %v1327
      %1382 = vst [vmem:[#allocation3 + $0x190] sm:$0xff] %v1328
      %1383 = vst [vmem:[#allocation3 + $0x198] sm:$0xff] %v1329
      %1384 = vst [vmem:[#allocation3 + $0x1a0] sm:$0xff] %v1330
      %1385 = vst [vmem:[#allocation3 + $0x1a8] sm:$0xff] %v1331
      %v1386 = vld [vmem:[#allocation3] sm:$0xff]
      %v1387 = vld [vmem:[#allocation3 + $0x8] sm:$0xff]
      %v1388 = vld [vmem:[#allocation3 + $0x18] sm:$0xff]
      %v1389 = vld [vmem:[#allocation3 + $0x20] sm:$0xff]
      %v1390 = vld [vmem:[#allocation3 + $0x30] sm:$0xff]
      %v1391 = vld [vmem:[#allocation3 + $0x38] sm:$0xff]
      %v1392 = vld [vmem:[#allocation3 + $0x48] sm:$0xff]
      %v1393 = vld [vmem:[#allocation3 + $0x50] sm:$0xff]
      %v1394 = vld [vmem:[#allocation3 + $0x60] sm:$0xff]
      %v1395 = vld [vmem:[#allocation3 + $0x68] sm:$0xff]
      %v1396 = vld [vmem:[#allocation3 + $0x78] sm:$0xff]
      %v1397 = vld [vmem:[#allocation3 + $0x80] sm:$0xff]
      %v1398 = vld [vmem:[#allocation3 + $0x90] sm:$0xff]
      %v1399 = vld [vmem:[#allocation3 + $0x98] sm:$0xff]
      %v1400 = vld [vmem:[#allocation3 + $0xa8] sm:$0xff]
      %v1401 = vld [vmem:[#allocation3 + $0xb0] sm:$0xff]
      %v1402 = vld [vmem:[#allocation3 + $0xc0] sm:$0xff]
      %v1403 = vld [vmem:[#allocation3 + $0xc8] sm:$0xff]
      %v1404 = vld [vmem:[#allocation3 + $0xd8] sm:$0xff]
      %v1405 = vld [vmem:[#allocation3 + $0xe0] sm:$0xff]
      %v1406 = vld [vmem:[#allocation3 + $0xf0] sm:$0xff]
      %v1407 = vld [vmem:[#allocation3 + $0xf8] sm:$0xff]
      %v1408 = vld [vmem:[#allocation3 + $0x108] sm:$0xff]
      %v1409 = vld [vmem:[#allocation3 + $0x110] sm:$0xff]
      %v1410 = vld [vmem:[#allocation3 + $0x120] sm:$0xff]
      %v1411 = vld [vmem:[#allocation3 + $0x128] sm:$0xff]
      %v1412 = vld [vmem:[#allocation3 + $0x138] sm:$0xff]
      %v1413 = vld [vmem:[#allocation3 + $0x140] sm:$0xff]
      %v1414 = vld [vmem:[#allocation3 + $0x150] sm:$0xff]
      %v1415 = vld [vmem:[#allocation3 + $0x158] sm:$0xff]
      %v1416 = vld [vmem:[#allocation3 + $0x168] sm:$0xff]
      %v1417 = vld [vmem:[#allocation3 + $0x170] sm:$0xff]
      %v1418 = vld [vmem:[%s3] sm:$0x1]
      %v1419 = vlaneseq
      %v1420 = vshrl.u32 %v1419, 7
      %v1421 = vsub.s32 0, %v1420
      %v1422 = vrot.slane %v1418, %v1421
      %v1423 = vmul.f32 %v1386, %v1422
      %v1424 = vmul.f32 %v1387, %v1422
      %v1425 = vmul.f32 %v1388, %v1422
      %v1426 = vmul.f32 %v1389, %v1422
      %v1427 = vmul.f32 %v1390, %v1422
      %v1428 = vmul.f32 %v1391, %v1422
      %v1429 = vmul.f32 %v1392, %v1422
      %v1430 = vmul.f32 %v1393, %v1422
      %v1431 = vmul.f32 %v1394, %v1422
      %v1432 = vmul.f32 %v1395, %v1422
      %v1433 = vmul.f32 %v1396, %v1422
      %v1434 = vmul.f32 %v1397, %v1422
      %v1435 = vmul.f32 %v1398, %v1422
      %v1436 = vmul.f32 %v1399, %v1422
      %v1437 = vmul.f32 %v1400, %v1422
      %v1438 = vmul.f32 %v1401, %v1422
      %v1439 = vmul.f32 %v1402, %v1422
      %v1440 = vmul.f32 %v1403, %v1422
      %v1441 = vmul.f32 %v1404, %v1422
      %v1442 = vmul.f32 %v1405, %v1422
      %v1443 = vmul.f32 %v1406, %v1422
      %v1444 = vmul.f32 %v1407, %v1422
      %v1445 = vmul.f32 %v1408, %v1422
      %v1446 = vmul.f32 %v1409, %v1422
      %v1447 = vmul.f32 %v1410, %v1422
      %v1448 = vmul.f32 %v1411, %v1422
      %v1449 = vmul.f32 %v1412, %v1422
      %v1450 = vmul.f32 %v1413, %v1422
      %v1451 = vmul.f32 %v1414, %v1422
      %v1452 = vmul.f32 %v1415, %v1422
      %v1453 = vmul.f32 %v1416, %v1422
      %v1454 = vmul.f32 %v1417, %v1422
      %v1455 = vadd.f32 %v1423, 0.0
      %v1456 = vadd.f32 %v1424, 0.0
      %v1457 = vadd.f32 %v1425, 0.0
      %v1458 = vadd.f32 %v1426, 0.0
      %v1459 = vadd.f32 %v1427, 0.0
      %v1460 = vadd.f32 %v1428, 0.0
      %v1461 = vadd.f32 %v1429, 0.0
      %v1462 = vadd.f32 %v1430, 0.0
      %v1463 = vadd.f32 %v1431, 0.0
      %v1464 = vadd.f32 %v1432, 0.0
      %v1465 = vadd.f32 %v1433, 0.0
      %v1466 = vadd.f32 %v1434, 0.0
      %v1467 = vadd.f32 %v1435, 0.0
      %v1468 = vadd.f32 %v1436, 0.0
      %v1469 = vadd.f32 %v1437, 0.0
      %v1470 = vadd.f32 %v1438, 0.0
      %v1471 = vadd.f32 %v1439, 0.0
      %v1472 = vadd.f32 %v1440, 0.0
      %v1473 = vadd.f32 %v1441, 0.0
      %v1474 = vadd.f32 %v1442, 0.0
      %v1475 = vadd.f32 %v1443, 0.0
      %v1476 = vadd.f32 %v1444, 0.0
      %v1477 = vadd.f32 %v1445, 0.0
      %v1478 = vadd.f32 %v1446, 0.0
      %v1479 = vadd.f32 %v1447, 0.0
      %v1480 = vadd.f32 %v1448, 0.0
      %v1481 = vadd.f32 %v1449, 0.0
      %v1482 = vadd.f32 %v1450, 0.0
      %v1483 = vadd.f32 %v1451, 0.0
      %v1484 = vadd.f32 %v1452, 0.0
      %v1485 = vadd.f32 %v1453, 0.0
      %v1486 = vadd.f32 %v1454, 0.0
      %v1487 = vld [vmem:[#allocation3 + $0x1] sm:$0xff]
      %v1488 = vld [vmem:[#allocation3 + $0x9] sm:$0xff]
      %v1489 = vld [vmem:[#allocation3 + $0x19] sm:$0xff]
      %v1490 = vld [vmem:[#allocation3 + $0x21] sm:$0xff]
      %v1491 = vld [vmem:[#allocation3 + $0x31] sm:$0xff]
      %v1492 = vld [vmem:[#allocation3 + $0x39] sm:$0xff]
      %v1493 = vld [vmem:[#allocation3 + $0x49] sm:$0xff]
      %v1494 = vld [vmem:[#allocation3 + $0x51] sm:$0xff]
      %v1495 = vld [vmem:[#allocation3 + $0x61] sm:$0xff]
      %v1496 = vld [vmem:[#allocation3 + $0x69] sm:$0xff]
      %v1497 = vld [vmem:[#allocation3 + $0x79] sm:$0xff]
      %v1498 = vld [vmem:[#allocation3 + $0x81] sm:$0xff]
      %v1499 = vld [vmem:[#allocation3 + $0x91] sm:$0xff]
      %v1500 = vld [vmem:[#allocation3 + $0x99] sm:$0xff]
      %v1501 = vld [vmem:[#allocation3 + $0xa9] sm:$0xff]
      %v1502 = vld [vmem:[#allocation3 + $0xb1] sm:$0xff]
      %v1503 = vld [vmem:[#allocation3 + $0xc1] sm:$0xff]
      %v1504 = vld [vmem:[#allocation3 + $0xc9] sm:$0xff]
      %v1505 = vld [vmem:[#allocation3 + $0xd9] sm:$0xff]
      %v1506 = vld [vmem:[#allocation3 + $0xe1] sm:$0xff]
      %v1507 = vld [vmem:[#allocation3 + $0xf1] sm:$0xff]
      %v1508 = vld [vmem:[#allocation3 + $0xf9] sm:$0xff]
      %v1509 = vld [vmem:[#allocation3 + $0x109] sm:$0xff]
      %v1510 = vld [vmem:[#allocation3 + $0x111] sm:$0xff]
      %v1511 = vld [vmem:[#allocation3 + $0x121] sm:$0xff]
      %v1512 = vld [vmem:[#allocation3 + $0x129] sm:$0xff]
      %v1513 = vld [vmem:[#allocation3 + $0x139] sm:$0xff]
      %v1514 = vld [vmem:[#allocation3 + $0x141] sm:$0xff]
      %v1515 = vld [vmem:[#allocation3 + $0x151] sm:$0xff]
      %v1516 = vld [vmem:[#allocation3 + $0x159] sm:$0xff]
      %v1517 = vld [vmem:[#allocation3 + $0x169] sm:$0xff]
      %v1518 = vld [vmem:[#allocation3 + $0x171] sm:$0xff]
      %v1519 = vld [vmem:[%s3 + $0x1] sm:$0x1]
      %v1520 = vlaneseq
      %v1521 = vshrl.u32 %v1520, 7
      %v1522 = vsub.s32 0, %v1521
      %v1523 = vrot.slane %v1519, %v1522
      %v1524 = vmul.f32 %v1487, %v1523
      %v1525 = vmul.f32 %v1488, %v1523
      %v1526 = vmul.f32 %v1489, %v1523
      %v1527 = vmul.f32 %v1490, %v1523
      %v1528 = vmul.f32 %v1491, %v1523
      %v1529 = vmul.f32 %v1492, %v1523
      %v1530 = vmul.f32 %v1493, %v1523
      %v1531 = vmul.f32 %v1494, %v1523
      %v1532 = vmul.f32 %v1495, %v1523
      %v1533 = vmul.f32 %v1496, %v1523
      %v1534 = vmul.f32 %v1497, %v1523
      %v1535 = vmul.f32 %v1498, %v1523
      %v1536 = vmul.f32 %v1499, %v1523
      %v1537 = vmul.f32 %v1500, %v1523
      %v1538 = vmul.f32 %v1501, %v1523
      %v1539 = vmul.f32 %v1502, %v1523
      %v1540 = vmul.f32 %v1503, %v1523
      %v1541 = vmul.f32 %v1504, %v1523
      %v1542 = vmul.f32 %v1505, %v1523
      %v1543 = vmul.f32 %v1506, %v1523
      %v1544 = vmul.f32 %v1507, %v1523
      %v1545 = vmul.f32 %v1508, %v1523
      %v1546 = vmul.f32 %v1509, %v1523
      %v1547 = vmul.f32 %v1510, %v1523
      %v1548 = vmul.f32 %v1511, %v1523
      %v1549 = vmul.f32 %v1512, %v1523
      %v1550 = vmul.f32 %v1513, %v1523
      %v1551 = vmul.f32 %v1514, %v1523
      %v1552 = vmul.f32 %v1515, %v1523
      %v1553 = vmul.f32 %v1516, %v1523
      %v1554 = vmul.f32 %v1517, %v1523
      %v1555 = vmul.f32 %v1518, %v1523
      %v1556 = vadd.f32 %v1455, %v1524
      %v1557 = vadd.f32 %v1456, %v1525
      %v1558 = vadd.f32 %v1457, %v1526
      %v1559 = vadd.f32 %v1458, %v1527
      %v1560 = vadd.f32 %v1459, %v1528
      %v1561 = vadd.f32 %v1460, %v1529
      %v1562 = vadd.f32 %v1461, %v1530
      %v1563 = vadd.f32 %v1462, %v1531
      %v1564 = vadd.f32 %v1463, %v1532
      %v1565 = vadd.f32 %v1464, %v1533
      %v1566 = vadd.f32 %v1465, %v1534
      %v1567 = vadd.f32 %v1466, %v1535
      %v1568 = vadd.f32 %v1467, %v1536
      %v1569 = vadd.f32 %v1468, %v1537
      %v1570 = vadd.f32 %v1469, %v1538
      %v1571 = vadd.f32 %v1470, %v1539
      %v1572 = vadd.f32 %v1471, %v1540
      %v1573 = vadd.f32 %v1472, %v1541
      %v1574 = vadd.f32 %v1473, %v1542
      %v1575 = vadd.f32 %v1474, %v1543
      %v1576 = vadd.f32 %v1475, %v1544
      %v1577 = vadd.f32 %v1476, %v1545
      %v1578 = vadd.f32 %v1477, %v1546
      %v1579 = vadd.f32 %v1478, %v1547
      %v1580 = vadd.f32 %v1479, %v1548
      %v1581 = vadd.f32 %v1480, %v1549
      %v1582 = vadd.f32 %v1481, %v1550
      %v1583 = vadd.f32 %v1482, %v1551
      %v1584 = vadd.f32 %v1483, %v1552
      %v1585 = vadd.f32 %v1484, %v1553
      %v1586 = vadd.f32 %v1485, %v1554
      %v1587 = vadd.f32 %v1486, %v1555
      %v1588 = vld [vmem:[#allocation3 + $0x2] sm:$0xff]
      %v1589 = vld [vmem:[#allocation3 + $0xa] sm:$0xff]
      %v1590 = vld [vmem:[#allocation3 + $0x1a] sm:$0xff]
      %v1591 = vld [vmem:[#allocation3 + $0x22] sm:$0xff]
      %v1592 = vld [vmem:[#allocation3 + $0x32] sm:$0xff]
      %v1593 = vld [vmem:[#allocation3 + $0x3a] sm:$0xff]
      %v1594 = vld [vmem:[#allocation3 + $0x4a] sm:$0xff]
      %v1595 = vld [vmem:[#allocation3 + $0x52] sm:$0xff]
      %v1596 = vld [vmem:[#allocation3 + $0x62] sm:$0xff]
      %v1597 = vld [vmem:[#allocation3 + $0x6a] sm:$0xff]
      %v1598 = vld [vmem:[#allocation3 + $0x7a] sm:$0xff]
      %v1599 = vld [vmem:[#allocation3 + $0x82] sm:$0xff]
      %v1600 = vld [vmem:[#allocation3 + $0x92] sm:$0xff]
      %v1601 = vld [vmem:[#allocation3 + $0x9a] sm:$0xff]
      %v1602 = vld [vmem:[#allocation3 + $0xaa] sm:$0xff]
      %v1603 = vld [vmem:[#allocation3 + $0xb2] sm:$0xff]
      %v1604 = vld [vmem:[#allocation3 + $0xc2] sm:$0xff]
      %v1605 = vld [vmem:[#allocation3 + $0xca] sm:$0xff]
      %v1606 = vld [vmem:[#allocation3 + $0xda] sm:$0xff]
      %v1607 = vld [vmem:[#allocation3 + $0xe2] sm:$0xff]
      %v1608 = vld [vmem:[#allocation3 + $0xf2] sm:$0xff]
      %v1609 = vld [vmem:[#allocation3 + $0xfa] sm:$0xff]
      %v1610 = vld [vmem:[#allocation3 + $0x10a] sm:$0xff]
      %v1611 = vld [vmem:[#allocation3 + $0x112] sm:$0xff]
      %v1612 = vld [vmem:[#allocation3 + $0x122] sm:$0xff]
      %v1613 = vld [vmem:[#allocation3 + $0x12a] sm:$0xff]
      %v1614 = vld [vmem:[#allocation3 + $0x13a] sm:$0xff]
      %v1615 = vld [vmem:[#allocation3 + $0x142] sm:$0xff]
      %v1616 = vld [vmem:[#allocation3 + $0x152] sm:$0xff]
      %v1617 = vld [vmem:[#allocation3 + $0x15a] sm:$0xff]
      %v1618 = vld [vmem:[#allocation3 + $0x16a] sm:$0xff]
      %v1619 = vld [vmem:[#allocation3 + $0x172] sm:$0xff]
      %v1620 = vld [vmem:[%s3 + $0x2] sm:$0x1]
      %v1621 = vlaneseq
      %v1622 = vshrl.u32 %v1621, 7
      %v1623 = vsub.s32 0, %v1622
      %v1624 = vrot.slane %v1620, %v1623
      %v1625 = vmul.f32 %v1588, %v1624
      %v1626 = vmul.f32 %v1589, %v1624
      %v1627 = vmul.f32 %v1590, %v1624
      %v1628 = vmul.f32 %v1591, %v1624
      %v1629 = vmul.f32 %v1592, %v1624
      %v1630 = vmul.f32 %v1593, %v1624
      %v1631 = vmul.f32 %v1594, %v1624
      %v1632 = vmul.f32 %v1595, %v1624
      %v1633 = vmul.f32 %v1596, %v1624
      %v1634 = vmul.f32 %v1597, %v1624
      %v1635 = vmul.f32 %v1598, %v1624
      %v1636 = vmul.f32 %v1599, %v1624
      %v1637 = vmul.f32 %v1600, %v1624
      %v1638 = vmul.f32 %v1601, %v1624
      %v1639 = vmul.f32 %v1602, %v1624
      %v1640 = vmul.f32 %v1603, %v1624
      %v1641 = vmul.f32 %v1604, %v1624
      %v1642 = vmul.f32 %v1605, %v1624
      %v1643 = vmul.f32 %v1606, %v1624
      %v1644 = vmul.f32 %v1607, %v1624
      %v1645 = vmul.f32 %v1608, %v1624
      %v1646 = vmul.f32 %v1609, %v1624
      %v1647 = vmul.f32 %v1610, %v1624
      %v1648 = vmul.f32 %v1611, %v1624
      %v1649 = vmul.f32 %v1612, %v1624
      %v1650 = vmul.f32 %v1613, %v1624
      %v1651 = vmul.f32 %v1614, %v1624
      %v1652 = vmul.f32 %v1615, %v1624
      %v1653 = vmul.f32 %v1616, %v1624
      %v1654 = vmul.f32 %v1617, %v1624
      %v1655 = vmul.f32 %v1618, %v1624
      %v1656 = vmul.f32 %v1619, %v1624
      %v1657 = vadd.f32 %v1556, %v1625
      %v1658 = vadd.f32 %v1557, %v1626
      %v1659 = vadd.f32 %v1558, %v1627
      %v1660 = vadd.f32 %v1559, %v1628
      %v1661 = vadd.f32 %v1560, %v1629
      %v1662 = vadd.f32 %v1561, %v1630
      %v1663 = vadd.f32 %v1562, %v1631
      %v1664 = vadd.f32 %v1563, %v1632
      %v1665 = vadd.f32 %v1564, %v1633
      %v1666 = vadd.f32 %v1565, %v1634
      %v1667 = vadd.f32 %v1566, %v1635
      %v1668 = vadd.f32 %v1567, %v1636
      %v1669 = vadd.f32 %v1568, %v1637
      %v1670 = vadd.f32 %v1569, %v1638
      %v1671 = vadd.f32 %v1570, %v1639
      %v1672 = vadd.f32 %v1571, %v1640
      %v1673 = vadd.f32 %v1572, %v1641
      %v1674 = vadd.f32 %v1573, %v1642
      %v1675 = vadd.f32 %v1574, %v1643
      %v1676 = vadd.f32 %v1575, %v1644
      %v1677 = vadd.f32 %v1576, %v1645
      %v1678 = vadd.f32 %v1577, %v1646
      %v1679 = vadd.f32 %v1578, %v1647
      %v1680 = vadd.f32 %v1579, %v1648
      %v1681 = vadd.f32 %v1580, %v1649
      %v1682 = vadd.f32 %v1581, %v1650
      %v1683 = vadd.f32 %v1582, %v1651
      %v1684 = vadd.f32 %v1583, %v1652
      %v1685 = vadd.f32 %v1584, %v1653
      %v1686 = vadd.f32 %v1585, %v1654
      %v1687 = vadd.f32 %v1586, %v1655
      %v1688 = vadd.f32 %v1587, %v1656
      %s1689 = scalar_lea.vmem [#allocation3], 24
      %v1690 = vld [vmem:[%s1689] sm:$0xff]
      %v1691 = vld [vmem:[%s1689 + $0x8] sm:$0xff]
      %v1692 = vld [vmem:[%s1689 + $0x18] sm:$0xff]
      %v1693 = vld [vmem:[%s1689 + $0x20] sm:$0xff]
      %v1694 = vld [vmem:[%s1689 + $0x30] sm:$0xff]
      %v1695 = vld [vmem:[%s1689 + $0x38] sm:$0xff]
      %v1696 = vld [vmem:[%s1689 + $0x48] sm:$0xff]
      %v1697 = vld [vmem:[%s1689 + $0x50] sm:$0xff]
      %v1698 = vld [vmem:[%s1689 + $0x60] sm:$0xff]
      %v1699 = vld [vmem:[%s1689 + $0x68] sm:$0xff]
      %v1700 = vld [vmem:[%s1689 + $0x78] sm:$0xff]
      %v1701 = vld [vmem:[%s1689 + $0x80] sm:$0xff]
      %v1702 = vld [vmem:[%s1689 + $0x90] sm:$0xff]
      %v1703 = vld [vmem:[%s1689 + $0x98] sm:$0xff]
      %v1704 = vld [vmem:[%s1689 + $0xa8] sm:$0xff]
      %v1705 = vld [vmem:[%s1689 + $0xb0] sm:$0xff]
      %v1706 = vld [vmem:[%s1689 + $0xc0] sm:$0xff]
      %v1707 = vld [vmem:[%s1689 + $0xc8] sm:$0xff]
      %v1708 = vld [vmem:[%s1689 + $0xd8] sm:$0xff]
      %v1709 = vld [vmem:[%s1689 + $0xe0] sm:$0xff]
      %v1710 = vld [vmem:[%s1689 + $0xf0] sm:$0xff]
      %v1711 = vld [vmem:[%s1689 + $0xf8] sm:$0xff]
      %v1712 = vld [vmem:[%s1689 + $0x108] sm:$0xff]
      %v1713 = vld [vmem:[%s1689 + $0x110] sm:$0xff]
      %v1714 = vld [vmem:[%s1689 + $0x120] sm:$0xff]
      %v1715 = vld [vmem:[%s1689 + $0x128] sm:$0xff]
      %v1716 = vld [vmem:[%s1689 + $0x138] sm:$0xff]
      %v1717 = vld [vmem:[%s1689 + $0x140] sm:$0xff]
      %v1718 = vld [vmem:[%s1689 + $0x150] sm:$0xff]
      %v1719 = vld [vmem:[%s1689 + $0x158] sm:$0xff]
      %v1720 = vld [vmem:[%s1689 + $0x168] sm:$0xff]
      %v1721 = vld [vmem:[%s1689 + $0x170] sm:$0xff]
      %v1722 = vld [vmem:[%s3 + $0x3] sm:$0x1]
      %v1723 = vlaneseq
      %v1724 = vshrl.u32 %v1723, 7
      %v1725 = vsub.s32 0, %v1724
      %v1726 = vrot.slane %v1722, %v1725
      %v1727 = vmul.f32 %v1690, %v1726
      %v1728 = vmul.f32 %v1691, %v1726
      %v1729 = vmul.f32 %v1692, %v1726
      %v1730 = vmul.f32 %v1693, %v1726
      %v1731 = vmul.f32 %v1694, %v1726
      %v1732 = vmul.f32 %v1695, %v1726
      %v1733 = vmul.f32 %v1696, %v1726
      %v1734 = vmul.f32 %v1697, %v1726
      %v1735 = vmul.f32 %v1698, %v1726
      %v1736 = vmul.f32 %v1699, %v1726
      %v1737 = vmul.f32 %v1700, %v1726
      %v1738 = vmul.f32 %v1701, %v1726
      %v1739 = vmul.f32 %v1702, %v1726
      %v1740 = vmul.f32 %v1703, %v1726
      %v1741 = vmul.f32 %v1704, %v1726
      %v1742 = vmul.f32 %v1705, %v1726
      %v1743 = vmul.f32 %v1706, %v1726
      %v1744 = vmul.f32 %v1707, %v1726
      %v1745 = vmul.f32 %v1708, %v1726
      %v1746 = vmul.f32 %v1709, %v1726
      %v1747 = vmul.f32 %v1710, %v1726
      %v1748 = vmul.f32 %v1711, %v1726
      %v1749 = vmul.f32 %v1712, %v1726
      %v1750 = vmul.f32 %v1713, %v1726
      %v1751 = vmul.f32 %v1714, %v1726
      %v1752 = vmul.f32 %v1715, %v1726
      %v1753 = vmul.f32 %v1716, %v1726
      %v1754 = vmul.f32 %v1717, %v1726
      %v1755 = vmul.f32 %v1718, %v1726
      %v1756 = vmul.f32 %v1719, %v1726
      %v1757 = vmul.f32 %v1720, %v1726
      %v1758 = vmul.f32 %v1721, %v1726
      %v1759 = vadd.f32 %v1657, %v1727
      %v1760 = vadd.f32 %v1658, %v1728
      %v1761 = vadd.f32 %v1659, %v1729
      %v1762 = vadd.f32 %v1660, %v1730
      %v1763 = vadd.f32 %v1661, %v1731
      %v1764 = vadd.f32 %v1662, %v1732
      %v1765 = vadd.f32 %v1663, %v1733
      %v1766 = vadd.f32 %v1664, %v1734
      %v1767 = vadd.f32 %v1665, %v1735
      %v1768 = vadd.f32 %v1666, %v1736
      %v1769 = vadd.f32 %v1667, %v1737
      %v1770 = vadd.f32 %v1668, %v1738
      %v1771 = vadd.f32 %v1669, %v1739
      %v1772 = vadd.f32 %v1670, %v1740
      %v1773 = vadd.f32 %v1671, %v1741
      %v1774 = vadd.f32 %v1672, %v1742
      %v1775 = vadd.f32 %v1673, %v1743
      %v1776 = vadd.f32 %v1674, %v1744
      %v1777 = vadd.f32 %v1675, %v1745
      %v1778 = vadd.f32 %v1676, %v1746
      %v1779 = vadd.f32 %v1677, %v1747
      %v1780 = vadd.f32 %v1678, %v1748
      %v1781 = vadd.f32 %v1679, %v1749
      %v1782 = vadd.f32 %v1680, %v1750
      %v1783 = vadd.f32 %v1681, %v1751
      %v1784 = vadd.f32 %v1682, %v1752
      %v1785 = vadd.f32 %v1683, %v1753
      %v1786 = vadd.f32 %v1684, %v1754
      %v1787 = vadd.f32 %v1685, %v1755
      %v1788 = vadd.f32 %v1686, %v1756
      %v1789 = vadd.f32 %v1687, %v1757
      %v1790 = vadd.f32 %v1688, %v1758
      %v1791 = vld [vmem:[%s1689 + $0x1] sm:$0xff]
      %v1792 = vld [vmem:[%s1689 + $0x9] sm:$0xff]
      %v1793 = vld [vmem:[%s1689 + $0x19] sm:$0xff]
      %v1794 = vld [vmem:[%s1689 + $0x21] sm:$0xff]
      %v1795 = vld [vmem:[%s1689 + $0x31] sm:$0xff]
      %v1796 = vld [vmem:[%s1689 + $0x39] sm:$0xff]
      %v1797 = vld [vmem:[%s1689 + $0x49] sm:$0xff]
      %v1798 = vld [vmem:[%s1689 + $0x51] sm:$0xff]
      %v1799 = vld [vmem:[%s1689 + $0x61] sm:$0xff]
      %v1800 = vld [vmem:[%s1689 + $0x69] sm:$0xff]
      %v1801 = vld [vmem:[%s1689 + $0x79] sm:$0xff]
      %v1802 = vld [vmem:[%s1689 + $0x81] sm:$0xff]
      %v1803 = vld [vmem:[%s1689 + $0x91] sm:$0xff]
      %v1804 = vld [vmem:[%s1689 + $0x99] sm:$0xff]
      %v1805 = vld [vmem:[%s1689 + $0xa9] sm:$0xff]
      %v1806 = vld [vmem:[%s1689 + $0xb1] sm:$0xff]
      %v1807 = vld [vmem:[%s1689 + $0xc1] sm:$0xff]
      %v1808 = vld [vmem:[%s1689 + $0xc9] sm:$0xff]
      %v1809 = vld [vmem:[%s1689 + $0xd9] sm:$0xff]
      %v1810 = vld [vmem:[%s1689 + $0xe1] sm:$0xff]
      %v1811 = vld [vmem:[%s1689 + $0xf1] sm:$0xff]
      %v1812 = vld [vmem:[%s1689 + $0xf9] sm:$0xff]
      %v1813 = vld [vmem:[%s1689 + $0x109] sm:$0xff]
      %v1814 = vld [vmem:[%s1689 + $0x111] sm:$0xff]
      %v1815 = vld [vmem:[%s1689 + $0x121] sm:$0xff]
      %v1816 = vld [vmem:[%s1689 + $0x129] sm:$0xff]
      %v1817 = vld [vmem:[%s1689 + $0x139] sm:$0xff]
      %v1818 = vld [vmem:[%s1689 + $0x141] sm:$0xff]
      %v1819 = vld [vmem:[%s1689 + $0x151] sm:$0xff]
      %v1820 = vld [vmem:[%s1689 + $0x159] sm:$0xff]
      %v1821 = vld [vmem:[%s1689 + $0x169] sm:$0xff]
      %v1822 = vld [vmem:[%s1689 + $0x171] sm:$0xff]
      %v1823 = vld [vmem:[%s3 + $0x4] sm:$0x1]
      %v1824 = vlaneseq
      %v1825 = vshrl.u32 %v1824, 7
      %v1826 = vsub.s32 0, %v1825
      %v1827 = vrot.slane %v1823, %v1826
      %v1828 = vmul.f32 %v1791, %v1827
      %v1829 = vmul.f32 %v1792, %v1827
      %v1830 = vmul.f32 %v1793, %v1827
      %v1831 = vmul.f32 %v1794, %v1827
      %v1832 = vmul.f32 %v1795, %v1827
      %v1833 = vmul.f32 %v1796, %v1827
      %v1834 = vmul.f32 %v1797, %v1827
      %v1835 = vmul.f32 %v1798, %v1827
      %v1836 = vmul.f32 %v1799, %v1827
      %v1837 = vmul.f32 %v1800, %v1827
      %v1838 = vmul.f32 %v1801, %v1827
      %v1839 = vmul.f32 %v1802, %v1827
      %v1840 = vmul.f32 %v1803, %v1827
      %v1841 = vmul.f32 %v1804, %v1827
      %v1842 = vmul.f32 %v1805, %v1827
      %v1843 = vmul.f32 %v1806, %v1827
      %v1844 = vmul.f32 %v1807, %v1827
      %v1845 = vmul.f32 %v1808, %v1827
      %v1846 = vmul.f32 %v1809, %v1827
      %v1847 = vmul.f32 %v1810, %v1827
      %v1848 = vmul.f32 %v1811, %v1827
      %v1849 = vmul.f32 %v1812, %v1827
      %v1850 = vmul.f32 %v1813, %v1827
      %v1851 = vmul.f32 %v1814, %v1827
      %v1852 = vmul.f32 %v1815, %v1827
      %v1853 = vmul.f32 %v1816, %v1827
      %v1854 = vmul.f32 %v1817, %v1827
      %v1855 = vmul.f32 %v1818, %v1827
      %v1856 = vmul.f32 %v1819, %v1827
      %v1857 = vmul.f32 %v1820, %v1827
      %v1858 = vmul.f32 %v1821, %v1827
      %v1859 = vmul.f32 %v1822, %v1827
      %v1860 = vadd.f32 %v1759, %v1828
      %v1861 = vadd.f32 %v1760, %v1829
      %v1862 = vadd.f32 %v1761, %v1830
      %v1863 = vadd.f32 %v1762, %v1831
      %v1864 = vadd.f32 %v1763, %v1832
      %v1865 = vadd.f32 %v1764, %v1833
      %v1866 = vadd.f32 %v1765, %v1834
      %v1867 = vadd.f32 %v1766, %v1835
      %v1868 = vadd.f32 %v1767, %v1836
      %v1869 = vadd.f32 %v1768, %v1837
      %v1870 = vadd.f32 %v1769, %v1838
      %v1871 = vadd.f32 %v1770, %v1839
      %v1872 = vadd.f32 %v1771, %v1840
      %v1873 = vadd.f32 %v1772, %v1841
      %v1874 = vadd.f32 %v1773, %v1842
      %v1875 = vadd.f32 %v1774, %v1843
      %v1876 = vadd.f32 %v1775, %v1844
      %v1877 = vadd.f32 %v1776, %v1845
      %v1878 = vadd.f32 %v1777, %v1846
      %v1879 = vadd.f32 %v1778, %v1847
      %v1880 = vadd.f32 %v1779, %v1848
      %v1881 = vadd.f32 %v1780, %v1849
      %v1882 = vadd.f32 %v1781, %v1850
      %v1883 = vadd.f32 %v1782, %v1851
      %v1884 = vadd.f32 %v1783, %v1852
      %v1885 = vadd.f32 %v1784, %v1853
      %v1886 = vadd.f32 %v1785, %v1854
      %v1887 = vadd.f32 %v1786, %v1855
      %v1888 = vadd.f32 %v1787, %v1856
      %v1889 = vadd.f32 %v1788, %v1857
      %v1890 = vadd.f32 %v1789, %v1858
      %v1891 = vadd.f32 %v1790, %v1859
      %v1892 = vld [vmem:[%s1689 + $0x2] sm:$0xff]
      %v1893 = vld [vmem:[%s1689 + $0xa] sm:$0xff]
      %v1894 = vld [vmem:[%s1689 + $0x1a] sm:$0xff]
      %v1895 = vld [vmem:[%s1689 + $0x22] sm:$0xff]
      %v1896 = vld [vmem:[%s1689 + $0x32] sm:$0xff]
      %v1897 = vld [vmem:[%s1689 + $0x3a] sm:$0xff]
      %v1898 = vld [vmem:[%s1689 + $0x4a] sm:$0xff]
      %v1899 = vld [vmem:[%s1689 + $0x52] sm:$0xff]
      %v1900 = vld [vmem:[%s1689 + $0x62] sm:$0xff]
      %v1901 = vld [vmem:[%s1689 + $0x6a] sm:$0xff]
      %v1902 = vld [vmem:[%s1689 + $0x7a] sm:$0xff]
      %v1903 = vld [vmem:[%s1689 + $0x82] sm:$0xff]
      %v1904 = vld [vmem:[%s1689 + $0x92] sm:$0xff]
      %v1905 = vld [vmem:[%s1689 + $0x9a] sm:$0xff]
      %v1906 = vld [vmem:[%s1689 + $0xaa] sm:$0xff]
      %v1907 = vld [vmem:[%s1689 + $0xb2] sm:$0xff]
      %v1908 = vld [vmem:[%s1689 + $0xc2] sm:$0xff]
      %v1909 = vld [vmem:[%s1689 + $0xca] sm:$0xff]
      %v1910 = vld [vmem:[%s1689 + $0xda] sm:$0xff]
      %v1911 = vld [vmem:[%s1689 + $0xe2] sm:$0xff]
      %v1912 = vld [vmem:[%s1689 + $0xf2] sm:$0xff]
      %v1913 = vld [vmem:[%s1689 + $0xfa] sm:$0xff]
      %v1914 = vld [vmem:[%s1689 + $0x10a] sm:$0xff]
      %v1915 = vld [vmem:[%s1689 + $0x112] sm:$0xff]
      %v1916 = vld [vmem:[%s1689 + $0x122] sm:$0xff]
      %v1917 = vld [vmem:[%s1689 + $0x12a] sm:$0xff]
      %v1918 = vld [vmem:[%s1689 + $0x13a] sm:$0xff]
      %v1919 = vld [vmem:[%s1689 + $0x142] sm:$0xff]
      %v1920 = vld [vmem:[%s1689 + $0x152] sm:$0xff]
      %v1921 = vld [vmem:[%s1689 + $0x15a] sm:$0xff]
      %v1922 = vld [vmem:[%s1689 + $0x16a] sm:$0xff]
      %v1923 = vld [vmem:[%s1689 + $0x172] sm:$0xff]
      %v1924 = vld [vmem:[%s3 + $0x5] sm:$0x1]
      %v1925 = vlaneseq
      %v1926 = vshrl.u32 %v1925, 7
      %v1927 = vsub.s32 0, %v1926
      %v1928 = vrot.slane %v1924, %v1927
      %v1929 = vmul.f32 %v1892, %v1928
      %v1930 = vmul.f32 %v1893, %v1928
      %v1931 = vmul.f32 %v1894, %v1928
      %v1932 = vmul.f32 %v1895, %v1928
      %v1933 = vmul.f32 %v1896, %v1928
      %v1934 = vmul.f32 %v1897, %v1928
      %v1935 = vmul.f32 %v1898, %v1928
      %v1936 = vmul.f32 %v1899, %v1928
      %v1937 = vmul.f32 %v1900, %v1928
      %v1938 = vmul.f32 %v1901, %v1928
      %v1939 = vmul.f32 %v1902, %v1928
      %v1940 = vmul.f32 %v1903, %v1928
      %v1941 = vmul.f32 %v1904, %v1928
      %v1942 = vmul.f32 %v1905, %v1928
      %v1943 = vmul.f32 %v1906, %v1928
      %v1944 = vmul.f32 %v1907, %v1928
      %v1945 = vmul.f32 %v1908, %v1928
      %v1946 = vmul.f32 %v1909, %v1928
      %v1947 = vmul.f32 %v1910, %v1928
      %v1948 = vmul.f32 %v1911, %v1928
      %v1949 = vmul.f32 %v1912, %v1928
      %v1950 = vmul.f32 %v1913, %v1928
      %v1951 = vmul.f32 %v1914, %v1928
      %v1952 = vmul.f32 %v1915, %v1928
      %v1953 = vmul.f32 %v1916, %v1928
      %v1954 = vmul.f32 %v1917, %v1928
      %v1955 = vmul.f32 %v1918, %v1928
      %v1956 = vmul.f32 %v1919, %v1928
      %v1957 = vmul.f32 %v1920, %v1928
      %v1958 = vmul.f32 %v1921, %v1928
      %v1959 = vmul.f32 %v1922, %v1928
      %v1960 = vmul.f32 %v1923, %v1928
      %v1961 = vadd.f32 %v1860, %v1929
      %v1962 = vadd.f32 %v1861, %v1930
      %v1963 = vadd.f32 %v1862, %v1931
      %v1964 = vadd.f32 %v1863, %v1932
      %v1965 = vadd.f32 %v1864, %v1933
      %v1966 = vadd.f32 %v1865, %v1934
      %v1967 = vadd.f32 %v1866, %v1935
      %v1968 = vadd.f32 %v1867, %v1936
      %v1969 = vadd.f32 %v1868, %v1937
      %v1970 = vadd.f32 %v1869, %v1938
      %v1971 = vadd.f32 %v1870, %v1939
      %v1972 = vadd.f32 %v1871, %v1940
      %v1973 = vadd.f32 %v1872, %v1941
      %v1974 = vadd.f32 %v1873, %v1942
      %v1975 = vadd.f32 %v1874, %v1943
      %v1976 = vadd.f32 %v1875, %v1944
      %v1977 = vadd.f32 %v1876, %v1945
      %v1978 = vadd.f32 %v1877, %v1946
      %v1979 = vadd.f32 %v1878, %v1947
      %v1980 = vadd.f32 %v1879, %v1948
      %v1981 = vadd.f32 %v1880, %v1949
      %v1982 = vadd.f32 %v1881, %v1950
      %v1983 = vadd.f32 %v1882, %v1951
      %v1984 = vadd.f32 %v1883, %v1952
      %v1985 = vadd.f32 %v1884, %v1953
      %v1986 = vadd.f32 %v1885, %v1954
      %v1987 = vadd.f32 %v1886, %v1955
      %v1988 = vadd.f32 %v1887, %v1956
      %v1989 = vadd.f32 %v1888, %v1957
      %v1990 = vadd.f32 %v1889, %v1958
      %v1991 = vadd.f32 %v1890, %v1959
      %v1992 = vadd.f32 %v1891, %v1960
      %s1993 = scalar_lea.vmem [#allocation3], 48
      %v1994 = vld [vmem:[%s1993] sm:$0xff]
      %v1995 = vld [vmem:[%s1993 + $0x8] sm:$0xff]
      %v1996 = vld [vmem:[%s1993 + $0x18] sm:$0xff]
      %v1997 = vld [vmem:[%s1993 + $0x20] sm:$0xff]
      %v1998 = vld [vmem:[%s1993 + $0x30] sm:$0xff]
      %v1999 = vld [vmem:[%s1993 + $0x38] sm:$0xff]
      %v2000 = vld [vmem:[%s1993 + $0x48] sm:$0xff]
      %v2001 = vld [vmem:[%s1993 + $0x50] sm:$0xff]
      %v2002 = vld [vmem:[%s1993 + $0x60] sm:$0xff]
      %v2003 = vld [vmem:[%s1993 + $0x68] sm:$0xff]
      %v2004 = vld [vmem:[%s1993 + $0x78] sm:$0xff]
      %v2005 = vld [vmem:[%s1993 + $0x80] sm:$0xff]
      %v2006 = vld [vmem:[%s1993 + $0x90] sm:$0xff]
      %v2007 = vld [vmem:[%s1993 + $0x98] sm:$0xff]
      %v2008 = vld [vmem:[%s1993 + $0xa8] sm:$0xff]
      %v2009 = vld [vmem:[%s1993 + $0xb0] sm:$0xff]
      %v2010 = vld [vmem:[%s1993 + $0xc0] sm:$0xff]
      %v2011 = vld [vmem:[%s1993 + $0xc8] sm:$0xff]
      %v2012 = vld [vmem:[%s1993 + $0xd8] sm:$0xff]
      %v2013 = vld [vmem:[%s1993 + $0xe0] sm:$0xff]
      %v2014 = vld [vmem:[%s1993 + $0xf0] sm:$0xff]
      %v2015 = vld [vmem:[%s1993 + $0xf8] sm:$0xff]
      %v2016 = vld [vmem:[%s1993 + $0x108] sm:$0xff]
      %v2017 = vld [vmem:[%s1993 + $0x110] sm:$0xff]
      %v2018 = vld [vmem:[%s1993 + $0x120] sm:$0xff]
      %v2019 = vld [vmem:[%s1993 + $0x128] sm:$0xff]
      %v2020 = vld [vmem:[%s1993 + $0x138] sm:$0xff]
      %v2021 = vld [vmem:[%s1993 + $0x140] sm:$0xff]
      %v2022 = vld [vmem:[%s1993 + $0x150] sm:$0xff]
      %v2023 = vld [vmem:[%s1993 + $0x158] sm:$0xff]
      %v2024 = vld [vmem:[%s1993 + $0x168] sm:$0xff]
      %v2025 = vld [vmem:[%s1993 + $0x170] sm:$0xff]
      %v2026 = vld [vmem:[%s3 + $0x6] sm:$0x1]
      %v2027 = vlaneseq
      %v2028 = vshrl.u32 %v2027, 7
      %v2029 = vsub.s32 0, %v2028
      %v2030 = vrot.slane %v2026, %v2029
      %v2031 = vmul.f32 %v1994, %v2030
      %v2032 = vmul.f32 %v1995, %v2030
      %v2033 = vmul.f32 %v1996, %v2030
      %v2034 = vmul.f32 %v1997, %v2030
      %v2035 = vmul.f32 %v1998, %v2030
      %v2036 = vmul.f32 %v1999, %v2030
      %v2037 = vmul.f32 %v2000, %v2030
      %v2038 = vmul.f32 %v2001, %v2030
      %v2039 = vmul.f32 %v2002, %v2030
      %v2040 = vmul.f32 %v2003, %v2030
      %v2041 = vmul.f32 %v2004, %v2030
      %v2042 = vmul.f32 %v2005, %v2030
      %v2043 = vmul.f32 %v2006, %v2030
      %v2044 = vmul.f32 %v2007, %v2030
      %v2045 = vmul.f32 %v2008, %v2030
      %v2046 = vmul.f32 %v2009, %v2030
      %v2047 = vmul.f32 %v2010, %v2030
      %v2048 = vmul.f32 %v2011, %v2030
      %v2049 = vmul.f32 %v2012, %v2030
      %v2050 = vmul.f32 %v2013, %v2030
      %v2051 = vmul.f32 %v2014, %v2030
      %v2052 = vmul.f32 %v2015, %v2030
      %v2053 = vmul.f32 %v2016, %v2030
      %v2054 = vmul.f32 %v2017, %v2030
      %v2055 = vmul.f32 %v2018, %v2030
      %v2056 = vmul.f32 %v2019, %v2030
      %v2057 = vmul.f32 %v2020, %v2030
      %v2058 = vmul.f32 %v2021, %v2030
      %v2059 = vmul.f32 %v2022, %v2030
      %v2060 = vmul.f32 %v2023, %v2030
      %v2061 = vmul.f32 %v2024, %v2030
      %v2062 = vmul.f32 %v2025, %v2030
      %v2063 = vadd.f32 %v1961, %v2031
      %v2064 = vadd.f32 %v1962, %v2032
      %v2065 = vadd.f32 %v1963, %v2033
      %v2066 = vadd.f32 %v1964, %v2034
      %v2067 = vadd.f32 %v1965, %v2035
      %v2068 = vadd.f32 %v1966, %v2036
      %v2069 = vadd.f32 %v1967, %v2037
      %v2070 = vadd.f32 %v1968, %v2038
      %v2071 = vadd.f32 %v1969, %v2039
      %v2072 = vadd.f32 %v1970, %v2040
      %v2073 = vadd.f32 %v1971, %v2041
      %v2074 = vadd.f32 %v1972, %v2042
      %v2075 = vadd.f32 %v1973, %v2043
      %v2076 = vadd.f32 %v1974, %v2044
      %v2077 = vadd.f32 %v1975, %v2045
      %v2078 = vadd.f32 %v1976, %v2046
      %v2079 = vadd.f32 %v1977, %v2047
      %v2080 = vadd.f32 %v1978, %v2048
      %v2081 = vadd.f32 %v1979, %v2049
      %v2082 = vadd.f32 %v1980, %v2050
      %v2083 = vadd.f32 %v1981, %v2051
      %v2084 = vadd.f32 %v1982, %v2052
      %v2085 = vadd.f32 %v1983, %v2053
      %v2086 = vadd.f32 %v1984, %v2054
      %v2087 = vadd.f32 %v1985, %v2055
      %v2088 = vadd.f32 %v1986, %v2056
      %v2089 = vadd.f32 %v1987, %v2057
      %v2090 = vadd.f32 %v1988, %v2058
      %v2091 = vadd.f32 %v1989, %v2059
      %v2092 = vadd.f32 %v1990, %v2060
      %v2093 = vadd.f32 %v1991, %v2061
      %v2094 = vadd.f32 %v1992, %v2062
      %v2095 = vld [vmem:[%s1993 + $0x1] sm:$0xff]
      %v2096 = vld [vmem:[%s1993 + $0x9] sm:$0xff]
      %v2097 = vld [vmem:[%s1993 + $0x19] sm:$0xff]
      %v2098 = vld [vmem:[%s1993 + $0x21] sm:$0xff]
      %v2099 = vld [vmem:[%s1993 + $0x31] sm:$0xff]
      %v2100 = vld [vmem:[%s1993 + $0x39] sm:$0xff]
      %v2101 = vld [vmem:[%s1993 + $0x49] sm:$0xff]
      %v2102 = vld [vmem:[%s1993 + $0x51] sm:$0xff]
      %v2103 = vld [vmem:[%s1993 + $0x61] sm:$0xff]
      %v2104 = vld [vmem:[%s1993 + $0x69] sm:$0xff]
      %v2105 = vld [vmem:[%s1993 + $0x79] sm:$0xff]
      %v2106 = vld [vmem:[%s1993 + $0x81] sm:$0xff]
      %v2107 = vld [vmem:[%s1993 + $0x91] sm:$0xff]
      %v2108 = vld [vmem:[%s1993 + $0x99] sm:$0xff]
      %v2109 = vld [vmem:[%s1993 + $0xa9] sm:$0xff]
      %v2110 = vld [vmem:[%s1993 + $0xb1] sm:$0xff]
      %v2111 = vld [vmem:[%s1993 + $0xc1] sm:$0xff]
      %v2112 = vld [vmem:[%s1993 + $0xc9] sm:$0xff]
      %v2113 = vld [vmem:[%s1993 + $0xd9] sm:$0xff]
      %v2114 = vld [vmem:[%s1993 + $0xe1] sm:$0xff]
      %v2115 = vld [vmem:[%s1993 + $0xf1] sm:$0xff]
      %v2116 = vld [vmem:[%s1993 + $0xf9] sm:$0xff]
      %v2117 = vld [vmem:[%s1993 + $0x109] sm:$0xff]
      %v2118 = vld [vmem:[%s1993 + $0x111] sm:$0xff]
      %v2119 = vld [vmem:[%s1993 + $0x121] sm:$0xff]
      %v2120 = vld [vmem:[%s1993 + $0x129] sm:$0xff]
      %v2121 = vld [vmem:[%s1993 + $0x139] sm:$0xff]
      %v2122 = vld [vmem:[%s1993 + $0x141] sm:$0xff]
      %v2123 = vld [vmem:[%s1993 + $0x151] sm:$0xff]
      %v2124 = vld [vmem:[%s1993 + $0x159] sm:$0xff]
      %v2125 = vld [vmem:[%s1993 + $0x169] sm:$0xff]
      %v2126 = vld [vmem:[%s1993 + $0x171] sm:$0xff]
      %v2127 = vld [vmem:[%s3 + $0x7] sm:$0x1]
      %v2128 = vlaneseq
      %v2129 = vshrl.u32 %v2128, 7
      %v2130 = vsub.s32 0, %v2129
      %v2131 = vrot.slane %v2127, %v2130
      %v2132 = vmul.f32 %v2095, %v2131
      %v2133 = vmul.f32 %v2096, %v2131
      %v2134 = vmul.f32 %v2097, %v2131
      %v2135 = vmul.f32 %v2098, %v2131
      %v2136 = vmul.f32 %v2099, %v2131
      %v2137 = vmul.f32 %v2100, %v2131
      %v2138 = vmul.f32 %v2101, %v2131
      %v2139 = vmul.f32 %v2102, %v2131
      %v2140 = vmul.f32 %v2103, %v2131
      %v2141 = vmul.f32 %v2104, %v2131
      %v2142 = vmul.f32 %v2105, %v2131
      %v2143 = vmul.f32 %v2106, %v2131
      %v2144 = vmul.f32 %v2107, %v2131
      %v2145 = vmul.f32 %v2108, %v2131
      %v2146 = vmul.f32 %v2109, %v2131
      %v2147 = vmul.f32 %v2110, %v2131
      %v2148 = vmul.f32 %v2111, %v2131
      %v2149 = vmul.f32 %v2112, %v2131
      %v2150 = vmul.f32 %v2113, %v2131
      %v2151 = vmul.f32 %v2114, %v2131
      %v2152 = vmul.f32 %v2115, %v2131
      %v2153 = vmul.f32 %v2116, %v2131
      %v2154 = vmul.f32 %v2117, %v2131
      %v2155 = vmul.f32 %v2118, %v2131
      %v2156 = vmul.f32 %v2119, %v2131
      %v2157 = vmul.f32 %v2120, %v2131
      %v2158 = vmul.f32 %v2121, %v2131
      %v2159 = vmul.f32 %v2122, %v2131
      %v2160 = vmul.f32 %v2123, %v2131
      %v2161 = vmul.f32 %v2124, %v2131
      %v2162 = vmul.f32 %v2125, %v2131
      %v2163 = vmul.f32 %v2126, %v2131
      %v2164 = vadd.f32 %v2063, %v2132
      %v2165 = vadd.f32 %v2064, %v2133
      %v2166 = vadd.f32 %v2065, %v2134
      %v2167 = vadd.f32 %v2066, %v2135
      %v2168 = vadd.f32 %v2067, %v2136
      %v2169 = vadd.f32 %v2068, %v2137
      %v2170 = vadd.f32 %v2069, %v2138
      %v2171 = vadd.f32 %v2070, %v2139
      %v2172 = vadd.f32 %v2071, %v2140
      %v2173 = vadd.f32 %v2072, %v2141
      %v2174 = vadd.f32 %v2073, %v2142
      %v2175 = vadd.f32 %v2074, %v2143
      %v2176 = vadd.f32 %v2075, %v2144
      %v2177 = vadd.f32 %v2076, %v2145
      %v2178 = vadd.f32 %v2077, %v2146
      %v2179 = vadd.f32 %v2078, %v2147
      %v2180 = vadd.f32 %v2079, %v2148
      %v2181 = vadd.f32 %v2080, %v2149
      %v2182 = vadd.f32 %v2081, %v2150
      %v2183 = vadd.f32 %v2082, %v2151
      %v2184 = vadd.f32 %v2083, %v2152
      %v2185 = vadd.f32 %v2084, %v2153
      %v2186 = vadd.f32 %v2085, %v2154
      %v2187 = vadd.f32 %v2086, %v2155
      %v2188 = vadd.f32 %v2087, %v2156
      %v2189 = vadd.f32 %v2088, %v2157
      %v2190 = vadd.f32 %v2089, %v2158
      %v2191 = vadd.f32 %v2090, %v2159
      %v2192 = vadd.f32 %v2091, %v2160
      %v2193 = vadd.f32 %v2092, %v2161
      %v2194 = vadd.f32 %v2093, %v2162
      %v2195 = vadd.f32 %v2094, %v2163
      %v2196 = vld [vmem:[%s1993 + $0x2] sm:$0xff]
      %v2197 = vld [vmem:[%s1993 + $0xa] sm:$0xff]
      %v2198 = vld [vmem:[%s1993 + $0x1a] sm:$0xff]
      %v2199 = vld [vmem:[%s1993 + $0x22] sm:$0xff]
      %v2200 = vld [vmem:[%s1993 + $0x32] sm:$0xff]
      %v2201 = vld [vmem:[%s1993 + $0x3a] sm:$0xff]
      %v2202 = vld [vmem:[%s1993 + $0x4a] sm:$0xff]
      %v2203 = vld [vmem:[%s1993 + $0x52] sm:$0xff]
      %v2204 = vld [vmem:[%s1993 + $0x62] sm:$0xff]
      %v2205 = vld [vmem:[%s1993 + $0x6a] sm:$0xff]
      %v2206 = vld [vmem:[%s1993 + $0x7a] sm:$0xff]
      %v2207 = vld [vmem:[%s1993 + $0x82] sm:$0xff]
      %v2208 = vld [vmem:[%s1993 + $0x92] sm:$0xff]
      %v2209 = vld [vmem:[%s1993 + $0x9a] sm:$0xff]
      %v2210 = vld [vmem:[%s1993 + $0xaa] sm:$0xff]
      %v2211 = vld [vmem:[%s1993 + $0xb2] sm:$0xff]
      %v2212 = vld [vmem:[%s1993 + $0xc2] sm:$0xff]
      %v2213 = vld [vmem:[%s1993 + $0xca] sm:$0xff]
      %v2214 = vld [vmem:[%s1993 + $0xda] sm:$0xff]
      %v2215 = vld [vmem:[%s1993 + $0xe2] sm:$0xff]
      %v2216 = vld [vmem:[%s1993 + $0xf2] sm:$0xff]
      %v2217 = vld [vmem:[%s1993 + $0xfa] sm:$0xff]
      %v2218 = vld [vmem:[%s1993 + $0x10a] sm:$0xff]
      %v2219 = vld [vmem:[%s1993 + $0x112] sm:$0xff]
      %v2220 = vld [vmem:[%s1993 + $0x122] sm:$0xff]
      %v2221 = vld [vmem:[%s1993 + $0x12a] sm:$0xff]
      %v2222 = vld [vmem:[%s1993 + $0x13a] sm:$0xff]
      %v2223 = vld [vmem:[%s1993 + $0x142] sm:$0xff]
      %v2224 = vld [vmem:[%s1993 + $0x152] sm:$0xff]
      %v2225 = vld [vmem:[%s1993 + $0x15a] sm:$0xff]
      %v2226 = vld [vmem:[%s1993 + $0x16a] sm:$0xff]
      %v2227 = vld [vmem:[%s1993 + $0x172] sm:$0xff]
      %v2228 = vld [vmem:[%s3 + $0x8] sm:$0x1]
      %v2229 = vlaneseq
      %v2230 = vshrl.u32 %v2229, 7
      %v2231 = vsub.s32 0, %v2230
      %v2232 = vrot.slane %v2228, %v2231
      %v2233 = vmul.f32 %v2196, %v2232
      %v2234 = vmul.f32 %v2197, %v2232
      %v2235 = vmul.f32 %v2198, %v2232
      %v2236 = vmul.f32 %v2199, %v2232
      %v2237 = vmul.f32 %v2200, %v2232
      %v2238 = vmul.f32 %v2201, %v2232
      %v2239 = vmul.f32 %v2202, %v2232
      %v2240 = vmul.f32 %v2203, %v2232
      %v2241 = vmul.f32 %v2204, %v2232
      %v2242 = vmul.f32 %v2205, %v2232
      %v2243 = vmul.f32 %v2206, %v2232
      %v2244 = vmul.f32 %v2207, %v2232
      %v2245 = vmul.f32 %v2208, %v2232
      %v2246 = vmul.f32 %v2209, %v2232
      %v2247 = vmul.f32 %v2210, %v2232
      %v2248 = vmul.f32 %v2211, %v2232
      %v2249 = vmul.f32 %v2212, %v2232
      %v2250 = vmul.f32 %v2213, %v2232
      %v2251 = vmul.f32 %v2214, %v2232
      %v2252 = vmul.f32 %v2215, %v2232
      %v2253 = vmul.f32 %v2216, %v2232
      %v2254 = vmul.f32 %v2217, %v2232
      %v2255 = vmul.f32 %v2218, %v2232
      %v2256 = vmul.f32 %v2219, %v2232
      %v2257 = vmul.f32 %v2220, %v2232
      %v2258 = vmul.f32 %v2221, %v2232
      %v2259 = vmul.f32 %v2222, %v2232
      %v2260 = vmul.f32 %v2223, %v2232
      %v2261 = vmul.f32 %v2224, %v2232
      %v2262 = vmul.f32 %v2225, %v2232
      %v2263 = vmul.f32 %v2226, %v2232
      %v2264 = vmul.f32 %v2227, %v2232
      %v2265 = vadd.f32 %v2164, %v2233
      %v2266 = vadd.f32 %v2165, %v2234
      %v2267 = vadd.f32 %v2166, %v2235
      %v2268 = vadd.f32 %v2167, %v2236
      %v2269 = vadd.f32 %v2168, %v2237
      %v2270 = vadd.f32 %v2169, %v2238
      %v2271 = vadd.f32 %v2170, %v2239
      %v2272 = vadd.f32 %v2171, %v2240
      %v2273 = vadd.f32 %v2172, %v2241
      %v2274 = vadd.f32 %v2173, %v2242
      %v2275 = vadd.f32 %v2174, %v2243
      %v2276 = vadd.f32 %v2175, %v2244
      %v2277 = vadd.f32 %v2176, %v2245
      %v2278 = vadd.f32 %v2177, %v2246
      %v2279 = vadd.f32 %v2178, %v2247
      %v2280 = vadd.f32 %v2179, %v2248
      %v2281 = vadd.f32 %v2180, %v2249
      %v2282 = vadd.f32 %v2181, %v2250
      %v2283 = vadd.f32 %v2182, %v2251
      %v2284 = vadd.f32 %v2183, %v2252
      %v2285 = vadd.f32 %v2184, %v2253
      %v2286 = vadd.f32 %v2185, %v2254
      %v2287 = vadd.f32 %v2186, %v2255
      %v2288 = vadd.f32 %v2187, %v2256
      %v2289 = vadd.f32 %v2188, %v2257
      %v2290 = vadd.f32 %v2189, %v2258
      %v2291 = vadd.f32 %v2190, %v2259
      %v2292 = vadd.f32 %v2191, %v2260
      %v2293 = vadd.f32 %v2192, %v2261
      %v2294 = vadd.f32 %v2193, %v2262
      %v2295 = vadd.f32 %v2194, %v2263
      %v2296 = vadd.f32 %v2195, %v2264
      %v2297 = vld [vmem:[%s4] sm:$0x1]
      %v2299 = vlaneseq
      %v2300 = vshrl.u32 %v2299, 7
      %v2301 = vsub.s32 0, %v2300
      %v2302 = vrot.slane %v2297, %v2301
      %v2304 = vadd.f32 %v2265, %v2302
      %v2305 = vadd.f32 %v2266, %v2302
      %v2306 = vadd.f32 %v2267, %v2302
      %v2307 = vadd.f32 %v2268, %v2302
      %v2308 = vadd.f32 %v2269, %v2302
      %v2309 = vadd.f32 %v2270, %v2302
      %v2310 = vadd.f32 %v2271, %v2302
      %v2311 = vadd.f32 %v2272, %v2302
      %v2312 = vadd.f32 %v2273, %v2302
      %v2313 = vadd.f32 %v2274, %v2302
      %v2314 = vadd.f32 %v2275, %v2302
      %v2315 = vadd.f32 %v2276, %v2302
      %v2316 = vadd.f32 %v2277, %v2302
      %v2317 = vadd.f32 %v2278, %v2302
      %v2318 = vadd.f32 %v2279, %v2302
      %v2319 = vadd.f32 %v2280, %v2302
      %v2320 = vadd.f32 %v2281, %v2302
      %v2321 = vadd.f32 %v2282, %v2302
      %v2322 = vadd.f32 %v2283, %v2302
      %v2323 = vadd.f32 %v2284, %v2302
      %v2324 = vadd.f32 %v2285, %v2302
      %v2325 = vadd.f32 %v2286, %v2302
      %v2326 = vadd.f32 %v2287, %v2302
      %v2327 = vadd.f32 %v2288, %v2302
      %v2328 = vadd.f32 %v2289, %v2302
      %v2329 = vadd.f32 %v2290, %v2302
      %v2330 = vadd.f32 %v2291, %v2302
      %v2331 = vadd.f32 %v2292, %v2302
      %v2332 = vadd.f32 %v2293, %v2302
      %v2333 = vadd.f32 %v2294, %v2302
      %v2334 = vadd.f32 %v2295, %v2302
      %v2335 = vadd.f32 %v2296, %v2302
      %v2336 = vmax.f32 %v2304, 0.0
      %v2337 = vmax.f32 %v2305, 0.0
      %v2338 = vmax.f32 %v2306, 0.0
      %v2339 = vmax.f32 %v2307, 0.0
      %v2340 = vmax.f32 %v2308, 0.0
      %v2341 = vmax.f32 %v2309, 0.0
      %v2342 = vmax.f32 %v2310, 0.0
      %v2343 = vmax.f32 %v2311, 0.0
      %v2344 = vmax.f32 %v2312, 0.0
      %v2345 = vmax.f32 %v2313, 0.0
      %v2346 = vmax.f32 %v2314, 0.0
      %v2347 = vmax.f32 %v2315, 0.0
      %v2348 = vmax.f32 %v2316, 0.0
      %v2349 = vmax.f32 %v2317, 0.0
      %v2350 = vmax.f32 %v2318, 0.0
      %v2351 = vmax.f32 %v2319, 0.0
      %v2352 = vmax.f32 %v2320, 0.0
      %v2353 = vmax.f32 %v2321, 0.0
      %v2354 = vmax.f32 %v2322, 0.0
      %v2355 = vmax.f32 %v2323, 0.0
      %v2356 = vmax.f32 %v2324, 0.0
      %v2357 = vmax.f32 %v2325, 0.0
      %v2358 = vmax.f32 %v2326, 0.0
      %v2359 = vmax.f32 %v2327, 0.0
      %v2360 = vmax.f32 %v2328, 0.0
      %v2361 = vmax.f32 %v2329, 0.0
      %v2362 = vmax.f32 %v2330, 0.0
      %v2363 = vmax.f32 %v2331, 0.0
      %v2364 = vmax.f32 %v2332, 0.0
      %v2365 = vmax.f32 %v2333, 0.0
      %v2366 = vmax.f32 %v2334, 0.0
      %v2367 = vmax.f32 %v2335, 0.0
      %v2368 = vmin.f32 %v2336, 6.0
      %v2369 = vmin.f32 %v2337, 6.0
      %v2370 = vmin.f32 %v2338, 6.0
      %v2371 = vmin.f32 %v2339, 6.0
      %v2372 = vmin.f32 %v2340, 6.0
      %v2373 = vmin.f32 %v2341, 6.0
      %v2374 = vmin.f32 %v2342, 6.0
      %v2375 = vmin.f32 %v2343, 6.0
      %v2376 = vmin.f32 %v2344, 6.0
      %v2377 = vmin.f32 %v2345, 6.0
      %v2378 = vmin.f32 %v2346, 6.0
      %v2379 = vmin.f32 %v2347, 6.0
      %v2380 = vmin.f32 %v2348, 6.0
      %v2381 = vmin.f32 %v2349, 6.0
      %v2382 = vmin.f32 %v2350, 6.0
      %v2383 = vmin.f32 %v2351, 6.0
      %v2384 = vmin.f32 %v2352, 6.0
      %v2385 = vmin.f32 %v2353, 6.0
      %v2386 = vmin.f32 %v2354, 6.0
      %v2387 = vmin.f32 %v2355, 6.0
      %v2388 = vmin.f32 %v2356, 6.0
      %v2389 = vmin.f32 %v2357, 6.0
      %v2390 = vmin.f32 %v2358, 6.0
      %v2391 = vmin.f32 %v2359, 6.0
      %v2392 = vmin.f32 %v2360, 6.0
      %v2393 = vmin.f32 %v2361, 6.0
      %v2394 = vmin.f32 %v2362, 6.0
      %v2395 = vmin.f32 %v2363, 6.0
      %v2396 = vmin.f32 %v2364, 6.0
      %v2397 = vmin.f32 %v2365, 6.0
      %v2398 = vmin.f32 %v2366, 6.0
      %v2399 = vmin.f32 %v2367, 6.0
      %v2400 = vpack.c.bf16 %v2369, %v2368
      %v2401 = vpack.c.bf16 %v2371, %v2370
      %v2402 = vpack.c.bf16 %v2373, %v2372
      %v2403 = vpack.c.bf16 %v2375, %v2374
      %v2404 = vpack.c.bf16 %v2377, %v2376
      %v2405 = vpack.c.bf16 %v2379, %v2378
      %v2406 = vpack.c.bf16 %v2381, %v2380
      %v2407 = vpack.c.bf16 %v2383, %v2382
      %v2408 = vpack.c.bf16 %v2385, %v2384
      %v2409 = vpack.c.bf16 %v2387, %v2386
      %v2410 = vpack.c.bf16 %v2389, %v2388
      %v2411 = vpack.c.bf16 %v2391, %v2390
      %v2412 = vpack.c.bf16 %v2393, %v2392
      %v2413 = vpack.c.bf16 %v2395, %v2394
      %v2414 = vpack.c.bf16 %v2397, %v2396
      %v2415 = vpack.c.bf16 %v2399, %v2398
      %v2416 = vld [vmem:[%s5] sm:$0xf]
      %v2417 = vld [vmem:[%s5 + $0x4] sm:$0xf]
      %v2418 = vld [vmem:[%s5 + $0x8] sm:$0xf]
      %v2419 = vld [vmem:[%s5 + $0xc] sm:$0xf]
      %v2420 = vld [vmem:[%s5 + $0x10] sm:$0xf]
      %v2421 = vld [vmem:[%s5 + $0x14] sm:$0xf]
      %v2422 = vld [vmem:[%s5 + $0x18] sm:$0xf]
      %v2423 = vld [vmem:[%s5 + $0x1c] sm:$0xf]
      %v2424 = vld [vmem:[%s5 + $0x20] sm:$0xf]
      %v2425 = vld [vmem:[%s5 + $0x24] sm:$0xf]
      %v2426 = vld [vmem:[%s5 + $0x28] sm:$0xf]
      %v2427 = vld [vmem:[%s5 + $0x2c] sm:$0xf]
      %v2428 = vld [vmem:[%s5 + $0x30] sm:$0xf]
      %v2429 = vld [vmem:[%s5 + $0x34] sm:$0xf]
      %v2430 = vld [vmem:[%s5 + $0x38] sm:$0xf]
      %v2431 = vld [vmem:[%s5 + $0x3c] sm:$0xf]
      %v2448 = vunpack.c.l.b16 %v2416
      %v2449 = vunpack.c.l.b16 %v2417
      %v2450 = vunpack.c.l.b16 %v2418
      %v2451 = vunpack.c.l.b16 %v2419
      %v2452 = vunpack.c.l.b16 %v2420
      %v2453 = vunpack.c.l.b16 %v2421
      %v2454 = vunpack.c.l.b16 %v2422
      %v2455 = vunpack.c.l.b16 %v2423
      %v2456 = vunpack.c.l.b16 %v2424
      %v2457 = vunpack.c.l.b16 %v2425
      %v2458 = vunpack.c.l.b16 %v2426
      %v2459 = vunpack.c.l.b16 %v2427
      %v2460 = vunpack.c.l.b16 %v2428
      %v2461 = vunpack.c.l.b16 %v2429
      %v2462 = vunpack.c.l.b16 %v2430
      %v2463 = vunpack.c.l.b16 %v2431
      %v2464 = vpack.c.b16 %v2449, %v2448
      %v2465 = vpack.c.b16 %v2451, %v2450
      %v2466 = vpack.c.b16 %v2453, %v2452
      %v2467 = vpack.c.b16 %v2455, %v2454
      %v2468 = vpack.c.b16 %v2457, %v2456
      %v2469 = vpack.c.b16 %v2459, %v2458
      %v2470 = vpack.c.b16 %v2461, %v2460
      %v2471 = vpack.c.b16 %v2463, %v2462
      %2480 = vmatprep.subr.bf16.mxu0 0
      %2481 = vmatpush1.bf16.msra.mxu0 %v2471
      %2482 = vmatprep.subr.bf16.mxu0 0
      %2483 = vmatpush1.bf16.msra.mxu0 %v2470
      %2484 = vmatprep.subr.bf16.mxu0 0
      %2485 = vmatpush1.bf16.msra.mxu0 %v2469
      %2486 = vmatprep.subr.bf16.mxu0 0
      %2487 = vmatpush1.bf16.msra.mxu0 %v2468
      %2488 = vmatprep.subr.bf16.mxu0 0
      %2489 = vmatpush1.bf16.msra.mxu0 %v2467
      %2490 = vmatprep.subr.bf16.mxu0 0
      %2491 = vmatpush1.bf16.msra.mxu0 %v2466
      %2492 = vmatprep.subr.bf16.mxu0 0
      %2493 = vmatpush1.bf16.msra.mxu0 %v2465
      %2494 = vmatprep.subr.bf16.mxu0 0
      %2495 = vmatpush1.bf16.msra.mxu0 %v2464
      %2496 = vmatprep.subr.bf16.mxu0 0
      %2497 = vmatpush2.bf16.msra.mxu0 0
      %2498 = vmatprep.subr.bf16.mxu0 0
      %2499 = vmatpush2.bf16.msra.mxu0 0
      %2500 = vmatprep.subr.bf16.mxu0 0
      %2501 = vmatpush2.bf16.msra.mxu0 0
      %2502 = vmatprep.subr.bf16.mxu0 0
      %2503 = vmatpush2.bf16.msra.mxu0 0
      %2504 = vmatprep.subr.bf16.mxu0 0
      %2505 = vmatpush2.bf16.msra.mxu0 0
      %2506 = vmatprep.subr.bf16.mxu0 0
      %2507 = vmatpush2.bf16.msra.mxu0 0
      %2508 = vmatprep.subr.bf16.mxu0 0
      %2509 = vmatpush2.bf16.msra.mxu0 0
      %2510 = vmatprep.subr.bf16.mxu0 0
      %2511 = vmatpush2.bf16.msra.mxu0 0
      %2512 = vmatprep.mubr.bf16.mxu0 0
      %2513 = vmatmul.mubr.bf16.gmra.mxu0 %v2400
      %v2514 = vpop.f32.mrf.mxu0
      %v2515 = vadd.f32 0.0, %v2514
      %v2516 = vpop.f32.mrf.mxu0
      %v2517 = vpop.f32.mrf.mxu0
      %v2518 = vadd.f32 0.0, %v2517
      %v2519 = vpop.f32.mrf.mxu0
      %2520 = vmatprep.mubr.bf16.mxu0 0
      %2521 = vmatmul.mubr.bf16.gmra.mxu0 %v2401
      %v2522 = vpop.f32.mrf.mxu0
      %v2523 = vadd.f32 0.0, %v2522
      %v2524 = vpop.f32.mrf.mxu0
      %v2525 = vpop.f32.mrf.mxu0
      %v2526 = vadd.f32 0.0, %v2525
      %v2527 = vpop.f32.mrf.mxu0
      %2528 = vmatprep.mubr.bf16.mxu0 0
      %2529 = vmatmul.mubr.bf16.gmra.mxu0 %v2402
      %v2530 = vpop.f32.mrf.mxu0
      %v2531 = vadd.f32 0.0, %v2530
      %v2532 = vpop.f32.mrf.mxu0
      %v2533 = vpop.f32.mrf.mxu0
      %v2534 = vadd.f32 0.0, %v2533
      %v2535 = vpop.f32.mrf.mxu0
      %2536 = vmatprep.mubr.bf16.mxu0 0
      %2537 = vmatmul.mubr.bf16.gmra.mxu0 %v2403
      %v2538 = vpop.f32.mrf.mxu0
      %v2539 = vadd.f32 0.0, %v2538
      %v2540 = vpop.f32.mrf.mxu0
      %v2541 = vpop.f32.mrf.mxu0
      %v2542 = vadd.f32 0.0, %v2541
      %v2543 = vpop.f32.mrf.mxu0
      %2544 = vmatprep.mubr.bf16.mxu0 0
      %2545 = vmatmul.mubr.bf16.gmra.mxu0 %v2404
      %v2546 = vpop.f32.mrf.mxu0
      %v2547 = vadd.f32 0.0, %v2546
      %v2548 = vpop.f32.mrf.mxu0
      %v2549 = vpop.f32.mrf.mxu0
      %v2550 = vadd.f32 0.0, %v2549
      %v2551 = vpop.f32.mrf.mxu0
      %2552 = vmatprep.mubr.bf16.mxu0 0
      %2553 = vmatmul.mubr.bf16.gmra.mxu0 %v2405
      %v2554 = vpop.f32.mrf.mxu0
      %v2555 = vadd.f32 0.0, %v2554
      %v2556 = vpop.f32.mrf.mxu0
      %v2557 = vpop.f32.mrf.mxu0
      %v2558 = vadd.f32 0.0, %v2557
      %v2559 = vpop.f32.mrf.mxu0
      %2560 = vmatprep.mubr.bf16.mxu0 0
      %2561 = vmatmul.mubr.bf16.gmra.mxu0 %v2406
      %v2562 = vpop.f32.mrf.mxu0
      %v2563 = vadd.f32 0.0, %v2562
      %v2564 = vpop.f32.mrf.mxu0
      %v2565 = vpop.f32.mrf.mxu0
      %v2566 = vadd.f32 0.0, %v2565
      %v2567 = vpop.f32.mrf.mxu0
      %2568 = vmatprep.mubr.bf16.mxu0 0
      %2569 = vmatmul.mubr.bf16.gmra.mxu0 %v2407
      %v2570 = vpop.f32.mrf.mxu0
      %v2571 = vadd.f32 0.0, %v2570
      %v2572 = vpop.f32.mrf.mxu0
      %v2573 = vpop.f32.mrf.mxu0
      %v2574 = vadd.f32 0.0, %v2573
      %v2575 = vpop.f32.mrf.mxu0
      %2576 = vmatprep.mubr.bf16.mxu0 0
      %2577 = vmatmul.mubr.bf16.gmra.mxu0 %v2408
      %v2578 = vpop.f32.mrf.mxu0
      %v2579 = vadd.f32 0.0, %v2578
      %v2580 = vpop.f32.mrf.mxu0
      %v2581 = vpop.f32.mrf.mxu0
      %v2582 = vadd.f32 0.0, %v2581
      %v2583 = vpop.f32.mrf.mxu0
      %2584 = vmatprep.mubr.bf16.mxu0 0
      %2585 = vmatmul.mubr.bf16.gmra.mxu0 %v2409
      %v2586 = vpop.f32.mrf.mxu0
      %v2587 = vadd.f32 0.0, %v2586
      %v2588 = vpop.f32.mrf.mxu0
      %v2589 = vpop.f32.mrf.mxu0
      %v2590 = vadd.f32 0.0, %v2589
      %v2591 = vpop.f32.mrf.mxu0
      %2592 = vmatprep.mubr.bf16.mxu0 0
      %2593 = vmatmul.mubr.bf16.gmra.mxu0 %v2410
      %v2594 = vpop.f32.mrf.mxu0
      %v2595 = vadd.f32 0.0, %v2594
      %v2596 = vpop.f32.mrf.mxu0
      %v2597 = vpop.f32.mrf.mxu0
      %v2598 = vadd.f32 0.0, %v2597
      %v2599 = vpop.f32.mrf.mxu0
      %2600 = vmatprep.mubr.bf16.mxu0 0
      %2601 = vmatmul.mubr.bf16.gmra.mxu0 %v2411
      %v2602 = vpop.f32.mrf.mxu0
      %v2603 = vadd.f32 0.0, %v2602
      %v2604 = vpop.f32.mrf.mxu0
      %v2605 = vpop.f32.mrf.mxu0
      %v2606 = vadd.f32 0.0, %v2605
      %v2607 = vpop.f32.mrf.mxu0
      %2608 = vmatprep.mubr.bf16.mxu0 0
      %2609 = vmatmul.mubr.bf16.gmra.mxu0 %v2412
      %v2610 = vpop.f32.mrf.mxu0
      %v2611 = vadd.f32 0.0, %v2610
      %v2612 = vpop.f32.mrf.mxu0
      %v2613 = vpop.f32.mrf.mxu0
      %v2614 = vadd.f32 0.0, %v2613
      %v2615 = vpop.f32.mrf.mxu0
      %2616 = vmatprep.mubr.bf16.mxu0 0
      %2617 = vmatmul.mubr.bf16.gmra.mxu0 %v2413
      %v2618 = vpop.f32.mrf.mxu0
      %v2619 = vadd.f32 0.0, %v2618
      %v2620 = vpop.f32.mrf.mxu0
      %v2621 = vpop.f32.mrf.mxu0
      %v2622 = vadd.f32 0.0, %v2621
      %v2623 = vpop.f32.mrf.mxu0
      %2624 = vmatprep.mubr.bf16.mxu0 0
      %2625 = vmatmul.mubr.bf16.gmra.mxu0 %v2414
      %v2626 = vpop.f32.mrf.mxu0
      %v2627 = vadd.f32 0.0, %v2626
      %v2628 = vpop.f32.mrf.mxu0
      %v2629 = vpop.f32.mrf.mxu0
      %v2630 = vadd.f32 0.0, %v2629
      %v2631 = vpop.f32.mrf.mxu0
      %2632 = vmatprep.mubr.bf16.mxu0 0
      %2633 = vmatmul.mubr.bf16.gmra.mxu0 %v2415
      %v2634 = vpop.f32.mrf.mxu0
      %v2635 = vadd.f32 0.0, %v2634
      %v2636 = vpop.f32.mrf.mxu0
      %v2637 = vpop.f32.mrf.mxu0
      %v2638 = vadd.f32 0.0, %v2637
      %v2639 = vpop.f32.mrf.mxu0
      %2640 = vdwg.mxu0
      %v2641 = vld [vmem:[%s6] sm:$0x1]
      %v2643 = vlaneseq
      %v2644 = vshrl.u32 %v2643, 7
      %v2645 = vsub.s32 0, %v2644
      %v2646 = vrot.slane %v2641, %v2645
      %v2648 = vadd.f32 %v2515, %v2646
      %v2649 = vadd.f32 %v2518, %v2646
      %v2650 = vadd.f32 %v2523, %v2646
      %v2651 = vadd.f32 %v2526, %v2646
      %v2652 = vadd.f32 %v2531, %v2646
      %v2653 = vadd.f32 %v2534, %v2646
      %v2654 = vadd.f32 %v2539, %v2646
      %v2655 = vadd.f32 %v2542, %v2646
      %v2656 = vadd.f32 %v2547, %v2646
      %v2657 = vadd.f32 %v2550, %v2646
      %v2658 = vadd.f32 %v2555, %v2646
      %v2659 = vadd.f32 %v2558, %v2646
      %v2660 = vadd.f32 %v2563, %v2646
      %v2661 = vadd.f32 %v2566, %v2646
      %v2662 = vadd.f32 %v2571, %v2646
      %v2663 = vadd.f32 %v2574, %v2646
      %v2664 = vadd.f32 %v2579, %v2646
      %v2665 = vadd.f32 %v2582, %v2646
      %v2666 = vadd.f32 %v2587, %v2646
      %v2667 = vadd.f32 %v2590, %v2646
      %v2668 = vadd.f32 %v2595, %v2646
      %v2669 = vadd.f32 %v2598, %v2646
      %v2670 = vadd.f32 %v2603, %v2646
      %v2671 = vadd.f32 %v2606, %v2646
      %v2672 = vadd.f32 %v2611, %v2646
      %v2673 = vadd.f32 %v2614, %v2646
      %v2674 = vadd.f32 %v2619, %v2646
      %v2675 = vadd.f32 %v2622, %v2646
      %v2676 = vadd.f32 %v2627, %v2646
      %v2677 = vadd.f32 %v2630, %v2646
      %v2678 = vadd.f32 %v2635, %v2646
      %v2679 = vadd.f32 %v2638, %v2646
      %s2680 = scalar_lea.vmem [#allocation2], 24
      %v2681 = vld [vmem:[%s2680 + $0x1] sm:$0xff]
      %v2682 = vld [vmem:[%s2680 + $0x9] sm:$0xff]
      %v2683 = vld [vmem:[%s2680 + $0x19] sm:$0xff]
      %v2684 = vld [vmem:[%s2680 + $0x21] sm:$0xff]
      %v2685 = vld [vmem:[%s2680 + $0x31] sm:$0xff]
      %v2686 = vld [vmem:[%s2680 + $0x39] sm:$0xff]
      %v2687 = vld [vmem:[%s2680 + $0x49] sm:$0xff]
      %v2688 = vld [vmem:[%s2680 + $0x51] sm:$0xff]
      %v2689 = vld [vmem:[%s2680 + $0x61] sm:$0xff]
      %v2690 = vld [vmem:[%s2680 + $0x69] sm:$0xff]
      %v2691 = vld [vmem:[%s2680 + $0x79] sm:$0xff]
      %v2692 = vld [vmem:[%s2680 + $0x81] sm:$0xff]
      %v2693 = vld [vmem:[%s2680 + $0x91] sm:$0xff]
      %v2694 = vld [vmem:[%s2680 + $0x99] sm:$0xff]
      %v2695 = vld [vmem:[%s2680 + $0xa9] sm:$0xff]
      %v2696 = vld [vmem:[%s2680 + $0xb1] sm:$0xff]
      %v2697 = vld [vmem:[%s2680 + $0xc1] sm:$0xff]
      %v2698 = vld [vmem:[%s2680 + $0xc9] sm:$0xff]
      %v2699 = vld [vmem:[%s2680 + $0xd9] sm:$0xff]
      %v2700 = vld [vmem:[%s2680 + $0xe1] sm:$0xff]
      %v2701 = vld [vmem:[%s2680 + $0xf1] sm:$0xff]
      %v2702 = vld [vmem:[%s2680 + $0xf9] sm:$0xff]
      %v2703 = vld [vmem:[%s2680 + $0x109] sm:$0xff]
      %v2704 = vld [vmem:[%s2680 + $0x111] sm:$0xff]
      %v2705 = vld [vmem:[%s2680 + $0x121] sm:$0xff]
      %v2706 = vld [vmem:[%s2680 + $0x129] sm:$0xff]
      %v2707 = vld [vmem:[%s2680 + $0x139] sm:$0xff]
      %v2708 = vld [vmem:[%s2680 + $0x141] sm:$0xff]
      %v2709 = vld [vmem:[%s2680 + $0x151] sm:$0xff]
      %v2710 = vld [vmem:[%s2680 + $0x159] sm:$0xff]
      %v2711 = vld [vmem:[%s2680 + $0x169] sm:$0xff]
      %v2712 = vld [vmem:[%s2680 + $0x171] sm:$0xff]
      %v2713 = vadd.f32 %v2648, %v2681
      %v2714 = vadd.f32 %v2649, %v2682
      %v2715 = vadd.f32 %v2650, %v2683
      %v2716 = vadd.f32 %v2651, %v2684
      %v2717 = vadd.f32 %v2652, %v2685
      %v2718 = vadd.f32 %v2653, %v2686
      %v2719 = vadd.f32 %v2654, %v2687
      %v2720 = vadd.f32 %v2655, %v2688
      %v2721 = vadd.f32 %v2656, %v2689
      %v2722 = vadd.f32 %v2657, %v2690
      %v2723 = vadd.f32 %v2658, %v2691
      %v2724 = vadd.f32 %v2659, %v2692
      %v2725 = vadd.f32 %v2660, %v2693
      %v2726 = vadd.f32 %v2661, %v2694
      %v2727 = vadd.f32 %v2662, %v2695
      %v2728 = vadd.f32 %v2663, %v2696
      %v2729 = vadd.f32 %v2664, %v2697
      %v2730 = vadd.f32 %v2665, %v2698
      %v2731 = vadd.f32 %v2666, %v2699
      %v2732 = vadd.f32 %v2667, %v2700
      %v2733 = vadd.f32 %v2668, %v2701
      %v2734 = vadd.f32 %v2669, %v2702
      %v2735 = vadd.f32 %v2670, %v2703
      %v2736 = vadd.f32 %v2671, %v2704
      %v2737 = vadd.f32 %v2672, %v2705
      %v2738 = vadd.f32 %v2673, %v2706
      %v2739 = vadd.f32 %v2674, %v2707
      %v2740 = vadd.f32 %v2675, %v2708
      %v2741 = vadd.f32 %v2676, %v2709
      %v2742 = vadd.f32 %v2677, %v2710
      %v2743 = vadd.f32 %v2678, %v2711
      %v2744 = vadd.f32 %v2679, %v2712
      %2745 = vst [vmem:[%s256] sm:$0xff] %v2713
      %2746 = vst [vmem:[%s256 + $0x8] sm:$0xff] %v2714
      %2747 = vst [vmem:[%s256 + $0x10] sm:$0xff] %v2715
      %2748 = vst [vmem:[%s256 + $0x18] sm:$0xff] %v2716
      %2749 = vst [vmem:[%s256 + $0x20] sm:$0xff] %v2717
      %2750 = vst [vmem:[%s256 + $0x28] sm:$0xff] %v2718
      %2751 = vst [vmem:[%s256 + $0x30] sm:$0xff] %v2719
      %2752 = vst [vmem:[%s256 + $0x38] sm:$0xff] %v2720
      %2753 = vst [vmem:[%s256 + $0x40] sm:$0xff] %v2721
      %2754 = vst [vmem:[%s256 + $0x48] sm:$0xff] %v2722
      %2755 = vst [vmem:[%s256 + $0x50] sm:$0xff] %v2723
      %2756 = vst [vmem:[%s256 + $0x58] sm:$0xff] %v2724
      %2757 = vst [vmem:[%s256 + $0x60] sm:$0xff] %v2725
      %2758 = vst [vmem:[%s256 + $0x68] sm:$0xff] %v2726
      %2759 = vst [vmem:[%s256 + $0x70] sm:$0xff] %v2727
      %2760 = vst [vmem:[%s256 + $0x78] sm:$0xff] %v2728
      %2761 = vst [vmem:[%s256 + $0x80] sm:$0xff] %v2729
      %2762 = vst [vmem:[%s256 + $0x88] sm:$0xff] %v2730
      %2763 = vst [vmem:[%s256 + $0x90] sm:$0xff] %v2731
      %2764 = vst [vmem:[%s256 + $0x98] sm:$0xff] %v2732
      %2765 = vst [vmem:[%s256 + $0xa0] sm:$0xff] %v2733
      %2766 = vst [vmem:[%s256 + $0xa8] sm:$0xff] %v2734
      %2767 = vst [vmem:[%s256 + $0xb0] sm:$0xff] %v2735
      %2768 = vst [vmem:[%s256 + $0xb8] sm:$0xff] %v2736
      %2769 = vst [vmem:[%s256 + $0xc0] sm:$0xff] %v2737
      %2770 = vst [vmem:[%s256 + $0xc8] sm:$0xff] %v2738
      %2771 = vst [vmem:[%s256 + $0xd0] sm:$0xff] %v2739
      %2772 = vst [vmem:[%s256 + $0xd8] sm:$0xff] %v2740
      %2773 = vst [vmem:[%s256 + $0xe0] sm:$0xff] %v2741
      %2774 = vst [vmem:[%s256 + $0xe8] sm:$0xff] %v2742
      %2775 = vst [vmem:[%s256 + $0xf0] sm:$0xff] %v2743
      %2776 = vst [vmem:[%s256 + $0xf8] sm:$0xff] %v2744
      %s2777 = smul.u32 16, %s23
      %p2778 = scmp.lt.s32.totalorder %s22, 1
      %s2779 = scalar_select %p2778, %s22, 1
      %p2780 = scmp.lt.s32.totalorder %s2777, 15
      %s2781 = scalar_select %p2780, %s2777, 15
      %s2782 = smul.addr %s2781, 2
      %s2783 = smul.addr %s2779, 32
      %s2784 = sadd.s32 %s2782, %s2783
      %s2785 = smul.addr %s2784, 8
      %s2786 = scalar_lea.vmem %s7, %s2785
      // Predicated region
      $region80: #{inverted_residual_forward.1} parent=43 // pred_check
        %p2787 = pneg %p176
      $region81: #{inverted_residual_forward.1} parent=43 // pred_check_branch
        %2789 = sbr.rel (%p2787) target = $region83
      $region82: #{inverted_residual_forward.1} parent=43 // pred_region
        %s2790 = smul.u32 16, %s23
      $region83: #{inverted_residual_forward.1} parent=43 // pred_fallthru
        _
    $region44: #{inverted_residual_forward.1} parent=5 // pred_fallthru
      _
    %p2791 = scmp.le.s32.totalorder 2, %s13
    // Predicated region
    $region84: #{inverted_residual_forward.1} parent=5 // pred_check
      %p2792 = pneg %p2791
    $region85: #{inverted_residual_forward.1} parent=5 // pred_check_branch
      %2794 = sbr.rel (%p2792) target = $region87
    $region86: #{inverted_residual_forward.1} parent=5 // pred_region
      %s2795 = ssub.s32 %s13, 2
      // Predicated region
      $region88: #{inverted_residual_forward.1} parent=86 // pred_check
        %p2796 = pneg %p182
      $region89: #{inverted_residual_forward.1} parent=86 // pred_check_branch
        %2798 = sbr.rel (%p2796) target = $region91
      $region90: #{inverted_residual_forward.1} parent=86 // pred_region
        %s2799 = smul.u32 16, %s25
        %p2800 = scmp.lt.s32.totalorder %s24, 1
        %s2801 = scalar_select %p2800, %s24, 1
        %p2802 = scmp.lt.s32.totalorder %s2799, 15
        %s2803 = scalar_select %p2802, %s2799, 15
        %s2804 = smul.addr %s2803, 2
        %s2805 = smul.addr %s2801, 32
        %s2806 = sadd.s32 %s2804, %s2805
        %s2807 = smul.addr %s2806, 8
        %s2808 = scalar_lea.vmem %s7, %s2807
      $region91: #{inverted_residual_forward.1} parent=86 // pred_fallthru
        _
    $region87: #{inverted_residual_forward.1} parent=5 // pred_fallthru
      _
  $region6: #{inverted_residual_forward.1} parent=0 // loop_footer
    %s17 = sadd.s32 1, %s13
  $region7: #{inverted_residual_forward.1} parent=0 // loop_footer_branch
    %12 = sbr.rel target = $region3
  $region8: #{inverted_residual_forward.1} parent=0 // loop_exit
    _

</llo_original>
